<compile_context>
chip_gen: v5e
topology: v5e:2x2
jax: 0.10.0
libtpu: 0.0.40
codegen_flags: <defaults>
</compile_context>

<pallas_src>
import math
import functools

import jax
import jax.numpy as jnp
from jax.experimental import pallas as pl
from jax.experimental.pallas import tpu as pltpu


# ----------------------------- in-kernel math -----------------------------

def _gelu(x):
    # tanh-approx GELU (EUP tanh unit).  HF BERT uses erf GELU -> tiny delta.
    return 0.5 * x * (1.0 + jnp.tanh(0.7978845608028654 * (x + 0.044715 * x * x * x)))


def _layernorm(x, g, b, eps):
    mu = jnp.mean(x, axis=-1, keepdims=True)
    var = jnp.mean((x - mu) ** 2, axis=-1, keepdims=True)
    return (x - mu) * jax.lax.rsqrt(var + eps) * g + b


def _encoder_stack(x_ref, mask_ref, embg_ref, embb_ref,
                   wqkv_ref, bqkv_ref, wo_ref, bo_ref,
                   ln1g_ref, ln1b_ref, w1_ref, b1_ref, w2_ref, b2_ref,
                   ln2g_ref, ln2b_ref, qkv_s, attn_s,
                   n_layers, n_heads, eps):
    """Whole transformer stack on flattened [R = B*S, H] activations.

    Attention is computed per head over the full [R, R] score matrix; the
    precomputed block-diagonal additive mask (0 within an example for kept
    keys, -1e9 elsewhere) kills cross-example and padded-key scores, so the
    result equals per-example attention with NO reshape/transpose of heads.
    Per-layer weights are stacked on a leading axis and indexed statically.
    """
    H = x_ref.shape[-1]
    dh = H // n_heads
    scale = 1.0 / math.sqrt(dh)

    mask_bias = mask_ref[...]                              # [R, R], built once in wrapper
    x = _layernorm(x_ref[...], embg_ref[...], embb_ref[...], eps)

    for l in range(n_layers):                              # static unroll (small L)
        # ---- fused QKV projection: single [R, H] @ [H, 3H] matmul ----
        qkv_s[...] = (jnp.dot(x, wqkv_ref[l], preferred_element_type=jnp.float32)
                      + bqkv_ref[l])
        # ---- multi-head attention (heads sliced from the scratch ref) ----
        for h in range(n_heads):                           # static unroll
            q = qkv_s[:, h * dh:(h + 1) * dh]
            k = qkv_s[:, H + h * dh:H + (h + 1) * dh]
            v = qkv_s[:, 2 * H + h * dh:2 * H + (h + 1) * dh]
            s = jnp.einsum("qd,kd->qk", q, k,
                           preferred_element_type=jnp.float32) * scale + mask_bias
            s = s - jnp.max(s, axis=-1, keepdims=True)
            p = jnp.exp(s)
            p = p * pl.reciprocal(jnp.sum(p, axis=-1, keepdims=True), approx=True)
            attn_s[:, h * dh:(h + 1) * dh] = jnp.dot(
                p, v, preferred_element_type=jnp.float32)
        a = jnp.dot(attn_s[...], wo_ref[l],
                    preferred_element_type=jnp.float32) + bo_ref[l]
        hmid = _layernorm(x + a, ln1g_ref[l], ln1b_ref[l], eps)
        # ---- feed-forward ----
        ff = _gelu(jnp.dot(hmid, w1_ref[l], preferred_element_type=jnp.float32)
                   + b1_ref[l])
        ff = jnp.dot(ff, w2_ref[l], preferred_element_type=jnp.float32) + b2_ref[l]
        x = _layernorm(hmid + ff, ln2g_ref[l], ln2b_ref[l], eps)
    return x


def _act_kernel(x_ref, mask_ref, embg_ref, embb_ref,
                wqkv_ref, bqkv_ref, wo_ref, bo_ref,
                ln1g_ref, ln1b_ref, w1_ref, b1_ref, w2_ref, b2_ref,
                ln2g_ref, ln2b_ref,
                poolw_ref, poolb_ref, nspw_ref, nspb_ref,
                out_ref, qkv_s, attn_s, *, n_layers, n_heads, eps):
    h = _encoder_stack(x_ref, mask_ref, embg_ref, embb_ref,
                       wqkv_ref, bqkv_ref, wo_ref, bo_ref,
                       ln1g_ref, ln1b_ref, w1_ref, b1_ref, w2_ref, b2_ref,
                       ln2g_ref, ln2b_ref, qkv_s, attn_s,
                       n_layers, n_heads, eps)
    # BERT pooler (tanh) + NSP head, fused in the same kernel.  Computed for
    # every row (trivial at H=32); the wrapper picks the CLS rows.
    pooled = jnp.tanh(jnp.dot(h, poolw_ref[...],
                              preferred_element_type=jnp.float32) + poolb_ref[...])
    out_ref[...] = (jnp.dot(pooled, nspw_ref[...],
                            preferred_element_type=jnp.float32) + nspb_ref[...])


def _sub_kernel(x_ref, mask_ref, embg_ref, embb_ref,
                wqkv_ref, bqkv_ref, wo_ref, bo_ref,
                ln1g_ref, ln1b_ref, w1_ref, b1_ref, w2_ref, b2_ref,
                ln2g_ref, ln2b_ref,
                qaw_ref, qab_ref,
                out_ref, qkv_s, attn_s, *, n_layers, n_heads, eps):
    h = _encoder_stack(x_ref, mask_ref, embg_ref, embb_ref,
                       wqkv_ref, bqkv_ref, wo_ref, bo_ref,
                       ln1g_ref, ln1b_ref, w1_ref, b1_ref, w2_ref, b2_ref,
                       ln2g_ref, ln2b_ref, qkv_s, attn_s,
                       n_layers, n_heads, eps)
    # QA head (start/end logits), fused in the same kernel.
    out_ref[...] = (jnp.dot(h, qaw_ref[...],
                            preferred_element_type=jnp.float32) + qab_ref[...])


# ----------------------------- kernel wrappers -----------------------------

def run_act_encoder(x_emb, mask_bias, p, n_layers, n_heads, eps=1e-12):
    R, H = x_emb.shape
    kern = functools.partial(_act_kernel, n_layers=n_layers, n_heads=n_heads, eps=eps)
    return pl.pallas_call(
        kern,
        out_shape=jax.ShapeDtypeStruct((R, 2), jnp.float32),
        scratch_shapes=[pltpu.VMEM((R, 3 * H), jnp.float32),   # fused QKV activations
                        pltpu.VMEM((R, H), jnp.float32)],      # per-head attention out
    )(x_emb, mask_bias, p["emb_ln_g"], p["emb_ln_b"],
      p["wqkv"], p["bqkv"], p["wo"], p["bo"],
      p["ln1_g"], p["ln1_b"], p["w1"], p["b1"], p["w2"], p["b2"],
      p["ln2_g"], p["ln2_b"],
      p["pool_w"], p["pool_b"], p["nsp_w"], p["nsp_b"])


def run_sub_encoder(x_emb, mask_bias, p, n_layers, n_heads, eps=1e-5):
    R, H = x_emb.shape
    kern = functools.partial(_sub_kernel, n_layers=n_layers, n_heads=n_heads, eps=eps)
    return pl.pallas_call(
        kern,
        out_shape=jax.ShapeDtypeStruct((R, 2), jnp.float32),
        scratch_shapes=[pltpu.VMEM((R, 3 * H), jnp.float32),
                        pltpu.VMEM((R, H), jnp.float32)],
    )(x_emb, mask_bias, p["emb_ln_g"], p["emb_ln_b"],
      p["wqkv"], p["bqkv"], p["wo"], p["bo"],
      p["ln1_g"], p["ln1_b"], p["w1"], p["b1"], p["w2"], p["b2"],
      p["ln2_g"], p["ln2_b"],
      p["qa_w"], p["qa_b"])


# ----------------------------- JAX glue -----------------------------

def embed(params, input_ids, token_type_ids):
    """Embedding lookups (kept in plain JAX), flattened to [B*S, H]."""
    B, S = input_ids.shape
    x = jnp.take(params["word_emb"], input_ids, axis=0)
    x = x + params["pos_emb"][None, :S, :]
    if token_type_ids is not None:
        x = x + jnp.take(params["type_emb"], token_type_ids, axis=0)
    return x.reshape(B * S, -1)


def make_mask_bias(attention_mask):
    """[B, S] 1/0 keep-mask -> [B*S, B*S] additive bias, built ONCE per encoder.

    Entry (b*S+q, b'*S+k) is 0 if b == b' and key k of example b' is kept,
    else -1e9 (block-diagonal structure kills cross-example attention)."""
    B, S = attention_mask.shape
    m = attention_mask.astype(jnp.float32)
    same = jnp.kron(jnp.eye(B, dtype=jnp.float32), jnp.ones((S, S), jnp.float32))
    keep = jnp.broadcast_to(m.reshape(1, B * S), (B * S, B * S))
    return (same * keep - 1.0) * 1e9


def agent_forward(act_params, sub_params,
                  act_input_ids, act_type_ids, act_mask,
                  sub_input_ids, sub_mask,
                  n_questions, n_actions, n_heads, n_layers, seq):
    # --- act model: BERT-style encoder + pooler + NSP head -> action ratings ---
    x = embed(act_params, act_input_ids, act_type_ids)              # [B*S, H]
    nsp = run_act_encoder(x, make_mask_bias(act_mask),
                          act_params, n_layers, n_heads, eps=1e-12)  # [B*S, 2]
    preds = nsp[::seq, 0].reshape(n_questions, n_actions)            # CLS rows, col 0

    # --- sub model: roberta-style encoder + QA head -> submit rating ---
    xs = embed(sub_params, sub_input_ids, None)
    qa = run_sub_encoder(xs, make_mask_bias(sub_mask),
                         sub_params, n_layers, n_heads, eps=1e-5)    # [B*S, 2]
    start_logits = qa[:, 0].reshape(n_questions, seq)
    sub_ratings = -(start_logits[:, 0] + start_logits[:, 1]) / 2.0   # (B,)

    return jnp.concatenate([sub_ratings[:, None], preds], axis=1)    # (B, 1 + n_actions)


# ----------------------------- deterministic init -----------------------------

def _dense(key, din, dout, scale=0.02):
    w = jax.random.normal(key, (din, dout), dtype=jnp.float32) * scale
    b = jnp.zeros((1, dout), dtype=jnp.float32)
    return w, b


def _init_layer(key, hidden, inter):
    kk = jax.random.split(key, 6)
    wq, bq = _dense(kk[0], hidden, hidden)
    wk, bk = _dense(kk[1], hidden, hidden)
    wv, bv = _dense(kk[2], hidden, hidden)
    wo, bo = _dense(kk[3], hidden, hidden)
    w1, b1 = _dense(kk[4], hidden, inter)
    w2, b2 = _dense(kk[5], inter, hidden)
    return dict(
        wqkv=jnp.concatenate([wq, wk, wv], axis=1),     # fused [H, 3H]
        bqkv=jnp.concatenate([bq, bk, bv], axis=1),     # [1, 3H]
        wo=wo, bo=bo, w1=w1, b1=b1, w2=w2, b2=b2,
        ln1_g=jnp.ones((1, hidden), jnp.float32), ln1_b=jnp.zeros((1, hidden), jnp.float32),
        ln2_g=jnp.ones((1, hidden), jnp.float32), ln2_b=jnp.zeros((1, hidden), jnp.float32),
    )


def init_encoder(key, vocab, max_pos, hidden, inter, n_layers, with_types, head):
    ks = jax.random.split(key, 6 + n_layers)
    layers = [_init_layer(ks[6 + i], hidden, inter) for i in range(n_layers)]
    stacked = {k: jnp.stack([lp[k] for lp in layers], axis=0) for k in layers[0]}
    params = {
        "word_emb": jax.random.normal(ks[0], (vocab, hidden), jnp.float32) * 0.02,
        "pos_emb": jax.random.normal(ks[1], (max_pos, hidden), jnp.float32) * 0.02,
        "emb_ln_g": jnp.ones((1, hidden), jnp.float32),
        "emb_ln_b": jnp.zeros((1, hidden), jnp.float32),
        **stacked,
    }
    if with_types:
        params["type_emb"] = jax.random.normal(ks[2], (2, hidden), jnp.float32) * 0.02
    if head == "nsp":
        params["pool_w"], params["pool_b"] = _dense(ks[3], hidden, hidden)
        params["nsp_w"], params["nsp_b"] = _dense(ks[4], hidden, 2)
    else:  # "qa"
        params["qa_w"], params["qa_b"] = _dense(ks[5], hidden, 2)
    return params


# ----------------------------- main -----------------------------

if __name__ == "__main__":
    key = jax.random.PRNGKey(0)

    # small synthetic config consistent with the module's forward
    n_questions = 2      # len(questions)
    n_actions = 3        # len(actions[0])
    seq = 8              # tokenized length (<= 512 in the original)
    hidden = 32
    inter = 64
    n_heads = 2
    n_layers = 2
    vocab = 100
    max_pos = 64

    k_act, k_sub, k1, k2, k3, k4, k5 = jax.random.split(key, 7)
    act_params = init_encoder(k_act, vocab, max_pos, hidden, inter, n_layers,
                              with_types=True, head="nsp")
    sub_params = init_encoder(k_sub, vocab, max_pos, hidden, inter, n_layers,
                              with_types=False, head="qa")

    # pre-tokenized synthetic inputs (tokenizer has no Pallas equivalent)
    act_input_ids = jax.random.randint(k1, (n_questions * n_actions, seq), 0, vocab, jnp.int32)
    act_type_ids = jax.random.randint(k2, (n_questions * n_actions, seq), 0, 2, jnp.int32)
    act_mask = jnp.ones((n_questions * n_actions, seq), jnp.float32)
    sub_input_ids = jax.random.randint(k3, (n_questions, seq), 0, vocab, jnp.int32)
    sub_mask = jnp.ones((n_questions, seq), jnp.float32)

    fwd = jax.jit(
        functools.partial(agent_forward,
                          n_questions=n_questions, n_actions=n_actions,
                          n_heads=n_heads, n_layers=n_layers, seq=seq)
    )
    out = fwd(act_params, sub_params,
              act_input_ids, act_type_ids, act_mask,
              sub_input_ids, sub_mask)
    out = jax.block_until_ready(out)

    assert out.shape == (n_questions, 1 + n_actions), out.shape
    assert jnp.all(jnp.isfinite(out))
    print("KERNEL_OK")
</pallas_src>

<mosaic_0001>
module attributes {stable_mosaic.version = 11 : i64} {
  func.func @_act_kernel(%arg0: memref<48x32xf32, #tpu.memory_space<vmem>>, %arg1: memref<48x48xf32, #tpu.memory_space<vmem>>, %arg2: memref<1x32xf32, #tpu.memory_space<vmem>>, %arg3: memref<1x32xf32, #tpu.memory_space<vmem>>, %arg4: memref<2x32x96xf32, #tpu.memory_space<vmem>>, %arg5: memref<2x1x96xf32, #tpu.memory_space<vmem>>, %arg6: memref<2x32x32xf32, #tpu.memory_space<vmem>>, %arg7: memref<2x1x32xf32, #tpu.memory_space<vmem>>, %arg8: memref<2x1x32xf32, #tpu.memory_space<vmem>>, %arg9: memref<2x1x32xf32, #tpu.memory_space<vmem>>, %arg10: memref<2x32x64xf32, #tpu.memory_space<vmem>>, %arg11: memref<2x1x64xf32, #tpu.memory_space<vmem>>, %arg12: memref<2x64x32xf32, #tpu.memory_space<vmem>>, %arg13: memref<2x1x32xf32, #tpu.memory_space<vmem>>, %arg14: memref<2x1x32xf32, #tpu.memory_space<vmem>>, %arg15: memref<2x1x32xf32, #tpu.memory_space<vmem>>, %arg16: memref<32x32xf32, #tpu.memory_space<vmem>>, %arg17: memref<1x32xf32, #tpu.memory_space<vmem>>, %arg18: memref<32x2xf32, #tpu.memory_space<vmem>>, %arg19: memref<1x2xf32, #tpu.memory_space<vmem>>, %arg20: memref<48x2xf32, #tpu.memory_space<vmem>>, %arg21: memref<48x96xf32, #tpu.memory_space<vmem>>, %arg22: memref<48x32xf32, #tpu.memory_space<vmem>>) attributes {dimension_semantics = [], scalar_prefetch = 0 : i64, scratch_operands = 2 : i64, tpu.core_type = #tpu.core_type<tc>} {
    %c0 = arith.constant 0 : index
    %c0_0 = arith.constant 0 : index
    %0 = vector.load %arg1[%c0, %c0_0] : memref<48x48xf32, #tpu.memory_space<vmem>>, vector<48x48xf32>
    %c0_1 = arith.constant 0 : index
    %c0_2 = arith.constant 0 : index
    %1 = vector.load %arg0[%c0_1, %c0_2] : memref<48x32xf32, #tpu.memory_space<vmem>>, vector<48x32xf32>
    %c0_3 = arith.constant 0 : index
    %c0_4 = arith.constant 0 : index
    %2 = vector.load %arg2[%c0_3, %c0_4] : memref<1x32xf32, #tpu.memory_space<vmem>>, vector<1x32xf32>
    %c0_5 = arith.constant 0 : index
    %c0_6 = arith.constant 0 : index
    %3 = vector.load %arg3[%c0_5, %c0_6] : memref<1x32xf32, #tpu.memory_space<vmem>>, vector<1x32xf32>
    %cst = arith.constant dense<0.000000e+00> : vector<48xf32>
    %4 = vector.multi_reduction <add>, %1, %cst [1] : vector<48x32xf32> to vector<48xf32>
    %5 = vector.shape_cast %4 : vector<48xf32> to vector<48x1xf32>
    %cst_7 = arith.constant 3.200000e+01 : f32
    %6 = vector.broadcast %cst_7 : f32 to vector<48x1xf32>
    %7 = arith.divf %5, %6 : vector<48x1xf32>
    %8 = vector.broadcast %7 : vector<48x1xf32> to vector<48x32xf32>
    %9 = arith.subf %1, %8 : vector<48x32xf32>
    %10 = arith.mulf %9, %9 : vector<48x32xf32>
    %cst_8 = arith.constant dense<0.000000e+00> : vector<48xf32>
    %11 = vector.multi_reduction <add>, %10, %cst_8 [1] : vector<48x32xf32> to vector<48xf32>
    %12 = vector.shape_cast %11 : vector<48xf32> to vector<48x1xf32>
    %cst_9 = arith.constant 3.200000e+01 : f32
    %13 = vector.broadcast %cst_9 : f32 to vector<48x1xf32>
    %14 = arith.divf %12, %13 : vector<48x1xf32>
    %15 = vector.broadcast %7 : vector<48x1xf32> to vector<48x32xf32>
    %16 = arith.subf %1, %15 : vector<48x32xf32>
    %cst_10 = arith.constant 9.99999996E-13 : f32
    %17 = vector.broadcast %cst_10 : f32 to vector<48x1xf32>
    %18 = arith.addf %14, %17 : vector<48x1xf32>
    %19 = math.rsqrt %18 : vector<48x1xf32>
    %20 = vector.broadcast %19 : vector<48x1xf32> to vector<48x32xf32>
    %21 = arith.mulf %16, %20 : vector<48x32xf32>
    %22 = vector.broadcast %2 : vector<1x32xf32> to vector<48x32xf32>
    %23 = arith.mulf %21, %22 : vector<48x32xf32>
    %24 = vector.broadcast %3 : vector<1x32xf32> to vector<48x32xf32>
    %25 = arith.addf %23, %24 : vector<48x32xf32>
    %c0_11 = arith.constant 0 : index
    %c0_12 = arith.constant 0 : index
    %c0_13 = arith.constant 0 : index
    %26 = vector.load %arg4[%c0_11, %c0_12, %c0_13] : memref<2x32x96xf32, #tpu.memory_space<vmem>>, vector<1x32x96xf32>
    %27 = vector.shape_cast %26 : vector<1x32x96xf32> to vector<32x96xf32>
    %cst_14 = arith.constant dense<0.000000e+00> : vector<48x96xf32>
    %28 = tpu.matmul %25, %27, %cst_14 {dimension_numbers = #tpu.dot_dimension_numbers<[1], [0], [0], [1], [0, 0, 1, 1], [], []>} : vector<48x32xf32>, vector<32x96xf32>, vector<48x96xf32> -> vector<48x96xf32>
    %c0_15 = arith.constant 0 : index
    %c0_16 = arith.constant 0 : index
    %c0_17 = arith.constant 0 : index
    %29 = vector.load %arg5[%c0_15, %c0_16, %c0_17] : memref<2x1x96xf32, #tpu.memory_space<vmem>>, vector<1x1x96xf32>
    %30 = vector.shape_cast %29 : vector<1x1x96xf32> to vector<1x96xf32>
    %31 = vector.broadcast %30 : vector<1x96xf32> to vector<48x96xf32>
    %32 = arith.addf %28, %31 : vector<48x96xf32>
    %c0_18 = arith.constant 0 : index
    %c0_19 = arith.constant 0 : index
    %33 = vector.load %arg21[%c0_18, %c0_19] : memref<48x96xf32, #tpu.memory_space<vmem>>, vector<48x96xf32>
    tpu.vector_store %arg21[%c0_18, %c0_19], %32 {strides = array<i32>} : memref<48x96xf32, #tpu.memory_space<vmem>>, vector<48x96xf32>,
    %c0_20 = arith.constant 0 : index
    %c0_21 = arith.constant 0 : index
    %34 = vector.load %arg21[%c0_20, %c0_21] : memref<48x96xf32, #tpu.memory_space<vmem>>, vector<48x16xf32>
    %c0_22 = arith.constant 0 : index
    %c32 = arith.constant 32 : index
    %35 = vector.load %arg21[%c0_22, %c32] : memref<48x96xf32, #tpu.memory_space<vmem>>, vector<48x16xf32>
    %c0_23 = arith.constant 0 : index
    %c64 = arith.constant 64 : index
    %36 = vector.load %arg21[%c0_23, %c64] : memref<48x96xf32, #tpu.memory_space<vmem>>, vector<48x16xf32>
    "tpu.trace_start"() <{level = 10 : i32, message = "qd,kd->qk"}> : () -> ()
    %cst_24 = arith.constant dense<0.000000e+00> : vector<48x48xf32>
    %37 = tpu.matmul %34, %35, %cst_24 {dimension_numbers = #tpu.dot_dimension_numbers<[1], [1], [0], [0], [0, 0, 1, 0], [], []>} : vector<48x16xf32>, vector<48x16xf32>, vector<48x48xf32> -> vector<48x48xf32>
    "tpu.trace_stop"() : () -> ()
    %cst_25 = arith.constant 2.500000e-01 : f32
    %38 = vector.broadcast %cst_25 : f32 to vector<48x48xf32>
    %39 = arith.mulf %37, %38 : vector<48x48xf32>
    %40 = arith.addf %39, %0 : vector<48x48xf32>
    %cst_26 = arith.constant dense<0xFF800000> : vector<48xf32>
    %41 = vector.multi_reduction <maximumf>, %40, %cst_26 [1] : vector<48x48xf32> to vector<48xf32>
    %42 = vector.shape_cast %41 : vector<48xf32> to vector<48x1xf32>
    %43 = vector.broadcast %42 : vector<48x1xf32> to vector<48x48xf32>
    %44 = arith.subf %40, %43 : vector<48x48xf32>
    %45 = math.exp %44 : vector<48x48xf32>
    %cst_27 = arith.constant dense<0.000000e+00> : vector<48xf32>
    %46 = vector.multi_reduction <add>, %45, %cst_27 [1] : vector<48x48xf32> to vector<48xf32>
    %47 = vector.shape_cast %46 : vector<48xf32> to vector<48x1xf32>
    %48 = tpu.reciprocal %47 {approx = true} : vector<48x1xf32> -> vector<48x1xf32>
    %49 = vector.broadcast %48 : vector<48x1xf32> to vector<48x48xf32>
    %50 = arith.mulf %45, %49 : vector<48x48xf32>
    %cst_28 = arith.constant dense<0.000000e+00> : vector<48x16xf32>
    %51 = tpu.matmul %50, %36, %cst_28 {dimension_numbers = #tpu.dot_dimension_numbers<[1], [0], [0], [1], [0, 0, 1, 1], [], []>} : vector<48x48xf32>, vector<48x16xf32>, vector<48x16xf32> -> vector<48x16xf32>
    %c0_29 = arith.constant 0 : index
    %c0_30 = arith.constant 0 : index
    %52 = vector.load %arg22[%c0_29, %c0_30] : memref<48x32xf32, #tpu.memory_space<vmem>>, vector<48x16xf32>
    tpu.vector_store %arg22[%c0_29, %c0_30], %51 {strides = array<i32>} : memref<48x32xf32, #tpu.memory_space<vmem>>, vector<48x16xf32>,
    %c0_31 = arith.constant 0 : index
    %c16 = arith.constant 16 : index
    %53 = vector.load %arg21[%c0_31, %c16] : memref<48x96xf32, #tpu.memory_space<vmem>>, vector<48x16xf32>
    %c0_32 = arith.constant 0 : index
    %c48 = arith.constant 48 : index
    %54 = vector.load %arg21[%c0_32, %c48] : memref<48x96xf32, #tpu.memory_space<vmem>>, vector<48x16xf32>
    %c0_33 = arith.constant 0 : index
    %c80 = arith.constant 80 : index
    %55 = vector.load %arg21[%c0_33, %c80] : memref<48x96xf32, #tpu.memory_space<vmem>>, vector<48x16xf32>
    "tpu.trace_start"() <{level = 10 : i32, message = "qd,kd->qk"}> : () -> ()
    %cst_34 = arith.constant dense<0.000000e+00> : vector<48x48xf32>
    %56 = tpu.matmul %53, %54, %cst_34 {dimension_numbers = #tpu.dot_dimension_numbers<[1], [1], [0], [0], [0, 0, 1, 0], [], []>} : vector<48x16xf32>, vector<48x16xf32>, vector<48x48xf32> -> vector<48x48xf32>
    "tpu.trace_stop"() : () -> ()
    %cst_35 = arith.constant 2.500000e-01 : f32
    %57 = vector.broadcast %cst_35 : f32 to vector<48x48xf32>
    %58 = arith.mulf %56, %57 : vector<48x48xf32>
    %59 = arith.addf %58, %0 : vector<48x48xf32>
    %cst_36 = arith.constant dense<0xFF800000> : vector<48xf32>
    %60 = vector.multi_reduction <maximumf>, %59, %cst_36 [1] : vector<48x48xf32> to vector<48xf32>
    %61 = vector.shape_cast %60 : vector<48xf32> to vector<48x1xf32>
    %62 = vector.broadcast %61 : vector<48x1xf32> to vector<48x48xf32>
    %63 = arith.subf %59, %62 : vector<48x48xf32>
    %64 = math.exp %63 : vector<48x48xf32>
    %cst_37 = arith.constant dense<0.000000e+00> : vector<48xf32>
    %65 = vector.multi_reduction <add>, %64, %cst_37 [1] : vector<48x48xf32> to vector<48xf32>
    %66 = vector.shape_cast %65 : vector<48xf32> to vector<48x1xf32>
    %67 = tpu.reciprocal %66 {approx = true} : vector<48x1xf32> -> vector<48x1xf32>
    %68 = vector.broadcast %67 : vector<48x1xf32> to vector<48x48xf32>
    %69 = arith.mulf %64, %68 : vector<48x48xf32>
    %cst_38 = arith.constant dense<0.000000e+00> : vector<48x16xf32>
    %70 = tpu.matmul %69, %55, %cst_38 {dimension_numbers = #tpu.dot_dimension_numbers<[1], [0], [0], [1], [0, 0, 1, 1], [], []>} : vector<48x48xf32>, vector<48x16xf32>, vector<48x16xf32> -> vector<48x16xf32>
    %c0_39 = arith.constant 0 : index
    %c16_40 = arith.constant 16 : index
    %71 = vector.load %arg22[%c0_39, %c16_40] : memref<48x32xf32, #tpu.memory_space<vmem>>, vector<48x16xf32>
    tpu.vector_store %arg22[%c0_39, %c16_40], %70 {strides = array<i32>} : memref<48x32xf32, #tpu.memory_space<vmem>>, vector<48x16xf32>,
    %c0_41 = arith.constant 0 : index
    %c0_42 = arith.constant 0 : index
    %72 = vector.load %arg22[%c0_41, %c0_42] : memref<48x32xf32, #tpu.memory_space<vmem>>, vector<48x32xf32>
    %c0_43 = arith.constant 0 : index
    %c0_44 = arith.constant 0 : index
    %c0_45 = arith.constant 0 : index
    %73 = vector.load %arg6[%c0_43, %c0_44, %c0_45] : memref<2x32x32xf32, #tpu.memory_space<vmem>>, vector<1x32x32xf32>
    %74 = vector.shape_cast %73 : vector<1x32x32xf32> to vector<32x32xf32>
    %cst_46 = arith.constant dense<0.000000e+00> : vector<48x32xf32>
    %75 = tpu.matmul %72, %74, %cst_46 {dimension_numbers = #tpu.dot_dimension_numbers<[1], [0], [0], [1], [0, 0, 1, 1], [], []>} : vector<48x32xf32>, vector<32x32xf32>, vector<48x32xf32> -> vector<48x32xf32>
    %c0_47 = arith.constant 0 : index
    %c0_48 = arith.constant 0 : index
    %c0_49 = arith.constant 0 : index
    %76 = vector.load %arg7[%c0_47, %c0_48, %c0_49] : memref<2x1x32xf32, #tpu.memory_space<vmem>>, vector<1x1x32xf32>
    %77 = vector.shape_cast %76 : vector<1x1x32xf32> to vector<1x32xf32>
    %78 = vector.broadcast %77 : vector<1x32xf32> to vector<48x32xf32>
    %79 = arith.addf %75, %78 : vector<48x32xf32>
    %80 = arith.addf %25, %79 : vector<48x32xf32>
    %c0_50 = arith.constant 0 : index
    %c0_51 = arith.constant 0 : index
    %c0_52 = arith.constant 0 : index
    %81 = vector.load %arg8[%c0_50, %c0_51, %c0_52] : memref<2x1x32xf32, #tpu.memory_space<vmem>>, vector<1x1x32xf32>
    %82 = vector.shape_cast %81 : vector<1x1x32xf32> to vector<1x32xf32>
    %c0_53 = arith.constant 0 : index
    %c0_54 = arith.constant 0 : index
    %c0_55 = arith.constant 0 : index
    %83 = vector.load %arg9[%c0_53, %c0_54, %c0_55] : memref<2x1x32xf32, #tpu.memory_space<vmem>>, vector<1x1x32xf32>
    %84 = vector.shape_cast %83 : vector<1x1x32xf32> to vector<1x32xf32>
    %cst_56 = arith.constant dense<0.000000e+00> : vector<48xf32>
    %85 = vector.multi_reduction <add>, %80, %cst_56 [1] : vector<48x32xf32> to vector<48xf32>
    %86 = vector.shape_cast %85 : vector<48xf32> to vector<48x1xf32>
    %cst_57 = arith.constant 3.200000e+01 : f32
    %87 = vector.broadcast %cst_57 : f32 to vector<48x1xf32>
    %88 = arith.divf %86, %87 : vector<48x1xf32>
    %89 = vector.broadcast %88 : vector<48x1xf32> to vector<48x32xf32>
    %90 = arith.subf %80, %89 : vector<48x32xf32>
    %91 = arith.mulf %90, %90 : vector<48x32xf32>
    %cst_58 = arith.constant dense<0.000000e+00> : vector<48xf32>
    %92 = vector.multi_reduction <add>, %91, %cst_58 [1] : vector<48x32xf32> to vector<48xf32>
    %93 = vector.shape_cast %92 : vector<48xf32> to vector<48x1xf32>
    %cst_59 = arith.constant 3.200000e+01 : f32
    %94 = vector.broadcast %cst_59 : f32 to vector<48x1xf32>
    %95 = arith.divf %93, %94 : vector<48x1xf32>
    %96 = vector.broadcast %88 : vector<48x1xf32> to vector<48x32xf32>
    %97 = arith.subf %80, %96 : vector<48x32xf32>
    %cst_60 = arith.constant 9.99999996E-13 : f32
    %98 = vector.broadcast %cst_60 : f32 to vector<48x1xf32>
    %99 = arith.addf %95, %98 : vector<48x1xf32>
    %100 = math.rsqrt %99 : vector<48x1xf32>
    %101 = vector.broadcast %100 : vector<48x1xf32> to vector<48x32xf32>
    %102 = arith.mulf %97, %101 : vector<48x32xf32>
    %103 = vector.broadcast %82 : vector<1x32xf32> to vector<48x32xf32>
    %104 = arith.mulf %102, %103 : vector<48x32xf32>
    %105 = vector.broadcast %84 : vector<1x32xf32> to vector<48x32xf32>
    %106 = arith.addf %104, %105 : vector<48x32xf32>
    %c0_61 = arith.constant 0 : index
    %c0_62 = arith.constant 0 : index
    %c0_63 = arith.constant 0 : index
    %107 = vector.load %arg10[%c0_61, %c0_62, %c0_63] : memref<2x32x64xf32, #tpu.memory_space<vmem>>, vector<1x32x64xf32>
    %108 = vector.shape_cast %107 : vector<1x32x64xf32> to vector<32x64xf32>
    %cst_64 = arith.constant dense<0.000000e+00> : vector<48x64xf32>
    %109 = tpu.matmul %106, %108, %cst_64 {dimension_numbers = #tpu.dot_dimension_numbers<[1], [0], [0], [1], [0, 0, 1, 1], [], []>} : vector<48x32xf32>, vector<32x64xf32>, vector<48x64xf32> -> vector<48x64xf32>
    %c0_65 = arith.constant 0 : index
    %c0_66 = arith.constant 0 : index
    %c0_67 = arith.constant 0 : index
    %110 = vector.load %arg11[%c0_65, %c0_66, %c0_67] : memref<2x1x64xf32, #tpu.memory_space<vmem>>, vector<1x1x64xf32>
    %111 = vector.shape_cast %110 : vector<1x1x64xf32> to vector<1x64xf32>
    %112 = vector.broadcast %111 : vector<1x64xf32> to vector<48x64xf32>
    %113 = arith.addf %109, %112 : vector<48x64xf32>
    %cst_68 = arith.constant 5.000000e-01 : f32
    %114 = vector.broadcast %cst_68 : f32 to vector<48x64xf32>
    %115 = arith.mulf %114, %113 : vector<48x64xf32>
    %cst_69 = arith.constant 4.471500e-02 : f32
    %116 = vector.broadcast %cst_69 : f32 to vector<48x64xf32>
    %117 = arith.mulf %116, %113 : vector<48x64xf32>
    %118 = arith.mulf %117, %113 : vector<48x64xf32>
    %119 = arith.mulf %118, %113 : vector<48x64xf32>
    %120 = arith.addf %113, %119 : vector<48x64xf32>
    %cst_70 = arith.constant 0.797884583 : f32
    %121 = vector.broadcast %cst_70 : f32 to vector<48x64xf32>
    %122 = arith.mulf %121, %120 : vector<48x64xf32>
    %123 = math.tanh %122 : vector<48x64xf32>
    %cst_71 = arith.constant 1.000000e+00 : f32
    %124 = vector.broadcast %cst_71 : f32 to vector<48x64xf32>
    %125 = arith.addf %124, %123 : vector<48x64xf32>
    %126 = arith.mulf %115, %125 : vector<48x64xf32>
    %c0_72 = arith.constant 0 : index
    %c0_73 = arith.constant 0 : index
    %c0_74 = arith.constant 0 : index
    %127 = vector.load %arg12[%c0_72, %c0_73, %c0_74] : memref<2x64x32xf32, #tpu.memory_space<vmem>>, vector<1x64x32xf32>
    %128 = vector.shape_cast %127 : vector<1x64x32xf32> to vector<64x32xf32>
    %cst_75 = arith.constant dense<0.000000e+00> : vector<48x32xf32>
    %129 = tpu.matmul %126, %128, %cst_75 {dimension_numbers = #tpu.dot_dimension_numbers<[1], [0], [0], [1], [0, 0, 1, 1], [], []>} : vector<48x64xf32>, vector<64x32xf32>, vector<48x32xf32> -> vector<48x32xf32>
    %c0_76 = arith.constant 0 : index
    %c0_77 = arith.constant 0 : index
    %c0_78 = arith.constant 0 : index
    %130 = vector.load %arg13[%c0_76, %c0_77, %c0_78] : memref<2x1x32xf32, #tpu.memory_space<vmem>>, vector<1x1x32xf32>
    %131 = vector.shape_cast %130 : vector<1x1x32xf32> to vector<1x32xf32>
    %132 = vector.broadcast %131 : vector<1x32xf32> to vector<48x32xf32>
    %133 = arith.addf %129, %132 : vector<48x32xf32>
    %134 = arith.addf %106, %133 : vector<48x32xf32>
    %c0_79 = arith.constant 0 : index
    %c0_80 = arith.constant 0 : index
    %c0_81 = arith.constant 0 : index
    %135 = vector.load %arg14[%c0_79, %c0_80, %c0_81] : memref<2x1x32xf32, #tpu.memory_space<vmem>>, vector<1x1x32xf32>
    %136 = vector.shape_cast %135 : vector<1x1x32xf32> to vector<1x32xf32>
    %c0_82 = arith.constant 0 : index
    %c0_83 = arith.constant 0 : index
    %c0_84 = arith.constant 0 : index
    %137 = vector.load %arg15[%c0_82, %c0_83, %c0_84] : memref<2x1x32xf32, #tpu.memory_space<vmem>>, vector<1x1x32xf32>
    %138 = vector.shape_cast %137 : vector<1x1x32xf32> to vector<1x32xf32>
    %cst_85 = arith.constant dense<0.000000e+00> : vector<48xf32>
    %139 = vector.multi_reduction <add>, %134, %cst_85 [1] : vector<48x32xf32> to vector<48xf32>
    %140 = vector.shape_cast %139 : vector<48xf32> to vector<48x1xf32>
    %cst_86 = arith.constant 3.200000e+01 : f32
    %141 = vector.broadcast %cst_86 : f32 to vector<48x1xf32>
    %142 = arith.divf %140, %141 : vector<48x1xf32>
    %143 = vector.broadcast %142 : vector<48x1xf32> to vector<48x32xf32>
    %144 = arith.subf %134, %143 : vector<48x32xf32>
    %145 = arith.mulf %144, %144 : vector<48x32xf32>
    %cst_87 = arith.constant dense<0.000000e+00> : vector<48xf32>
    %146 = vector.multi_reduction <add>, %145, %cst_87 [1] : vector<48x32xf32> to vector<48xf32>
    %147 = vector.shape_cast %146 : vector<48xf32> to vector<48x1xf32>
    %cst_88 = arith.constant 3.200000e+01 : f32
    %148 = vector.broadcast %cst_88 : f32 to vector<48x1xf32>
    %149 = arith.divf %147, %148 : vector<48x1xf32>
    %150 = vector.broadcast %142 : vector<48x1xf32> to vector<48x32xf32>
    %151 = arith.subf %134, %150 : vector<48x32xf32>
    %cst_89 = arith.constant 9.99999996E-13 : f32
    %152 = vector.broadcast %cst_89 : f32 to vector<48x1xf32>
    %153 = arith.addf %149, %152 : vector<48x1xf32>
    %154 = math.rsqrt %153 : vector<48x1xf32>
    %155 = vector.broadcast %154 : vector<48x1xf32> to vector<48x32xf32>
    %156 = arith.mulf %151, %155 : vector<48x32xf32>
    %157 = vector.broadcast %136 : vector<1x32xf32> to vector<48x32xf32>
    %158 = arith.mulf %156, %157 : vector<48x32xf32>
    %159 = vector.broadcast %138 : vector<1x32xf32> to vector<48x32xf32>
    %160 = arith.addf %158, %159 : vector<48x32xf32>
    %c1 = arith.constant 1 : index
    %c0_90 = arith.constant 0 : index
    %c0_91 = arith.constant 0 : index
    %161 = vector.load %arg4[%c1, %c0_90, %c0_91] : memref<2x32x96xf32, #tpu.memory_space<vmem>>, vector<1x32x96xf32>
    %162 = vector.shape_cast %161 : vector<1x32x96xf32> to vector<32x96xf32>
    %cst_92 = arith.constant dense<0.000000e+00> : vector<48x96xf32>
    %163 = tpu.matmul %160, %162, %cst_92 {dimension_numbers = #tpu.dot_dimension_numbers<[1], [0], [0], [1], [0, 0, 1, 1], [], []>} : vector<48x32xf32>, vector<32x96xf32>, vector<48x96xf32> -> vector<48x96xf32>
    %c1_93 = arith.constant 1 : index
    %c0_94 = arith.constant 0 : index
    %c0_95 = arith.constant 0 : index
    %164 = vector.load %arg5[%c1_93, %c0_94, %c0_95] : memref<2x1x96xf32, #tpu.memory_space<vmem>>, vector<1x1x96xf32>
    %165 = vector.shape_cast %164 : vector<1x1x96xf32> to vector<1x96xf32>
    %166 = vector.broadcast %165 : vector<1x96xf32> to vector<48x96xf32>
    %167 = arith.addf %163, %166 : vector<48x96xf32>
    %c0_96 = arith.constant 0 : index
    %c0_97 = arith.constant 0 : index
    %168 = vector.load %arg21[%c0_96, %c0_97] : memref<48x96xf32, #tpu.memory_space<vmem>>, vector<48x96xf32>
    tpu.vector_store %arg21[%c0_96, %c0_97], %167 {strides = array<i32>} : memref<48x96xf32, #tpu.memory_space<vmem>>, vector<48x96xf32>,
    %c0_98 = arith.constant 0 : index
    %c0_99 = arith.constant 0 : index
    %169 = vector.load %arg21[%c0_98, %c0_99] : memref<48x96xf32, #tpu.memory_space<vmem>>, vector<48x16xf32>
    %c0_100 = arith.constant 0 : index
    %c32_101 = arith.constant 32 : index
    %170 = vector.load %arg21[%c0_100, %c32_101] : memref<48x96xf32, #tpu.memory_space<vmem>>, vector<48x16xf32>
    %c0_102 = arith.constant 0 : index
    %c64_103 = arith.constant 64 : index
    %171 = vector.load %arg21[%c0_102, %c64_103] : memref<48x96xf32, #tpu.memory_space<vmem>>, vector<48x16xf32>
    "tpu.trace_start"() <{level = 10 : i32, message = "qd,kd->qk"}> : () -> ()
    %cst_104 = arith.constant dense<0.000000e+00> : vector<48x48xf32>
    %172 = tpu.matmul %169, %170, %cst_104 {dimension_numbers = #tpu.dot_dimension_numbers<[1], [1], [0], [0], [0, 0, 1, 0], [], []>} : vector<48x16xf32>, vector<48x16xf32>, vector<48x48xf32> -> vector<48x48xf32>
    "tpu.trace_stop"() : () -> ()
    %cst_105 = arith.constant 2.500000e-01 : f32
    %173 = vector.broadcast %cst_105 : f32 to vector<48x48xf32>
    %174 = arith.mulf %172, %173 : vector<48x48xf32>
    %175 = arith.addf %174, %0 : vector<48x48xf32>
    %cst_106 = arith.constant dense<0xFF800000> : vector<48xf32>
    %176 = vector.multi_reduction <maximumf>, %175, %cst_106 [1] : vector<48x48xf32> to vector<48xf32>
    %177 = vector.shape_cast %176 : vector<48xf32> to vector<48x1xf32>
    %178 = vector.broadcast %177 : vector<48x1xf32> to vector<48x48xf32>
    %179 = arith.subf %175, %178 : vector<48x48xf32>
    %180 = math.exp %179 : vector<48x48xf32>
    %cst_107 = arith.constant dense<0.000000e+00> : vector<48xf32>
    %181 = vector.multi_reduction <add>, %180, %cst_107 [1] : vector<48x48xf32> to vector<48xf32>
    %182 = vector.shape_cast %181 : vector<48xf32> to vector<48x1xf32>
    %183 = tpu.reciprocal %182 {approx = true} : vector<48x1xf32> -> vector<48x1xf32>
    %184 = vector.broadcast %183 : vector<48x1xf32> to vector<48x48xf32>
    %185 = arith.mulf %180, %184 : vector<48x48xf32>
    %cst_108 = arith.constant dense<0.000000e+00> : vector<48x16xf32>
    %186 = tpu.matmul %185, %171, %cst_108 {dimension_numbers = #tpu.dot_dimension_numbers<[1], [0], [0], [1], [0, 0, 1, 1], [], []>} : vector<48x48xf32>, vector<48x16xf32>, vector<48x16xf32> -> vector<48x16xf32>
    %c0_109 = arith.constant 0 : index
    %c0_110 = arith.constant 0 : index
    %187 = vector.load %arg22[%c0_109, %c0_110] : memref<48x32xf32, #tpu.memory_space<vmem>>, vector<48x16xf32>
    tpu.vector_store %arg22[%c0_109, %c0_110], %186 {strides = array<i32>} : memref<48x32xf32, #tpu.memory_space<vmem>>, vector<48x16xf32>,
    %c0_111 = arith.constant 0 : index
    %c16_112 = arith.constant 16 : index
    %188 = vector.load %arg21[%c0_111, %c16_112] : memref<48x96xf32, #tpu.memory_space<vmem>>, vector<48x16xf32>
    %c0_113 = arith.constant 0 : index
    %c48_114 = arith.constant 48 : index
    %189 = vector.load %arg21[%c0_113, %c48_114] : memref<48x96xf32, #tpu.memory_space<vmem>>, vector<48x16xf32>
    %c0_115 = arith.constant 0 : index
    %c80_116 = arith.constant 80 : index
    %190 = vector.load %arg21[%c0_115, %c80_116] : memref<48x96xf32, #tpu.memory_space<vmem>>, vector<48x16xf32>
    "tpu.trace_start"() <{level = 10 : i32, message = "qd,kd->qk"}> : () -> ()
    %cst_117 = arith.constant dense<0.000000e+00> : vector<48x48xf32>
    %191 = tpu.matmul %188, %189, %cst_117 {dimension_numbers = #tpu.dot_dimension_numbers<[1], [1], [0], [0], [0, 0, 1, 0], [], []>} : vector<48x16xf32>, vector<48x16xf32>, vector<48x48xf32> -> vector<48x48xf32>
    "tpu.trace_stop"() : () -> ()
    %cst_118 = arith.constant 2.500000e-01 : f32
    %192 = vector.broadcast %cst_118 : f32 to vector<48x48xf32>
    %193 = arith.mulf %191, %192 : vector<48x48xf32>
    %194 = arith.addf %193, %0 : vector<48x48xf32>
    %cst_119 = arith.constant dense<0xFF800000> : vector<48xf32>
    %195 = vector.multi_reduction <maximumf>, %194, %cst_119 [1] : vector<48x48xf32> to vector<48xf32>
    %196 = vector.shape_cast %195 : vector<48xf32> to vector<48x1xf32>
    %197 = vector.broadcast %196 : vector<48x1xf32> to vector<48x48xf32>
    %198 = arith.subf %194, %197 : vector<48x48xf32>
    %199 = math.exp %198 : vector<48x48xf32>
    %cst_120 = arith.constant dense<0.000000e+00> : vector<48xf32>
    %200 = vector.multi_reduction <add>, %199, %cst_120 [1] : vector<48x48xf32> to vector<48xf32>
    %201 = vector.shape_cast %200 : vector<48xf32> to vector<48x1xf32>
    %202 = tpu.reciprocal %201 {approx = true} : vector<48x1xf32> -> vector<48x1xf32>
    %203 = vector.broadcast %202 : vector<48x1xf32> to vector<48x48xf32>
    %204 = arith.mulf %199, %203 : vector<48x48xf32>
    %cst_121 = arith.constant dense<0.000000e+00> : vector<48x16xf32>
    %205 = tpu.matmul %204, %190, %cst_121 {dimension_numbers = #tpu.dot_dimension_numbers<[1], [0], [0], [1], [0, 0, 1, 1], [], []>} : vector<48x48xf32>, vector<48x16xf32>, vector<48x16xf32> -> vector<48x16xf32>
    %c0_122 = arith.constant 0 : index
    %c16_123 = arith.constant 16 : index
    %206 = vector.load %arg22[%c0_122, %c16_123] : memref<48x32xf32, #tpu.memory_space<vmem>>, vector<48x16xf32>
    tpu.vector_store %arg22[%c0_122, %c16_123], %205 {strides = array<i32>} : memref<48x32xf32, #tpu.memory_space<vmem>>, vector<48x16xf32>,
    %c0_124 = arith.constant 0 : index
    %c0_125 = arith.constant 0 : index
    %207 = vector.load %arg22[%c0_124, %c0_125] : memref<48x32xf32, #tpu.memory_space<vmem>>, vector<48x32xf32>
    %c1_126 = arith.constant 1 : index
    %c0_127 = arith.constant 0 : index
    %c0_128 = arith.constant 0 : index
    %208 = vector.load %arg6[%c1_126, %c0_127, %c0_128] : memref<2x32x32xf32, #tpu.memory_space<vmem>>, vector<1x32x32xf32>
    %209 = vector.shape_cast %208 : vector<1x32x32xf32> to vector<32x32xf32>
    %cst_129 = arith.constant dense<0.000000e+00> : vector<48x32xf32>
    %210 = tpu.matmul %207, %209, %cst_129 {dimension_numbers = #tpu.dot_dimension_numbers<[1], [0], [0], [1], [0, 0, 1, 1], [], []>} : vector<48x32xf32>, vector<32x32xf32>, vector<48x32xf32> -> vector<48x32xf32>
    %c1_130 = arith.constant 1 : index
    %c0_131 = arith.constant 0 : index
    %c0_132 = arith.constant 0 : index
    %211 = vector.load %arg7[%c1_130, %c0_131, %c0_132] : memref<2x1x32xf32, #tpu.memory_space<vmem>>, vector<1x1x32xf32>
    %212 = vector.shape_cast %211 : vector<1x1x32xf32> to vector<1x32xf32>
    %213 = vector.broadcast %212 : vector<1x32xf32> to vector<48x32xf32>
    %214 = arith.addf %210, %213 : vector<48x32xf32>
    %215 = arith.addf %160, %214 : vector<48x32xf32>
    %c1_133 = arith.constant 1 : index
    %c0_134 = arith.constant 0 : index
    %c0_135 = arith.constant 0 : index
    %216 = vector.load %arg8[%c1_133, %c0_134, %c0_135] : memref<2x1x32xf32, #tpu.memory_space<vmem>>, vector<1x1x32xf32>
    %217 = vector.shape_cast %216 : vector<1x1x32xf32> to vector<1x32xf32>
    %c1_136 = arith.constant 1 : index
    %c0_137 = arith.constant 0 : index
    %c0_138 = arith.constant 0 : index
    %218 = vector.load %arg9[%c1_136, %c0_137, %c0_138] : memref<2x1x32xf32, #tpu.memory_space<vmem>>, vector<1x1x32xf32>
    %219 = vector.shape_cast %218 : vector<1x1x32xf32> to vector<1x32xf32>
    %cst_139 = arith.constant dense<0.000000e+00> : vector<48xf32>
    %220 = vector.multi_reduction <add>, %215, %cst_139 [1] : vector<48x32xf32> to vector<48xf32>
    %221 = vector.shape_cast %220 : vector<48xf32> to vector<48x1xf32>
    %cst_140 = arith.constant 3.200000e+01 : f32
    %222 = vector.broadcast %cst_140 : f32 to vector<48x1xf32>
    %223 = arith.divf %221, %222 : vector<48x1xf32>
    %224 = vector.broadcast %223 : vector<48x1xf32> to vector<48x32xf32>
    %225 = arith.subf %215, %224 : vector<48x32xf32>
    %226 = arith.mulf %225, %225 : vector<48x32xf32>
    %cst_141 = arith.constant dense<0.000000e+00> : vector<48xf32>
    %227 = vector.multi_reduction <add>, %226, %cst_141 [1] : vector<48x32xf32> to vector<48xf32>
    %228 = vector.shape_cast %227 : vector<48xf32> to vector<48x1xf32>
    %cst_142 = arith.constant 3.200000e+01 : f32
    %229 = vector.broadcast %cst_142 : f32 to vector<48x1xf32>
    %230 = arith.divf %228, %229 : vector<48x1xf32>
    %231 = vector.broadcast %223 : vector<48x1xf32> to vector<48x32xf32>
    %232 = arith.subf %215, %231 : vector<48x32xf32>
    %cst_143 = arith.constant 9.99999996E-13 : f32
    %233 = vector.broadcast %cst_143 : f32 to vector<48x1xf32>
    %234 = arith.addf %230, %233 : vector<48x1xf32>
    %235 = math.rsqrt %234 : vector<48x1xf32>
    %236 = vector.broadcast %235 : vector<48x1xf32> to vector<48x32xf32>
    %237 = arith.mulf %232, %236 : vector<48x32xf32>
    %238 = vector.broadcast %217 : vector<1x32xf32> to vector<48x32xf32>
    %239 = arith.mulf %237, %238 : vector<48x32xf32>
    %240 = vector.broadcast %219 : vector<1x32xf32> to vector<48x32xf32>
    %241 = arith.addf %239, %240 : vector<48x32xf32>
    %c1_144 = arith.constant 1 : index
    %c0_145 = arith.constant 0 : index
    %c0_146 = arith.constant 0 : index
    %242 = vector.load %arg10[%c1_144, %c0_145, %c0_146] : memref<2x32x64xf32, #tpu.memory_space<vmem>>, vector<1x32x64xf32>
    %243 = vector.shape_cast %242 : vector<1x32x64xf32> to vector<32x64xf32>
    %cst_147 = arith.constant dense<0.000000e+00> : vector<48x64xf32>
    %244 = tpu.matmul %241, %243, %cst_147 {dimension_numbers = #tpu.dot_dimension_numbers<[1], [0], [0], [1], [0, 0, 1, 1], [], []>} : vector<48x32xf32>, vector<32x64xf32>, vector<48x64xf32> -> vector<48x64xf32>
    %c1_148 = arith.constant 1 : index
    %c0_149 = arith.constant 0 : index
    %c0_150 = arith.constant 0 : index
    %245 = vector.load %arg11[%c1_148, %c0_149, %c0_150] : memref<2x1x64xf32, #tpu.memory_space<vmem>>, vector<1x1x64xf32>
    %246 = vector.shape_cast %245 : vector<1x1x64xf32> to vector<1x64xf32>
    %247 = vector.broadcast %246 : vector<1x64xf32> to vector<48x64xf32>
    %248 = arith.addf %244, %247 : vector<48x64xf32>
    %cst_151 = arith.constant 5.000000e-01 : f32
    %249 = vector.broadcast %cst_151 : f32 to vector<48x64xf32>
    %250 = arith.mulf %249, %248 : vector<48x64xf32>
    %cst_152 = arith.constant 4.471500e-02 : f32
    %251 = vector.broadcast %cst_152 : f32 to vector<48x64xf32>
    %252 = arith.mulf %251, %248 : vector<48x64xf32>
    %253 = arith.mulf %252, %248 : vector<48x64xf32>
    %254 = arith.mulf %253, %248 : vector<48x64xf32>
    %255 = arith.addf %248, %254 : vector<48x64xf32>
    %cst_153 = arith.constant 0.797884583 : f32
    %256 = vector.broadcast %cst_153 : f32 to vector<48x64xf32>
    %257 = arith.mulf %256, %255 : vector<48x64xf32>
    %258 = math.tanh %257 : vector<48x64xf32>
    %cst_154 = arith.constant 1.000000e+00 : f32
    %259 = vector.broadcast %cst_154 : f32 to vector<48x64xf32>
    %260 = arith.addf %259, %258 : vector<48x64xf32>
    %261 = arith.mulf %250, %260 : vector<48x64xf32>
    %c1_155 = arith.constant 1 : index
    %c0_156 = arith.constant 0 : index
    %c0_157 = arith.constant 0 : index
    %262 = vector.load %arg12[%c1_155, %c0_156, %c0_157] : memref<2x64x32xf32, #tpu.memory_space<vmem>>, vector<1x64x32xf32>
    %263 = vector.shape_cast %262 : vector<1x64x32xf32> to vector<64x32xf32>
    %cst_158 = arith.constant dense<0.000000e+00> : vector<48x32xf32>
    %264 = tpu.matmul %261, %263, %cst_158 {dimension_numbers = #tpu.dot_dimension_numbers<[1], [0], [0], [1], [0, 0, 1, 1], [], []>} : vector<48x64xf32>, vector<64x32xf32>, vector<48x32xf32> -> vector<48x32xf32>
    %c1_159 = arith.constant 1 : index
    %c0_160 = arith.constant 0 : index
    %c0_161 = arith.constant 0 : index
    %265 = vector.load %arg13[%c1_159, %c0_160, %c0_161] : memref<2x1x32xf32, #tpu.memory_space<vmem>>, vector<1x1x32xf32>
    %266 = vector.shape_cast %265 : vector<1x1x32xf32> to vector<1x32xf32>
    %267 = vector.broadcast %266 : vector<1x32xf32> to vector<48x32xf32>
    %268 = arith.addf %264, %267 : vector<48x32xf32>
    %269 = arith.addf %241, %268 : vector<48x32xf32>
    %c1_162 = arith.constant 1 : index
    %c0_163 = arith.constant 0 : index
    %c0_164 = arith.constant 0 : index
    %270 = vector.load %arg14[%c1_162, %c0_163, %c0_164] : memref<2x1x32xf32, #tpu.memory_space<vmem>>, vector<1x1x32xf32>
    %271 = vector.shape_cast %270 : vector<1x1x32xf32> to vector<1x32xf32>
    %c1_165 = arith.constant 1 : index
    %c0_166 = arith.constant 0 : index
    %c0_167 = arith.constant 0 : index
    %272 = vector.load %arg15[%c1_165, %c0_166, %c0_167] : memref<2x1x32xf32, #tpu.memory_space<vmem>>, vector<1x1x32xf32>
    %273 = vector.shape_cast %272 : vector<1x1x32xf32> to vector<1x32xf32>
    %cst_168 = arith.constant dense<0.000000e+00> : vector<48xf32>
    %274 = vector.multi_reduction <add>, %269, %cst_168 [1] : vector<48x32xf32> to vector<48xf32>
    %275 = vector.shape_cast %274 : vector<48xf32> to vector<48x1xf32>
    %cst_169 = arith.constant 3.200000e+01 : f32
    %276 = vector.broadcast %cst_169 : f32 to vector<48x1xf32>
    %277 = arith.divf %275, %276 : vector<48x1xf32>
    %278 = vector.broadcast %277 : vector<48x1xf32> to vector<48x32xf32>
    %279 = arith.subf %269, %278 : vector<48x32xf32>
    %280 = arith.mulf %279, %279 : vector<48x32xf32>
    %cst_170 = arith.constant dense<0.000000e+00> : vector<48xf32>
    %281 = vector.multi_reduction <add>, %280, %cst_170 [1] : vector<48x32xf32> to vector<48xf32>
    %282 = vector.shape_cast %281 : vector<48xf32> to vector<48x1xf32>
    %cst_171 = arith.constant 3.200000e+01 : f32
    %283 = vector.broadcast %cst_171 : f32 to vector<48x1xf32>
    %284 = arith.divf %282, %283 : vector<48x1xf32>
    %285 = vector.broadcast %277 : vector<48x1xf32> to vector<48x32xf32>
    %286 = arith.subf %269, %285 : vector<48x32xf32>
    %cst_172 = arith.constant 9.99999996E-13 : f32
    %287 = vector.broadcast %cst_172 : f32 to vector<48x1xf32>
    %288 = arith.addf %284, %287 : vector<48x1xf32>
    %289 = math.rsqrt %288 : vector<48x1xf32>
    %290 = vector.broadcast %289 : vector<48x1xf32> to vector<48x32xf32>
    %291 = arith.mulf %286, %290 : vector<48x32xf32>
    %292 = vector.broadcast %271 : vector<1x32xf32> to vector<48x32xf32>
    %293 = arith.mulf %291, %292 : vector<48x32xf32>
    %294 = vector.broadcast %273 : vector<1x32xf32> to vector<48x32xf32>
    %295 = arith.addf %293, %294 : vector<48x32xf32>
    %c0_173 = arith.constant 0 : index
    %c0_174 = arith.constant 0 : index
    %296 = vector.load %arg16[%c0_173, %c0_174] : memref<32x32xf32, #tpu.memory_space<vmem>>, vector<32x32xf32>
    %cst_175 = arith.constant dense<0.000000e+00> : vector<48x32xf32>
    %297 = tpu.matmul %295, %296, %cst_175 {dimension_numbers = #tpu.dot_dimension_numbers<[1], [0], [0], [1], [0, 0, 1, 1], [], []>} : vector<48x32xf32>, vector<32x32xf32>, vector<48x32xf32> -> vector<48x32xf32>
    %c0_176 = arith.constant 0 : index
    %c0_177 = arith.constant 0 : index
    %298 = vector.load %arg17[%c0_176, %c0_177] : memref<1x32xf32, #tpu.memory_space<vmem>>, vector<1x32xf32>
    %299 = vector.broadcast %298 : vector<1x32xf32> to vector<48x32xf32>
    %300 = arith.addf %297, %299 : vector<48x32xf32>
    %301 = math.tanh %300 : vector<48x32xf32>
    %c0_178 = arith.constant 0 : index
    %c0_179 = arith.constant 0 : index
    %302 = vector.load %arg18[%c0_178, %c0_179] : memref<32x2xf32, #tpu.memory_space<vmem>>, vector<32x2xf32>
    %cst_180 = arith.constant dense<0.000000e+00> : vector<48x2xf32>
    %303 = tpu.matmul %301, %302, %cst_180 {dimension_numbers = #tpu.dot_dimension_numbers<[1], [0], [0], [1], [0, 0, 1, 1], [], []>} : vector<48x32xf32>, vector<32x2xf32>, vector<48x2xf32> -> vector<48x2xf32>
    %c0_181 = arith.constant 0 : index
    %c0_182 = arith.constant 0 : index
    %304 = vector.load %arg19[%c0_181, %c0_182] : memref<1x2xf32, #tpu.memory_space<vmem>>, vector<1x2xf32>
    %305 = vector.broadcast %304 : vector<1x2xf32> to vector<48x2xf32>
    %306 = arith.addf %303, %305 : vector<48x2xf32>
    %c0_183 = arith.constant 0 : index
    %c0_184 = arith.constant 0 : index
    %307 = vector.load %arg20[%c0_183, %c0_184] : memref<48x2xf32, #tpu.memory_space<vmem>>, vector<48x2xf32>
    tpu.vector_store %arg20[%c0_183, %c0_184], %306 {strides = array<i32>} : memref<48x2xf32, #tpu.memory_space<vmem>>, vector<48x2xf32>,
    return
  }
}

module attributes {stable_mosaic.version = 11 : i64} {
  func.func @_sub_kernel(%arg0: memref<16x32xf32, #tpu.memory_space<vmem>>, %arg1: memref<16x16xf32, #tpu.memory_space<vmem>>, %arg2: memref<1x32xf32, #tpu.memory_space<vmem>>, %arg3: memref<1x32xf32, #tpu.memory_space<vmem>>, %arg4: memref<2x32x96xf32, #tpu.memory_space<vmem>>, %arg5: memref<2x1x96xf32, #tpu.memory_space<vmem>>, %arg6: memref<2x32x32xf32, #tpu.memory_space<vmem>>, %arg7: memref<2x1x32xf32, #tpu.memory_space<vmem>>, %arg8: memref<2x1x32xf32, #tpu.memory_space<vmem>>, %arg9: memref<2x1x32xf32, #tpu.memory_space<vmem>>, %arg10: memref<2x32x64xf32, #tpu.memory_space<vmem>>, %arg11: memref<2x1x64xf32, #tpu.memory_space<vmem>>, %arg12: memref<2x64x32xf32, #tpu.memory_space<vmem>>, %arg13: memref<2x1x32xf32, #tpu.memory_space<vmem>>, %arg14: memref<2x1x32xf32, #tpu.memory_space<vmem>>, %arg15: memref<2x1x32xf32, #tpu.memory_space<vmem>>, %arg16: memref<32x2xf32, #tpu.memory_space<vmem>>, %arg17: memref<1x2xf32, #tpu.memory_space<vmem>>, %arg18: memref<16x2xf32, #tpu.memory_space<vmem>>, %arg19: memref<16x96xf32, #tpu.memory_space<vmem>>, %arg20: memref<16x32xf32, #tpu.memory_space<vmem>>) attributes {dimension_semantics = [], scalar_prefetch = 0 : i64, scratch_operands = 2 : i64, tpu.core_type = #tpu.core_type<tc>} {
    %c0 = arith.constant 0 : index
    %c0_0 = arith.constant 0 : index
    %0 = vector.load %arg1[%c0, %c0_0] : memref<16x16xf32, #tpu.memory_space<vmem>>, vector<16x16xf32>
    %c0_1 = arith.constant 0 : index
    %c0_2 = arith.constant 0 : index
    %1 = vector.load %arg0[%c0_1, %c0_2] : memref<16x32xf32, #tpu.memory_space<vmem>>, vector<16x32xf32>
    %c0_3 = arith.constant 0 : index
    %c0_4 = arith.constant 0 : index
    %2 = vector.load %arg2[%c0_3, %c0_4] : memref<1x32xf32, #tpu.memory_space<vmem>>, vector<1x32xf32>
    %c0_5 = arith.constant 0 : index
    %c0_6 = arith.constant 0 : index
    %3 = vector.load %arg3[%c0_5, %c0_6] : memref<1x32xf32, #tpu.memory_space<vmem>>, vector<1x32xf32>
    %cst = arith.constant dense<0.000000e+00> : vector<16xf32>
    %4 = vector.multi_reduction <add>, %1, %cst [1] : vector<16x32xf32> to vector<16xf32>
    %5 = vector.shape_cast %4 : vector<16xf32> to vector<16x1xf32>
    %cst_7 = arith.constant 3.200000e+01 : f32
    %6 = vector.broadcast %cst_7 : f32 to vector<16x1xf32>
    %7 = arith.divf %5, %6 : vector<16x1xf32>
    %8 = vector.broadcast %7 : vector<16x1xf32> to vector<16x32xf32>
    %9 = arith.subf %1, %8 : vector<16x32xf32>
    %10 = arith.mulf %9, %9 : vector<16x32xf32>
    %cst_8 = arith.constant dense<0.000000e+00> : vector<16xf32>
    %11 = vector.multi_reduction <add>, %10, %cst_8 [1] : vector<16x32xf32> to vector<16xf32>
    %12 = vector.shape_cast %11 : vector<16xf32> to vector<16x1xf32>
    %cst_9 = arith.constant 3.200000e+01 : f32
    %13 = vector.broadcast %cst_9 : f32 to vector<16x1xf32>
    %14 = arith.divf %12, %13 : vector<16x1xf32>
    %15 = vector.broadcast %7 : vector<16x1xf32> to vector<16x32xf32>
    %16 = arith.subf %1, %15 : vector<16x32xf32>
    %cst_10 = arith.constant 9.99999974E-6 : f32
    %17 = vector.broadcast %cst_10 : f32 to vector<16x1xf32>
    %18 = arith.addf %14, %17 : vector<16x1xf32>
    %19 = math.rsqrt %18 : vector<16x1xf32>
    %20 = vector.broadcast %19 : vector<16x1xf32> to vector<16x32xf32>
    %21 = arith.mulf %16, %20 : vector<16x32xf32>
    %22 = vector.broadcast %2 : vector<1x32xf32> to vector<16x32xf32>
    %23 = arith.mulf %21, %22 : vector<16x32xf32>
    %24 = vector.broadcast %3 : vector<1x32xf32> to vector<16x32xf32>
    %25 = arith.addf %23, %24 : vector<16x32xf32>
    %c0_11 = arith.constant 0 : index
    %c0_12 = arith.constant 0 : index
    %c0_13 = arith.constant 0 : index
    %26 = vector.load %arg4[%c0_11, %c0_12, %c0_13] : memref<2x32x96xf32, #tpu.memory_space<vmem>>, vector<1x32x96xf32>
    %27 = vector.shape_cast %26 : vector<1x32x96xf32> to vector<32x96xf32>
    %cst_14 = arith.constant dense<0.000000e+00> : vector<16x96xf32>
    %28 = tpu.matmul %25, %27, %cst_14 {dimension_numbers = #tpu.dot_dimension_numbers<[1], [0], [0], [1], [0, 0, 1, 1], [], []>} : vector<16x32xf32>, vector<32x96xf32>, vector<16x96xf32> -> vector<16x96xf32>
    %c0_15 = arith.constant 0 : index
    %c0_16 = arith.constant 0 : index
    %c0_17 = arith.constant 0 : index
    %29 = vector.load %arg5[%c0_15, %c0_16, %c0_17] : memref<2x1x96xf32, #tpu.memory_space<vmem>>, vector<1x1x96xf32>
    %30 = vector.shape_cast %29 : vector<1x1x96xf32> to vector<1x96xf32>
    %31 = vector.broadcast %30 : vector<1x96xf32> to vector<16x96xf32>
    %32 = arith.addf %28, %31 : vector<16x96xf32>
    %c0_18 = arith.constant 0 : index
    %c0_19 = arith.constant 0 : index
    %33 = vector.load %arg19[%c0_18, %c0_19] : memref<16x96xf32, #tpu.memory_space<vmem>>, vector<16x96xf32>
    tpu.vector_store %arg19[%c0_18, %c0_19], %32 {strides = array<i32>} : memref<16x96xf32, #tpu.memory_space<vmem>>, vector<16x96xf32>,
    %c0_20 = arith.constant 0 : index
    %c0_21 = arith.constant 0 : index
    %34 = vector.load %arg19[%c0_20, %c0_21] : memref<16x96xf32, #tpu.memory_space<vmem>>, vector<16x16xf32>
    %c0_22 = arith.constant 0 : index
    %c32 = arith.constant 32 : index
    %35 = vector.load %arg19[%c0_22, %c32] : memref<16x96xf32, #tpu.memory_space<vmem>>, vector<16x16xf32>
    %c0_23 = arith.constant 0 : index
    %c64 = arith.constant 64 : index
    %36 = vector.load %arg19[%c0_23, %c64] : memref<16x96xf32, #tpu.memory_space<vmem>>, vector<16x16xf32>
    "tpu.trace_start"() <{level = 10 : i32, message = "qd,kd->qk"}> : () -> ()
    %cst_24 = arith.constant dense<0.000000e+00> : vector<16x16xf32>
    %37 = tpu.matmul %34, %35, %cst_24 {dimension_numbers = #tpu.dot_dimension_numbers<[1], [1], [0], [0], [0, 0, 1, 0], [], []>} : vector<16x16xf32>, vector<16x16xf32>, vector<16x16xf32> -> vector<16x16xf32>
    "tpu.trace_stop"() : () -> ()
    %cst_25 = arith.constant 2.500000e-01 : f32
    %38 = vector.broadcast %cst_25 : f32 to vector<16x16xf32>
    %39 = arith.mulf %37, %38 : vector<16x16xf32>
    %40 = arith.addf %39, %0 : vector<16x16xf32>
    %cst_26 = arith.constant dense<0xFF800000> : vector<16xf32>
    %41 = vector.multi_reduction <maximumf>, %40, %cst_26 [1] : vector<16x16xf32> to vector<16xf32>
    %42 = vector.shape_cast %41 : vector<16xf32> to vector<16x1xf32>
    %43 = vector.broadcast %42 : vector<16x1xf32> to vector<16x16xf32>
    %44 = arith.subf %40, %43 : vector<16x16xf32>
    %45 = math.exp %44 : vector<16x16xf32>
    %cst_27 = arith.constant dense<0.000000e+00> : vector<16xf32>
    %46 = vector.multi_reduction <add>, %45, %cst_27 [1] : vector<16x16xf32> to vector<16xf32>
    %47 = vector.shape_cast %46 : vector<16xf32> to vector<16x1xf32>
    %48 = tpu.reciprocal %47 {approx = true} : vector<16x1xf32> -> vector<16x1xf32>
    %49 = vector.broadcast %48 : vector<16x1xf32> to vector<16x16xf32>
    %50 = arith.mulf %45, %49 : vector<16x16xf32>
    %cst_28 = arith.constant dense<0.000000e+00> : vector<16x16xf32>
    %51 = tpu.matmul %50, %36, %cst_28 {dimension_numbers = #tpu.dot_dimension_numbers<[1], [0], [0], [1], [0, 0, 1, 1], [], []>} : vector<16x16xf32>, vector<16x16xf32>, vector<16x16xf32> -> vector<16x16xf32>
    %c0_29 = arith.constant 0 : index
    %c0_30 = arith.constant 0 : index
    %52 = vector.load %arg20[%c0_29, %c0_30] : memref<16x32xf32, #tpu.memory_space<vmem>>, vector<16x16xf32>
    tpu.vector_store %arg20[%c0_29, %c0_30], %51 {strides = array<i32>} : memref<16x32xf32, #tpu.memory_space<vmem>>, vector<16x16xf32>,
    %c0_31 = arith.constant 0 : index
    %c16 = arith.constant 16 : index
    %53 = vector.load %arg19[%c0_31, %c16] : memref<16x96xf32, #tpu.memory_space<vmem>>, vector<16x16xf32>
    %c0_32 = arith.constant 0 : index
    %c48 = arith.constant 48 : index
    %54 = vector.load %arg19[%c0_32, %c48] : memref<16x96xf32, #tpu.memory_space<vmem>>, vector<16x16xf32>
    %c0_33 = arith.constant 0 : index
    %c80 = arith.constant 80 : index
    %55 = vector.load %arg19[%c0_33, %c80] : memref<16x96xf32, #tpu.memory_space<vmem>>, vector<16x16xf32>
    "tpu.trace_start"() <{level = 10 : i32, message = "qd,kd->qk"}> : () -> ()
    %cst_34 = arith.constant dense<0.000000e+00> : vector<16x16xf32>
    %56 = tpu.matmul %53, %54, %cst_34 {dimension_numbers = #tpu.dot_dimension_numbers<[1], [1], [0], [0], [0, 0, 1, 0], [], []>} : vector<16x16xf32>, vector<16x16xf32>, vector<16x16xf32> -> vector<16x16xf32>
    "tpu.trace_stop"() : () -> ()
    %cst_35 = arith.constant 2.500000e-01 : f32
    %57 = vector.broadcast %cst_35 : f32 to vector<16x16xf32>
    %58 = arith.mulf %56, %57 : vector<16x16xf32>
    %59 = arith.addf %58, %0 : vector<16x16xf32>
    %cst_36 = arith.constant dense<0xFF800000> : vector<16xf32>
    %60 = vector.multi_reduction <maximumf>, %59, %cst_36 [1] : vector<16x16xf32> to vector<16xf32>
    %61 = vector.shape_cast %60 : vector<16xf32> to vector<16x1xf32>
    %62 = vector.broadcast %61 : vector<16x1xf32> to vector<16x16xf32>
    %63 = arith.subf %59, %62 : vector<16x16xf32>
    %64 = math.exp %63 : vector<16x16xf32>
    %cst_37 = arith.constant dense<0.000000e+00> : vector<16xf32>
    %65 = vector.multi_reduction <add>, %64, %cst_37 [1] : vector<16x16xf32> to vector<16xf32>
    %66 = vector.shape_cast %65 : vector<16xf32> to vector<16x1xf32>
    %67 = tpu.reciprocal %66 {approx = true} : vector<16x1xf32> -> vector<16x1xf32>
    %68 = vector.broadcast %67 : vector<16x1xf32> to vector<16x16xf32>
    %69 = arith.mulf %64, %68 : vector<16x16xf32>
    %cst_38 = arith.constant dense<0.000000e+00> : vector<16x16xf32>
    %70 = tpu.matmul %69, %55, %cst_38 {dimension_numbers = #tpu.dot_dimension_numbers<[1], [0], [0], [1], [0, 0, 1, 1], [], []>} : vector<16x16xf32>, vector<16x16xf32>, vector<16x16xf32> -> vector<16x16xf32>
    %c0_39 = arith.constant 0 : index
    %c16_40 = arith.constant 16 : index
    %71 = vector.load %arg20[%c0_39, %c16_40] : memref<16x32xf32, #tpu.memory_space<vmem>>, vector<16x16xf32>
    tpu.vector_store %arg20[%c0_39, %c16_40], %70 {strides = array<i32>} : memref<16x32xf32, #tpu.memory_space<vmem>>, vector<16x16xf32>,
    %c0_41 = arith.constant 0 : index
    %c0_42 = arith.constant 0 : index
    %72 = vector.load %arg20[%c0_41, %c0_42] : memref<16x32xf32, #tpu.memory_space<vmem>>, vector<16x32xf32>
    %c0_43 = arith.constant 0 : index
    %c0_44 = arith.constant 0 : index
    %c0_45 = arith.constant 0 : index
    %73 = vector.load %arg6[%c0_43, %c0_44, %c0_45] : memref<2x32x32xf32, #tpu.memory_space<vmem>>, vector<1x32x32xf32>
    %74 = vector.shape_cast %73 : vector<1x32x32xf32> to vector<32x32xf32>
    %cst_46 = arith.constant dense<0.000000e+00> : vector<16x32xf32>
    %75 = tpu.matmul %72, %74, %cst_46 {dimension_numbers = #tpu.dot_dimension_numbers<[1], [0], [0], [1], [0, 0, 1, 1], [], []>} : vector<16x32xf32>, vector<32x32xf32>, vector<16x32xf32> -> vector<16x32xf32>
    %c0_47 = arith.constant 0 : index
    %c0_48 = arith.constant 0 : index
    %c0_49 = arith.constant 0 : index
    %76 = vector.load %arg7[%c0_47, %c0_48, %c0_49] : memref<2x1x32xf32, #tpu.memory_space<vmem>>, vector<1x1x32xf32>
    %77 = vector.shape_cast %76 : vector<1x1x32xf32> to vector<1x32xf32>
    %78 = vector.broadcast %77 : vector<1x32xf32> to vector<16x32xf32>
    %79 = arith.addf %75, %78 : vector<16x32xf32>
    %80 = arith.addf %25, %79 : vector<16x32xf32>
    %c0_50 = arith.constant 0 : index
    %c0_51 = arith.constant 0 : index
    %c0_52 = arith.constant 0 : index
    %81 = vector.load %arg8[%c0_50, %c0_51, %c0_52] : memref<2x1x32xf32, #tpu.memory_space<vmem>>, vector<1x1x32xf32>
    %82 = vector.shape_cast %81 : vector<1x1x32xf32> to vector<1x32xf32>
    %c0_53 = arith.constant 0 : index
    %c0_54 = arith.constant 0 : index
    %c0_55 = arith.constant 0 : index
    %83 = vector.load %arg9[%c0_53, %c0_54, %c0_55] : memref<2x1x32xf32, #tpu.memory_space<vmem>>, vector<1x1x32xf32>
    %84 = vector.shape_cast %83 : vector<1x1x32xf32> to vector<1x32xf32>
    %cst_56 = arith.constant dense<0.000000e+00> : vector<16xf32>
    %85 = vector.multi_reduction <add>, %80, %cst_56 [1] : vector<16x32xf32> to vector<16xf32>
    %86 = vector.shape_cast %85 : vector<16xf32> to vector<16x1xf32>
    %cst_57 = arith.constant 3.200000e+01 : f32
    %87 = vector.broadcast %cst_57 : f32 to vector<16x1xf32>
    %88 = arith.divf %86, %87 : vector<16x1xf32>
    %89 = vector.broadcast %88 : vector<16x1xf32> to vector<16x32xf32>
    %90 = arith.subf %80, %89 : vector<16x32xf32>
    %91 = arith.mulf %90, %90 : vector<16x32xf32>
    %cst_58 = arith.constant dense<0.000000e+00> : vector<16xf32>
    %92 = vector.multi_reduction <add>, %91, %cst_58 [1] : vector<16x32xf32> to vector<16xf32>
    %93 = vector.shape_cast %92 : vector<16xf32> to vector<16x1xf32>
    %cst_59 = arith.constant 3.200000e+01 : f32
    %94 = vector.broadcast %cst_59 : f32 to vector<16x1xf32>
    %95 = arith.divf %93, %94 : vector<16x1xf32>
    %96 = vector.broadcast %88 : vector<16x1xf32> to vector<16x32xf32>
    %97 = arith.subf %80, %96 : vector<16x32xf32>
    %cst_60 = arith.constant 9.99999974E-6 : f32
    %98 = vector.broadcast %cst_60 : f32 to vector<16x1xf32>
    %99 = arith.addf %95, %98 : vector<16x1xf32>
    %100 = math.rsqrt %99 : vector<16x1xf32>
    %101 = vector.broadcast %100 : vector<16x1xf32> to vector<16x32xf32>
    %102 = arith.mulf %97, %101 : vector<16x32xf32>
    %103 = vector.broadcast %82 : vector<1x32xf32> to vector<16x32xf32>
    %104 = arith.mulf %102, %103 : vector<16x32xf32>
    %105 = vector.broadcast %84 : vector<1x32xf32> to vector<16x32xf32>
    %106 = arith.addf %104, %105 : vector<16x32xf32>
    %c0_61 = arith.constant 0 : index
    %c0_62 = arith.constant 0 : index
    %c0_63 = arith.constant 0 : index
    %107 = vector.load %arg10[%c0_61, %c0_62, %c0_63] : memref<2x32x64xf32, #tpu.memory_space<vmem>>, vector<1x32x64xf32>
    %108 = vector.shape_cast %107 : vector<1x32x64xf32> to vector<32x64xf32>
    %cst_64 = arith.constant dense<0.000000e+00> : vector<16x64xf32>
    %109 = tpu.matmul %106, %108, %cst_64 {dimension_numbers = #tpu.dot_dimension_numbers<[1], [0], [0], [1], [0, 0, 1, 1], [], []>} : vector<16x32xf32>, vector<32x64xf32>, vector<16x64xf32> -> vector<16x64xf32>
    %c0_65 = arith.constant 0 : index
    %c0_66 = arith.constant 0 : index
    %c0_67 = arith.constant 0 : index
    %110 = vector.load %arg11[%c0_65, %c0_66, %c0_67] : memref<2x1x64xf32, #tpu.memory_space<vmem>>, vector<1x1x64xf32>
    %111 = vector.shape_cast %110 : vector<1x1x64xf32> to vector<1x64xf32>
    %112 = vector.broadcast %111 : vector<1x64xf32> to vector<16x64xf32>
    %113 = arith.addf %109, %112 : vector<16x64xf32>
    %cst_68 = arith.constant 5.000000e-01 : f32
    %114 = vector.broadcast %cst_68 : f32 to vector<16x64xf32>
    %115 = arith.mulf %114, %113 : vector<16x64xf32>
    %cst_69 = arith.constant 4.471500e-02 : f32
    %116 = vector.broadcast %cst_69 : f32 to vector<16x64xf32>
    %117 = arith.mulf %116, %113 : vector<16x64xf32>
    %118 = arith.mulf %117, %113 : vector<16x64xf32>
    %119 = arith.mulf %118, %113 : vector<16x64xf32>
    %120 = arith.addf %113, %119 : vector<16x64xf32>
    %cst_70 = arith.constant 0.797884583 : f32
    %121 = vector.broadcast %cst_70 : f32 to vector<16x64xf32>
    %122 = arith.mulf %121, %120 : vector<16x64xf32>
    %123 = math.tanh %122 : vector<16x64xf32>
    %cst_71 = arith.constant 1.000000e+00 : f32
    %124 = vector.broadcast %cst_71 : f32 to vector<16x64xf32>
    %125 = arith.addf %124, %123 : vector<16x64xf32>
    %126 = arith.mulf %115, %125 : vector<16x64xf32>
    %c0_72 = arith.constant 0 : index
    %c0_73 = arith.constant 0 : index
    %c0_74 = arith.constant 0 : index
    %127 = vector.load %arg12[%c0_72, %c0_73, %c0_74] : memref<2x64x32xf32, #tpu.memory_space<vmem>>, vector<1x64x32xf32>
    %128 = vector.shape_cast %127 : vector<1x64x32xf32> to vector<64x32xf32>
    %cst_75 = arith.constant dense<0.000000e+00> : vector<16x32xf32>
    %129 = tpu.matmul %126, %128, %cst_75 {dimension_numbers = #tpu.dot_dimension_numbers<[1], [0], [0], [1], [0, 0, 1, 1], [], []>} : vector<16x64xf32>, vector<64x32xf32>, vector<16x32xf32> -> vector<16x32xf32>
    %c0_76 = arith.constant 0 : index
    %c0_77 = arith.constant 0 : index
    %c0_78 = arith.constant 0 : index
    %130 = vector.load %arg13[%c0_76, %c0_77, %c0_78] : memref<2x1x32xf32, #tpu.memory_space<vmem>>, vector<1x1x32xf32>
    %131 = vector.shape_cast %130 : vector<1x1x32xf32> to vector<1x32xf32>
    %132 = vector.broadcast %131 : vector<1x32xf32> to vector<16x32xf32>
    %133 = arith.addf %129, %132 : vector<16x32xf32>
    %134 = arith.addf %106, %133 : vector<16x32xf32>
    %c0_79 = arith.constant 0 : index
    %c0_80 = arith.constant 0 : index
    %c0_81 = arith.constant 0 : index
    %135 = vector.load %arg14[%c0_79, %c0_80, %c0_81] : memref<2x1x32xf32, #tpu.memory_space<vmem>>, vector<1x1x32xf32>
    %136 = vector.shape_cast %135 : vector<1x1x32xf32> to vector<1x32xf32>
    %c0_82 = arith.constant 0 : index
    %c0_83 = arith.constant 0 : index
    %c0_84 = arith.constant 0 : index
    %137 = vector.load %arg15[%c0_82, %c0_83, %c0_84] : memref<2x1x32xf32, #tpu.memory_space<vmem>>, vector<1x1x32xf32>
    %138 = vector.shape_cast %137 : vector<1x1x32xf32> to vector<1x32xf32>
    %cst_85 = arith.constant dense<0.000000e+00> : vector<16xf32>
    %139 = vector.multi_reduction <add>, %134, %cst_85 [1] : vector<16x32xf32> to vector<16xf32>
    %140 = vector.shape_cast %139 : vector<16xf32> to vector<16x1xf32>
    %cst_86 = arith.constant 3.200000e+01 : f32
    %141 = vector.broadcast %cst_86 : f32 to vector<16x1xf32>
    %142 = arith.divf %140, %141 : vector<16x1xf32>
    %143 = vector.broadcast %142 : vector<16x1xf32> to vector<16x32xf32>
    %144 = arith.subf %134, %143 : vector<16x32xf32>
    %145 = arith.mulf %144, %144 : vector<16x32xf32>
    %cst_87 = arith.constant dense<0.000000e+00> : vector<16xf32>
    %146 = vector.multi_reduction <add>, %145, %cst_87 [1] : vector<16x32xf32> to vector<16xf32>
    %147 = vector.shape_cast %146 : vector<16xf32> to vector<16x1xf32>
    %cst_88 = arith.constant 3.200000e+01 : f32
    %148 = vector.broadcast %cst_88 : f32 to vector<16x1xf32>
    %149 = arith.divf %147, %148 : vector<16x1xf32>
    %150 = vector.broadcast %142 : vector<16x1xf32> to vector<16x32xf32>
    %151 = arith.subf %134, %150 : vector<16x32xf32>
    %cst_89 = arith.constant 9.99999974E-6 : f32
    %152 = vector.broadcast %cst_89 : f32 to vector<16x1xf32>
    %153 = arith.addf %149, %152 : vector<16x1xf32>
    %154 = math.rsqrt %153 : vector<16x1xf32>
    %155 = vector.broadcast %154 : vector<16x1xf32> to vector<16x32xf32>
    %156 = arith.mulf %151, %155 : vector<16x32xf32>
    %157 = vector.broadcast %136 : vector<1x32xf32> to vector<16x32xf32>
    %158 = arith.mulf %156, %157 : vector<16x32xf32>
    %159 = vector.broadcast %138 : vector<1x32xf32> to vector<16x32xf32>
    %160 = arith.addf %158, %159 : vector<16x32xf32>
    %c1 = arith.constant 1 : index
    %c0_90 = arith.constant 0 : index
    %c0_91 = arith.constant 0 : index
    %161 = vector.load %arg4[%c1, %c0_90, %c0_91] : memref<2x32x96xf32, #tpu.memory_space<vmem>>, vector<1x32x96xf32>
    %162 = vector.shape_cast %161 : vector<1x32x96xf32> to vector<32x96xf32>
    %cst_92 = arith.constant dense<0.000000e+00> : vector<16x96xf32>
    %163 = tpu.matmul %160, %162, %cst_92 {dimension_numbers = #tpu.dot_dimension_numbers<[1], [0], [0], [1], [0, 0, 1, 1], [], []>} : vector<16x32xf32>, vector<32x96xf32>, vector<16x96xf32> -> vector<16x96xf32>
    %c1_93 = arith.constant 1 : index
    %c0_94 = arith.constant 0 : index
    %c0_95 = arith.constant 0 : index
    %164 = vector.load %arg5[%c1_93, %c0_94, %c0_95] : memref<2x1x96xf32, #tpu.memory_space<vmem>>, vector<1x1x96xf32>
    %165 = vector.shape_cast %164 : vector<1x1x96xf32> to vector<1x96xf32>
    %166 = vector.broadcast %165 : vector<1x96xf32> to vector<16x96xf32>
    %167 = arith.addf %163, %166 : vector<16x96xf32>
    %c0_96 = arith.constant 0 : index
    %c0_97 = arith.constant 0 : index
    %168 = vector.load %arg19[%c0_96, %c0_97] : memref<16x96xf32, #tpu.memory_space<vmem>>, vector<16x96xf32>
    tpu.vector_store %arg19[%c0_96, %c0_97], %167 {strides = array<i32>} : memref<16x96xf32, #tpu.memory_space<vmem>>, vector<16x96xf32>,
    %c0_98 = arith.constant 0 : index
    %c0_99 = arith.constant 0 : index
    %169 = vector.load %arg19[%c0_98, %c0_99] : memref<16x96xf32, #tpu.memory_space<vmem>>, vector<16x16xf32>
    %c0_100 = arith.constant 0 : index
    %c32_101 = arith.constant 32 : index
    %170 = vector.load %arg19[%c0_100, %c32_101] : memref<16x96xf32, #tpu.memory_space<vmem>>, vector<16x16xf32>
    %c0_102 = arith.constant 0 : index
    %c64_103 = arith.constant 64 : index
    %171 = vector.load %arg19[%c0_102, %c64_103] : memref<16x96xf32, #tpu.memory_space<vmem>>, vector<16x16xf32>
    "tpu.trace_start"() <{level = 10 : i32, message = "qd,kd->qk"}> : () -> ()
    %cst_104 = arith.constant dense<0.000000e+00> : vector<16x16xf32>
    %172 = tpu.matmul %169, %170, %cst_104 {dimension_numbers = #tpu.dot_dimension_numbers<[1], [1], [0], [0], [0, 0, 1, 0], [], []>} : vector<16x16xf32>, vector<16x16xf32>, vector<16x16xf32> -> vector<16x16xf32>
    "tpu.trace_stop"() : () -> ()
    %cst_105 = arith.constant 2.500000e-01 : f32
    %173 = vector.broadcast %cst_105 : f32 to vector<16x16xf32>
    %174 = arith.mulf %172, %173 : vector<16x16xf32>
    %175 = arith.addf %174, %0 : vector<16x16xf32>
    %cst_106 = arith.constant dense<0xFF800000> : vector<16xf32>
    %176 = vector.multi_reduction <maximumf>, %175, %cst_106 [1] : vector<16x16xf32> to vector<16xf32>
    %177 = vector.shape_cast %176 : vector<16xf32> to vector<16x1xf32>
    %178 = vector.broadcast %177 : vector<16x1xf32> to vector<16x16xf32>
    %179 = arith.subf %175, %178 : vector<16x16xf32>
    %180 = math.exp %179 : vector<16x16xf32>
    %cst_107 = arith.constant dense<0.000000e+00> : vector<16xf32>
    %181 = vector.multi_reduction <add>, %180, %cst_107 [1] : vector<16x16xf32> to vector<16xf32>
    %182 = vector.shape_cast %181 : vector<16xf32> to vector<16x1xf32>
    %183 = tpu.reciprocal %182 {approx = true} : vector<16x1xf32> -> vector<16x1xf32>
    %184 = vector.broadcast %183 : vector<16x1xf32> to vector<16x16xf32>
    %185 = arith.mulf %180, %184 : vector<16x16xf32>
    %cst_108 = arith.constant dense<0.000000e+00> : vector<16x16xf32>
    %186 = tpu.matmul %185, %171, %cst_108 {dimension_numbers = #tpu.dot_dimension_numbers<[1], [0], [0], [1], [0, 0, 1, 1], [], []>} : vector<16x16xf32>, vector<16x16xf32>, vector<16x16xf32> -> vector<16x16xf32>
    %c0_109 = arith.constant 0 : index
    %c0_110 = arith.constant 0 : index
    %187 = vector.load %arg20[%c0_109, %c0_110] : memref<16x32xf32, #tpu.memory_space<vmem>>, vector<16x16xf32>
    tpu.vector_store %arg20[%c0_109, %c0_110], %186 {strides = array<i32>} : memref<16x32xf32, #tpu.memory_space<vmem>>, vector<16x16xf32>,
    %c0_111 = arith.constant 0 : index
    %c16_112 = arith.constant 16 : index
    %188 = vector.load %arg19[%c0_111, %c16_112] : memref<16x96xf32, #tpu.memory_space<vmem>>, vector<16x16xf32>
    %c0_113 = arith.constant 0 : index
    %c48_114 = arith.constant 48 : index
    %189 = vector.load %arg19[%c0_113, %c48_114] : memref<16x96xf32, #tpu.memory_space<vmem>>, vector<16x16xf32>
    %c0_115 = arith.constant 0 : index
    %c80_116 = arith.constant 80 : index
    %190 = vector.load %arg19[%c0_115, %c80_116] : memref<16x96xf32, #tpu.memory_space<vmem>>, vector<16x16xf32>
    "tpu.trace_start"() <{level = 10 : i32, message = "qd,kd->qk"}> : () -> ()
    %cst_117 = arith.constant dense<0.000000e+00> : vector<16x16xf32>
    %191 = tpu.matmul %188, %189, %cst_117 {dimension_numbers = #tpu.dot_dimension_numbers<[1], [1], [0], [0], [0, 0, 1, 0], [], []>} : vector<16x16xf32>, vector<16x16xf32>, vector<16x16xf32> -> vector<16x16xf32>
    "tpu.trace_stop"() : () -> ()
    %cst_118 = arith.constant 2.500000e-01 : f32
    %192 = vector.broadcast %cst_118 : f32 to vector<16x16xf32>
    %193 = arith.mulf %191, %192 : vector<16x16xf32>
    %194 = arith.addf %193, %0 : vector<16x16xf32>
    %cst_119 = arith.constant dense<0xFF800000> : vector<16xf32>
    %195 = vector.multi_reduction <maximumf>, %194, %cst_119 [1] : vector<16x16xf32> to vector<16xf32>
    %196 = vector.shape_cast %195 : vector<16xf32> to vector<16x1xf32>
    %197 = vector.broadcast %196 : vector<16x1xf32> to vector<16x16xf32>
    %198 = arith.subf %194, %197 : vector<16x16xf32>
    %199 = math.exp %198 : vector<16x16xf32>
    %cst_120 = arith.constant dense<0.000000e+00> : vector<16xf32>
    %200 = vector.multi_reduction <add>, %199, %cst_120 [1] : vector<16x16xf32> to vector<16xf32>
    %201 = vector.shape_cast %200 : vector<16xf32> to vector<16x1xf32>
    %202 = tpu.reciprocal %201 {approx = true} : vector<16x1xf32> -> vector<16x1xf32>
    %203 = vector.broadcast %202 : vector<16x1xf32> to vector<16x16xf32>
    %204 = arith.mulf %199, %203 : vector<16x16xf32>
    %cst_121 = arith.constant dense<0.000000e+00> : vector<16x16xf32>
    %205 = tpu.matmul %204, %190, %cst_121 {dimension_numbers = #tpu.dot_dimension_numbers<[1], [0], [0], [1], [0, 0, 1, 1], [], []>} : vector<16x16xf32>, vector<16x16xf32>, vector<16x16xf32> -> vector<16x16xf32>
    %c0_122 = arith.constant 0 : index
    %c16_123 = arith.constant 16 : index
    %206 = vector.load %arg20[%c0_122, %c16_123] : memref<16x32xf32, #tpu.memory_space<vmem>>, vector<16x16xf32>
    tpu.vector_store %arg20[%c0_122, %c16_123], %205 {strides = array<i32>} : memref<16x32xf32, #tpu.memory_space<vmem>>, vector<16x16xf32>,
    %c0_124 = arith.constant 0 : index
    %c0_125 = arith.constant 0 : index
    %207 = vector.load %arg20[%c0_124, %c0_125] : memref<16x32xf32, #tpu.memory_space<vmem>>, vector<16x32xf32>
    %c1_126 = arith.constant 1 : index
    %c0_127 = arith.constant 0 : index
    %c0_128 = arith.constant 0 : index
    %208 = vector.load %arg6[%c1_126, %c0_127, %c0_128] : memref<2x32x32xf32, #tpu.memory_space<vmem>>, vector<1x32x32xf32>
    %209 = vector.shape_cast %208 : vector<1x32x32xf32> to vector<32x32xf32>
    %cst_129 = arith.constant dense<0.000000e+00> : vector<16x32xf32>
    %210 = tpu.matmul %207, %209, %cst_129 {dimension_numbers = #tpu.dot_dimension_numbers<[1], [0], [0], [1], [0, 0, 1, 1], [], []>} : vector<16x32xf32>, vector<32x32xf32>, vector<16x32xf32> -> vector<16x32xf32>
    %c1_130 = arith.constant 1 : index
    %c0_131 = arith.constant 0 : index
    %c0_132 = arith.constant 0 : index
    %211 = vector.load %arg7[%c1_130, %c0_131, %c0_132] : memref<2x1x32xf32, #tpu.memory_space<vmem>>, vector<1x1x32xf32>
    %212 = vector.shape_cast %211 : vector<1x1x32xf32> to vector<1x32xf32>
    %213 = vector.broadcast %212 : vector<1x32xf32> to vector<16x32xf32>
    %214 = arith.addf %210, %213 : vector<16x32xf32>
    %215 = arith.addf %160, %214 : vector<16x32xf32>
    %c1_133 = arith.constant 1 : index
    %c0_134 = arith.constant 0 : index
    %c0_135 = arith.constant 0 : index
    %216 = vector.load %arg8[%c1_133, %c0_134, %c0_135] : memref<2x1x32xf32, #tpu.memory_space<vmem>>, vector<1x1x32xf32>
    %217 = vector.shape_cast %216 : vector<1x1x32xf32> to vector<1x32xf32>
    %c1_136 = arith.constant 1 : index
    %c0_137 = arith.constant 0 : index
    %c0_138 = arith.constant 0 : index
    %218 = vector.load %arg9[%c1_136, %c0_137, %c0_138] : memref<2x1x32xf32, #tpu.memory_space<vmem>>, vector<1x1x32xf32>
    %219 = vector.shape_cast %218 : vector<1x1x32xf32> to vector<1x32xf32>
    %cst_139 = arith.constant dense<0.000000e+00> : vector<16xf32>
    %220 = vector.multi_reduction <add>, %215, %cst_139 [1] : vector<16x32xf32> to vector<16xf32>
    %221 = vector.shape_cast %220 : vector<16xf32> to vector<16x1xf32>
    %cst_140 = arith.constant 3.200000e+01 : f32
    %222 = vector.broadcast %cst_140 : f32 to vector<16x1xf32>
    %223 = arith.divf %221, %222 : vector<16x1xf32>
    %224 = vector.broadcast %223 : vector<16x1xf32> to vector<16x32xf32>
    %225 = arith.subf %215, %224 : vector<16x32xf32>
    %226 = arith.mulf %225, %225 : vector<16x32xf32>
    %cst_141 = arith.constant dense<0.000000e+00> : vector<16xf32>
    %227 = vector.multi_reduction <add>, %226, %cst_141 [1] : vector<16x32xf32> to vector<16xf32>
    %228 = vector.shape_cast %227 : vector<16xf32> to vector<16x1xf32>
    %cst_142 = arith.constant 3.200000e+01 : f32
    %229 = vector.broadcast %cst_142 : f32 to vector<16x1xf32>
    %230 = arith.divf %228, %229 : vector<16x1xf32>
    %231 = vector.broadcast %223 : vector<16x1xf32> to vector<16x32xf32>
    %232 = arith.subf %215, %231 : vector<16x32xf32>
    %cst_143 = arith.constant 9.99999974E-6 : f32
    %233 = vector.broadcast %cst_143 : f32 to vector<16x1xf32>
    %234 = arith.addf %230, %233 : vector<16x1xf32>
    %235 = math.rsqrt %234 : vector<16x1xf32>
    %236 = vector.broadcast %235 : vector<16x1xf32> to vector<16x32xf32>
    %237 = arith.mulf %232, %236 : vector<16x32xf32>
    %238 = vector.broadcast %217 : vector<1x32xf32> to vector<16x32xf32>
    %239 = arith.mulf %237, %238 : vector<16x32xf32>
    %240 = vector.broadcast %219 : vector<1x32xf32> to vector<16x32xf32>
    %241 = arith.addf %239, %240 : vector<16x32xf32>
    %c1_144 = arith.constant 1 : index
    %c0_145 = arith.constant 0 : index
    %c0_146 = arith.constant 0 : index
    %242 = vector.load %arg10[%c1_144, %c0_145, %c0_146] : memref<2x32x64xf32, #tpu.memory_space<vmem>>, vector<1x32x64xf32>
    %243 = vector.shape_cast %242 : vector<1x32x64xf32> to vector<32x64xf32>
    %cst_147 = arith.constant dense<0.000000e+00> : vector<16x64xf32>
    %244 = tpu.matmul %241, %243, %cst_147 {dimension_numbers = #tpu.dot_dimension_numbers<[1], [0], [0], [1], [0, 0, 1, 1], [], []>} : vector<16x32xf32>, vector<32x64xf32>, vector<16x64xf32> -> vector<16x64xf32>
    %c1_148 = arith.constant 1 : index
    %c0_149 = arith.constant 0 : index
    %c0_150 = arith.constant 0 : index
    %245 = vector.load %arg11[%c1_148, %c0_149, %c0_150] : memref<2x1x64xf32, #tpu.memory_space<vmem>>, vector<1x1x64xf32>
    %246 = vector.shape_cast %245 : vector<1x1x64xf32> to vector<1x64xf32>
    %247 = vector.broadcast %246 : vector<1x64xf32> to vector<16x64xf32>
    %248 = arith.addf %244, %247 : vector<16x64xf32>
    %cst_151 = arith.constant 5.000000e-01 : f32
    %249 = vector.broadcast %cst_151 : f32 to vector<16x64xf32>
    %250 = arith.mulf %249, %248 : vector<16x64xf32>
    %cst_152 = arith.constant 4.471500e-02 : f32
    %251 = vector.broadcast %cst_152 : f32 to vector<16x64xf32>
    %252 = arith.mulf %251, %248 : vector<16x64xf32>
    %253 = arith.mulf %252, %248 : vector<16x64xf32>
    %254 = arith.mulf %253, %248 : vector<16x64xf32>
    %255 = arith.addf %248, %254 : vector<16x64xf32>
    %cst_153 = arith.constant 0.797884583 : f32
    %256 = vector.broadcast %cst_153 : f32 to vector<16x64xf32>
    %257 = arith.mulf %256, %255 : vector<16x64xf32>
    %258 = math.tanh %257 : vector<16x64xf32>
    %cst_154 = arith.constant 1.000000e+00 : f32
    %259 = vector.broadcast %cst_154 : f32 to vector<16x64xf32>
    %260 = arith.addf %259, %258 : vector<16x64xf32>
    %261 = arith.mulf %250, %260 : vector<16x64xf32>
    %c1_155 = arith.constant 1 : index
    %c0_156 = arith.constant 0 : index
    %c0_157 = arith.constant 0 : index
    %262 = vector.load %arg12[%c1_155, %c0_156, %c0_157] : memref<2x64x32xf32, #tpu.memory_space<vmem>>, vector<1x64x32xf32>
    %263 = vector.shape_cast %262 : vector<1x64x32xf32> to vector<64x32xf32>
    %cst_158 = arith.constant dense<0.000000e+00> : vector<16x32xf32>
    %264 = tpu.matmul %261, %263, %cst_158 {dimension_numbers = #tpu.dot_dimension_numbers<[1], [0], [0], [1], [0, 0, 1, 1], [], []>} : vector<16x64xf32>, vector<64x32xf32>, vector<16x32xf32> -> vector<16x32xf32>
    %c1_159 = arith.constant 1 : index
    %c0_160 = arith.constant 0 : index
    %c0_161 = arith.constant 0 : index
    %265 = vector.load %arg13[%c1_159, %c0_160, %c0_161] : memref<2x1x32xf32, #tpu.memory_space<vmem>>, vector<1x1x32xf32>
    %266 = vector.shape_cast %265 : vector<1x1x32xf32> to vector<1x32xf32>
    %267 = vector.broadcast %266 : vector<1x32xf32> to vector<16x32xf32>
    %268 = arith.addf %264, %267 : vector<16x32xf32>
    %269 = arith.addf %241, %268 : vector<16x32xf32>
    %c1_162 = arith.constant 1 : index
    %c0_163 = arith.constant 0 : index
    %c0_164 = arith.constant 0 : index
    %270 = vector.load %arg14[%c1_162, %c0_163, %c0_164] : memref<2x1x32xf32, #tpu.memory_space<vmem>>, vector<1x1x32xf32>
    %271 = vector.shape_cast %270 : vector<1x1x32xf32> to vector<1x32xf32>
    %c1_165 = arith.constant 1 : index
    %c0_166 = arith.constant 0 : index
    %c0_167 = arith.constant 0 : index
    %272 = vector.load %arg15[%c1_165, %c0_166, %c0_167] : memref<2x1x32xf32, #tpu.memory_space<vmem>>, vector<1x1x32xf32>
    %273 = vector.shape_cast %272 : vector<1x1x32xf32> to vector<1x32xf32>
    %cst_168 = arith.constant dense<0.000000e+00> : vector<16xf32>
    %274 = vector.multi_reduction <add>, %269, %cst_168 [1] : vector<16x32xf32> to vector<16xf32>
    %275 = vector.shape_cast %274 : vector<16xf32> to vector<16x1xf32>
    %cst_169 = arith.constant 3.200000e+01 : f32
    %276 = vector.broadcast %cst_169 : f32 to vector<16x1xf32>
    %277 = arith.divf %275, %276 : vector<16x1xf32>
    %278 = vector.broadcast %277 : vector<16x1xf32> to vector<16x32xf32>
    %279 = arith.subf %269, %278 : vector<16x32xf32>
    %280 = arith.mulf %279, %279 : vector<16x32xf32>
    %cst_170 = arith.constant dense<0.000000e+00> : vector<16xf32>
    %281 = vector.multi_reduction <add>, %280, %cst_170 [1] : vector<16x32xf32> to vector<16xf32>
    %282 = vector.shape_cast %281 : vector<16xf32> to vector<16x1xf32>
    %cst_171 = arith.constant 3.200000e+01 : f32
    %283 = vector.broadcast %cst_171 : f32 to vector<16x1xf32>
    %284 = arith.divf %282, %283 : vector<16x1xf32>
    %285 = vector.broadcast %277 : vector<16x1xf32> to vector<16x32xf32>
    %286 = arith.subf %269, %285 : vector<16x32xf32>
    %cst_172 = arith.constant 9.99999974E-6 : f32
    %287 = vector.broadcast %cst_172 : f32 to vector<16x1xf32>
    %288 = arith.addf %284, %287 : vector<16x1xf32>
    %289 = math.rsqrt %288 : vector<16x1xf32>
    %290 = vector.broadcast %289 : vector<16x1xf32> to vector<16x32xf32>
    %291 = arith.mulf %286, %290 : vector<16x32xf32>
    %292 = vector.broadcast %271 : vector<1x32xf32> to vector<16x32xf32>
    %293 = arith.mulf %291, %292 : vector<16x32xf32>
    %294 = vector.broadcast %273 : vector<1x32xf32> to vector<16x32xf32>
    %295 = arith.addf %293, %294 : vector<16x32xf32>
    %c0_173 = arith.constant 0 : index
    %c0_174 = arith.constant 0 : index
    %296 = vector.load %arg16[%c0_173, %c0_174] : memref<32x2xf32, #tpu.memory_space<vmem>>, vector<32x2xf32>
    %cst_175 = arith.constant dense<0.000000e+00> : vector<16x2xf32>
    %297 = tpu.matmul %295, %296, %cst_175 {dimension_numbers = #tpu.dot_dimension_numbers<[1], [0], [0], [1], [0, 0, 1, 1], [], []>} : vector<16x32xf32>, vector<32x2xf32>, vector<16x2xf32> -> vector<16x2xf32>
    %c0_176 = arith.constant 0 : index
    %c0_177 = arith.constant 0 : index
    %298 = vector.load %arg17[%c0_176, %c0_177] : memref<1x2xf32, #tpu.memory_space<vmem>>, vector<1x2xf32>
    %299 = vector.broadcast %298 : vector<1x2xf32> to vector<16x2xf32>
    %300 = arith.addf %297, %299 : vector<16x2xf32>
    %c0_178 = arith.constant 0 : index
    %c0_179 = arith.constant 0 : index
    %301 = vector.load %arg18[%c0_178, %c0_179] : memref<16x2xf32, #tpu.memory_space<vmem>>, vector<16x2xf32>
    tpu.vector_store %arg18[%c0_178, %c0_179], %300 {strides = array<i32>} : memref<16x2xf32, #tpu.memory_space<vmem>>, vector<16x2xf32>,
    return
  }
}

</mosaic_0001>

<llo_original>
// kernel: squeeze.4
$region0: #{squeeze.4}
  %s0 = inlined_call_operand.vmem [shape: f32[6], index: 0, kind: input, shape index: {}]
  %s1 = inlined_call_operand.vmem [shape: f32[2,3], index: 1, kind: output, shape index: {}]
  $region1: #{squeeze.4} parent=0
    #allocation0 [shape = 'u8[4096]{0}', space=vmem, size = 0x1000, scoped, tag = 'scoped mem for output reshape']
    #allocation1 [shape = 'u8[4096]{0}', space=vmem, size = 0x1000, scoped, tag = 'scoped mem for input reshape']
    %s3 = ssub.s32 2, 1
    %v4 = vld [vmem:[%s0] sm:%s3]
    %5 = vst [vmem:[#allocation1] sm:%s3] %v4
    %v6 = vld [vmem:[#allocation1] sm:$0x1]
    %vm7 = vcmask 23552
    %8 = vst.msk [vmem:[#allocation0] sm:$0x1] %vm7, %v6
    %v9 = vld [vmem:[#allocation1] sm:$0x1]
    %10 = vrot.lane.b32.xlu0 %v9, 125
    %v11 = vpop.permute.xlu0 %10
    %vm12 = vcmask 23552
    %s13 = scalar_lea.vmem [#allocation0], 1
    %14 = vst.msk [vmem:[%s13] sm:$0x1] %vm12, %v11
    %s16 = ssub.s32 4, 1
    %v17 = vld [vmem:[#allocation0] sm:%s16]
    %s19 = ssub.s32 4, 1
    %20 = vst [vmem:[%s1] sm:%s19] %v17

// kernel: squeeze.5
$region0: #{squeeze.5}
  %s0 = inlined_call_operand.vmem [shape: f32[16], index: 0, kind: input, shape index: {}]
  %s1 = inlined_call_operand.vmem [shape: f32[2,8], index: 1, kind: output, shape index: {}]
  $region1: #{squeeze.5} parent=0
    #allocation0 [shape = 'u8[4096]{0}', space=vmem, size = 0x1000, scoped, tag = 'scoped mem for output reshape']
    #allocation1 [shape = 'u8[4096]{0}', space=vmem, size = 0x1000, scoped, tag = 'scoped mem for input reshape']
    %s3 = ssub.s32 2, 1
    %v4 = vld [vmem:[%s0] sm:%s3]
    %5 = vst [vmem:[#allocation1] sm:%s3] %v4
    %v6 = vld [vmem:[#allocation1] sm:$0x1]
    %vm7 = vcmask 64512
    %8 = vst.msk [vmem:[#allocation0] sm:$0x1] %vm7, %v6
    %v9 = vld [vmem:[#allocation1] sm:$0x1]
    %10 = vrot.lane.b32.xlu0 %v9, 120
    %v11 = vpop.permute.xlu0 %10
    %vm12 = vcmask 64512
    %s13 = scalar_lea.vmem [#allocation0], 1
    %14 = vst.msk [vmem:[%s13] sm:$0x1] %vm12, %v11
    %s16 = ssub.s32 4, 1
    %v17 = vld [vmem:[#allocation0] sm:%s16]
    %s19 = ssub.s32 4, 1
    %20 = vst [vmem:[%s1] sm:%s19] %v17

// kernel: agent_forward.3
$region0: #{agent_forward.3}
  #allocation0 [shape = 'u32[]', space=smem, size = 0x4, offset = 0x4, fixed_abs, tag = 'smem constant byte address 0x4 - core index']
  #allocation1 [shape = 'u32[72,128]{1,0:T(1,128)}', space=vmem, size = 0x9000, scoped, tag = 'internal scratch']
  #allocation2 [shape = 'f32[16,96]{1,0:T(8,128)}', space=vmem, size = 0x2000, scoped, tag = 'scratch operand']
  #allocation3 [shape = 'f32[16,32]{1,0:T(8,128)}', space=vmem, size = 0x2000, scoped, tag = 'scratch operand']
  %s0 = inlined_call_operand.vmem [shape: f32[16,32], index: 0, kind: input, shape index: {}]
  %s1 = inlined_call_operand.vmem [shape: f32[16,16], index: 1, kind: input, shape index: {}]
  %s2 = inlined_call_operand.vmem [shape: f32[1,32], index: 2, kind: input, shape index: {}]
  %s3 = inlined_call_operand.vmem [shape: f32[1,32], index: 3, kind: input, shape index: {}]
  %s4 = inlined_call_operand.vmem [shape: f32[2,32,96], index: 4, kind: input, shape index: {}]
  %s5 = inlined_call_operand.vmem [shape: f32[2,1,96], index: 5, kind: input, shape index: {}]
  %s6 = inlined_call_operand.vmem [shape: f32[2,32,32], index: 6, kind: input, shape index: {}]
  %s7 = inlined_call_operand.vmem [shape: f32[2,1,32], index: 7, kind: input, shape index: {}]
  %s8 = inlined_call_operand.vmem [shape: f32[2,1,32], index: 8, kind: input, shape index: {}]
  %s9 = inlined_call_operand.vmem [shape: f32[2,1,32], index: 9, kind: input, shape index: {}]
  %s10 = inlined_call_operand.vmem [shape: f32[2,32,64], index: 10, kind: input, shape index: {}]
  %s11 = inlined_call_operand.vmem [shape: f32[2,1,64], index: 11, kind: input, shape index: {}]
  %s12 = inlined_call_operand.vmem [shape: f32[2,64,32], index: 12, kind: input, shape index: {}]
  %s13 = inlined_call_operand.vmem [shape: f32[2,1,32], index: 13, kind: input, shape index: {}]
  %s14 = inlined_call_operand.vmem [shape: f32[2,1,32], index: 14, kind: input, shape index: {}]
  %s15 = inlined_call_operand.vmem [shape: f32[2,1,32], index: 15, kind: input, shape index: {}]
  %s16 = inlined_call_operand.vmem [shape: f32[32,2], index: 16, kind: input, shape index: {}]
  %s17 = inlined_call_operand.vmem [shape: f32[1,2], index: 17, kind: input, shape index: {}]
  %s18 = inlined_call_operand.vmem [shape: f32[16,2], index: 18, kind: output, shape index: {}]
  %s19 = sld [smem:[#allocation0]]
  $region82: #{agent_forward.3} parent=0
    _
  %s21 = ssub.s32 1, %s19
  %s22 = scalar_select 0, %s21, %s19
  // Predicated region
  $region2: #{agent_forward.3} parent=0 // pred_check
    _
  $region3: #{agent_forward.3} parent=0 // pred_check_branch
    %24 = sbr.rel (0) target = $region5
  $region4: #{agent_forward.3} parent=0 // pred_region
    _
  $region5: #{agent_forward.3} parent=0 // pred_fallthru
    _
  // Predicated region
  $region6: #{agent_forward.3} parent=0 // pred_check
    _
  $region7: #{agent_forward.3} parent=0 // pred_check_branch
    %26 = sbr.rel (0) target = $region9
  $region8: #{agent_forward.3} parent=0 // pred_region
    _
  $region9: #{agent_forward.3} parent=0 // pred_fallthru
    _
  // Predicated region
  $region10: #{agent_forward.3} parent=0 // pred_check
    _
  $region11: #{agent_forward.3} parent=0 // pred_check_branch
    %28 = sbr.rel (0) target = $region13
  $region12: #{agent_forward.3} parent=0 // pred_region
    _
  $region13: #{agent_forward.3} parent=0 // pred_fallthru
    _
  // Predicated region
  $region14: #{agent_forward.3} parent=0 // pred_check
    _
  $region15: #{agent_forward.3} parent=0 // pred_check_branch
    %30 = sbr.rel (0) target = $region17
  $region16: #{agent_forward.3} parent=0 // pred_region
    _
  $region17: #{agent_forward.3} parent=0 // pred_fallthru
    _
  // Predicated region
  $region18: #{agent_forward.3} parent=0 // pred_check
    _
  $region19: #{agent_forward.3} parent=0 // pred_check_branch
    %32 = sbr.rel (0) target = $region21
  $region20: #{agent_forward.3} parent=0 // pred_region
    _
  $region21: #{agent_forward.3} parent=0 // pred_fallthru
    _
  // Predicated region
  $region22: #{agent_forward.3} parent=0 // pred_check
    _
  $region23: #{agent_forward.3} parent=0 // pred_check_branch
    %34 = sbr.rel (0) target = $region25
  $region24: #{agent_forward.3} parent=0 // pred_region
    _
  $region25: #{agent_forward.3} parent=0 // pred_fallthru
    _
  // Predicated region
  $region26: #{agent_forward.3} parent=0 // pred_check
    _
  $region27: #{agent_forward.3} parent=0 // pred_check_branch
    %36 = sbr.rel (0) target = $region29
  $region28: #{agent_forward.3} parent=0 // pred_region
    _
  $region29: #{agent_forward.3} parent=0 // pred_fallthru
    _
  // Predicated region
  $region30: #{agent_forward.3} parent=0 // pred_check
    _
  $region31: #{agent_forward.3} parent=0 // pred_check_branch
    %38 = sbr.rel (0) target = $region33
  $region32: #{agent_forward.3} parent=0 // pred_region
    _
  $region33: #{agent_forward.3} parent=0 // pred_fallthru
    _
  // Predicated region
  $region34: #{agent_forward.3} parent=0 // pred_check
    _
  $region35: #{agent_forward.3} parent=0 // pred_check_branch
    %40 = sbr.rel (0) target = $region37
  $region36: #{agent_forward.3} parent=0 // pred_region
    _
  $region37: #{agent_forward.3} parent=0 // pred_fallthru
    _
  // Predicated region
  $region38: #{agent_forward.3} parent=0 // pred_check
    _
  $region39: #{agent_forward.3} parent=0 // pred_check_branch
    %42 = sbr.rel (0) target = $region41
  $region40: #{agent_forward.3} parent=0 // pred_region
    _
  $region41: #{agent_forward.3} parent=0 // pred_fallthru
    _
  // Predicated region
  $region42: #{agent_forward.3} parent=0 // pred_check
    _
  $region43: #{agent_forward.3} parent=0 // pred_check_branch
    %44 = sbr.rel (0) target = $region45
  $region44: #{agent_forward.3} parent=0 // pred_region
    _
  $region45: #{agent_forward.3} parent=0 // pred_fallthru
    _
  // Predicated region
  $region46: #{agent_forward.3} parent=0 // pred_check
    _
  $region47: #{agent_forward.3} parent=0 // pred_check_branch
    %46 = sbr.rel (0) target = $region49
  $region48: #{agent_forward.3} parent=0 // pred_region
    _
  $region49: #{agent_forward.3} parent=0 // pred_fallthru
    _
  // Predicated region
  $region50: #{agent_forward.3} parent=0 // pred_check
    _
  $region51: #{agent_forward.3} parent=0 // pred_check_branch
    %48 = sbr.rel (0) target = $region53
  $region52: #{agent_forward.3} parent=0 // pred_region
    _
  $region53: #{agent_forward.3} parent=0 // pred_fallthru
    _
  // Predicated region
  $region54: #{agent_forward.3} parent=0 // pred_check
    _
  $region55: #{agent_forward.3} parent=0 // pred_check_branch
    %50 = sbr.rel (0) target = $region57
  $region56: #{agent_forward.3} parent=0 // pred_region
    _
  $region57: #{agent_forward.3} parent=0 // pred_fallthru
    _
  // Predicated region
  $region58: #{agent_forward.3} parent=0 // pred_check
    _
  $region59: #{agent_forward.3} parent=0 // pred_check_branch
    %52 = sbr.rel (0) target = $region61
  $region60: #{agent_forward.3} parent=0 // pred_region
    _
  $region61: #{agent_forward.3} parent=0 // pred_fallthru
    _
  // Predicated region
  $region62: #{agent_forward.3} parent=0 // pred_check
    _
  $region63: #{agent_forward.3} parent=0 // pred_check_branch
    %54 = sbr.rel (0) target = $region65
  $region64: #{agent_forward.3} parent=0 // pred_region
    _
  $region65: #{agent_forward.3} parent=0 // pred_fallthru
    _
  // Predicated region
  $region66: #{agent_forward.3} parent=0 // pred_check
    _
  $region67: #{agent_forward.3} parent=0 // pred_check_branch
    %56 = sbr.rel (0) target = $region69
  $region68: #{agent_forward.3} parent=0 // pred_region
    _
  $region69: #{agent_forward.3} parent=0 // pred_fallthru
    _
  // Predicated region
  $region70: #{agent_forward.3} parent=0 // pred_check
    _
  $region71: #{agent_forward.3} parent=0 // pred_check_branch
    %58 = sbr.rel (0) target = $region73
  $region72: #{agent_forward.3} parent=0 // pred_region
    _
  $region73: #{agent_forward.3} parent=0 // pred_fallthru
    _
  %v59 = vld [vmem:[%s1] sm:$0xff]
  %v60 = vld [vmem:[%s1 + $0x8] sm:$0xff]
  %v61 = vld [vmem:[%s0] sm:$0xff]
  %v62 = vld [vmem:[%s0 + $0x8] sm:$0xff]
  %v63 = vld [vmem:[%s2] sm:$0x1]
  %v64 = vld [vmem:[%s3] sm:$0x1]
  %vm65 = vcmask 261120
  %v66 = vsel %vm65, %v61, 0.0
  %67 = vadd.xlane.f32.xlu0 %v66
  %v68 = vpop.xlane.xlu0 %67
  %v69 = vsel %vm65, %v62, 0.0
  %70 = vadd.xlane.f32.xlu0 %v69
  %v71 = vpop.xlane.xlu0 %70
  %v72 = vrcp.pop 32.0
  %v73 = vmul.f32 32.0, %v72
  %v74 = vsub.f32 1.0, %v73
  %v75 = vmul.f32 %v72, %v74
  %v76 = vadd.f32 %v72, %v75
  %vm77 = vweird.f32 %v72
  %v78 = vsel %vm77, %v72, %v76
  %v79 = vmul.f32 %v68, %v78
  %v80 = vmul.f32 %v71, %v78
  %v81 = vsub.f32 %v61, %v79
  %v82 = vsub.f32 %v62, %v80
  %v83 = vmul.f32 %v81, %v81
  %v84 = vmul.f32 %v82, %v82
  %v85 = vsel %vm65, %v83, 0.0
  %86 = vadd.xlane.f32.xlu0 %v85
  %v87 = vpop.xlane.xlu0 %86
  %v88 = vsel %vm65, %v84, 0.0
  %89 = vadd.xlane.f32.xlu0 %v88
  %v90 = vpop.xlane.xlu0 %89
  %v91 = vmul.f32 %v87, %v78
  %v92 = vmul.f32 %v90, %v78
  %v93 = vadd.f32 %v91, 1e-05
  %v94 = vadd.f32 %v92, 1e-05
  %v95 = vrsqrt.pop %v93
  %v96 = vmul.f32 %v95, %v93
  %v97 = vmul.f32 %v96, %v95
  %v98 = vmul.f32 0.5, %v97
  %v99 = vsub.f32 1.5, %v98
  %v100 = vmul.f32 %v95, %v99
  %vm101 = vweird.f32 %v93
  %vm102 = vweird.f32 %v95
  %vm103 = vmor %vm101, %vm102
  %v104 = vsel %vm103, %v95, %v100
  %v105 = vrsqrt.pop %v94
  %v106 = vmul.f32 %v105, %v94
  %v107 = vmul.f32 %v106, %v105
  %v108 = vmul.f32 0.5, %v107
  %v109 = vsub.f32 1.5, %v108
  %v110 = vmul.f32 %v105, %v109
  %vm111 = vweird.f32 %v94
  %vm112 = vweird.f32 %v105
  %vm113 = vmor %vm111, %vm112
  %v114 = vsel %vm113, %v105, %v110
  %v115 = vmul.f32 %v81, %v104
  %v116 = vmul.f32 %v82, %v114
  %v118 = vperm.slane %v63, 0
  %v120 = vmul.f32 %v115, %v118
  %v121 = vmul.f32 %v116, %v118
  %v123 = vperm.slane %v64, 0
  %v125 = vadd.f32 %v120, %v123
  %v126 = vadd.f32 %v121, %v123
  %v127 = vld [vmem:[%s4] sm:$0xff]
  %v128 = vld [vmem:[%s4 + $0x8] sm:$0xff]
  %v129 = vld [vmem:[%s4 + $0x10] sm:$0xff]
  %v130 = vld [vmem:[%s4 + $0x18] sm:$0xff]
  %v131 = vld [vmem:[%s5] sm:$0x1]
  %v133 = vperm.slane %v131, 0
  %v136 = vsel %vm65, %v125, 0
  %v139 = vsel %vm65, %v126, 0
  %141 = vmatpush.msra.mxu0 0.0
  %142 = vmatpush.msra.mxu0 0.0
  %143 = vmatpush.msra.mxu0 0.0
  %144 = vmatpush.msra.mxu0 0.0
  %145 = vmatpush.msra.mxu0 0.0
  %146 = vmatpush.msra.mxu0 0.0
  %147 = vmatpush.msra.mxu0 0.0
  %148 = vmatpush.msra.mxu0 0.0
  %149 = vmatpush.msra.mxu0 0.0
  %150 = vmatpush.msra.mxu0 0.0
  %151 = vmatpush.msra.mxu0 0.0
  %152 = vmatpush.msra.mxu0 0.0
  %153 = vmatpush.msra.mxu0 %v130
  %154 = vmatpush.msra.mxu0 %v129
  %155 = vmatpush.msra.mxu0 %v128
  %156 = vmatpush.msra.mxu0 %v127
  %157 = vmatmul.f32.gmra.mxu0 %v136
  %v158 = vpop.f32.mrf.mxu0
  %v159 = vadd.f32 %v133, %v158
  %160 = vmatmul.f32.gmra.mxu0 %v139
  %v161 = vpop.f32.mrf.mxu0
  %v162 = vadd.f32 %v133, %v161
  %163 = vdwg.mxu0
  %vm164 = vcmask 785408
  %165 = vst.msk [vmem:[#allocation2] sm:$0xff] %vm164, %v159
  %166 = vst.msk [vmem:[#allocation2 + $0x8] sm:$0xff] %vm164, %v162
  %v167 = vld [vmem:[#allocation2] sm:$0xff]
  %v168 = vld [vmem:[#allocation2 + $0x8] sm:$0xff]
  %171 = vrot.lane.b32.xlu0 %v167, 96
  %v172 = vpop.permute.xlu0 %171
  %173 = vrot.lane.b32.xlu0 %v168, 96
  %v174 = vpop.permute.xlu0 %173
  %vm175 = vcmask 130048
  %v176 = vsel %vm175, %v167, 0
  %v178 = vsel %vm175, %v168, 0
  %v180 = vsel %vm175, %v172, 0
  %v182 = vsel %vm175, %v174, 0
  %184 = vmatpush.xpose.msra.mxu0 0.0
  %185 = vmatpush.xpose.msra.mxu0 0.0
  %186 = vmatpush.xpose.msra.mxu0 0.0
  %187 = vmatpush.xpose.msra.mxu0 0.0
  %188 = vmatpush.xpose.msra.mxu0 0.0
  %189 = vmatpush.xpose.msra.mxu0 0.0
  %190 = vmatpush.xpose.msra.mxu0 0.0
  %191 = vmatpush.xpose.msra.mxu0 0.0
  %192 = vmatpush.xpose.msra.mxu0 0.0
  %193 = vmatpush.xpose.msra.mxu0 0.0
  %194 = vmatpush.xpose.msra.mxu0 0.0
  %195 = vmatpush.xpose.msra.mxu0 0.0
  %196 = vmatpush.xpose.msra.mxu0 0.0
  %197 = vmatpush.xpose.msra.mxu0 0.0
  %198 = vmatpush.xpose.msra.mxu0 %v182
  %199 = vmatpush.xpose.msra.mxu0 %v180
  %200 = vmatmul.f32.gmra.mxu0 %v176
  %v201 = vpop.f32.mrf.mxu0
  %v202 = vadd.f32 0.0, %v201
  %203 = vmatmul.f32.gmra.mxu0 %v178
  %v204 = vpop.f32.mrf.mxu0
  %v205 = vadd.f32 0.0, %v204
  %206 = vdwg.mxu0
  %v207 = vmul.f32 %v202, 0.25
  %v208 = vmul.f32 %v205, 0.25
  %v209 = vadd.f32 %v207, %v59
  %v210 = vadd.f32 %v208, %v60
  %v211 = vsel %vm175, %v209, -inf
  %212 = vmax.xlane.f32.xlu0 %v211
  %v213 = vpop.xlane.xlu0 %212
  %v214 = vsel %vm175, %v210, -inf
  %215 = vmax.xlane.f32.xlu0 %v214
  %v216 = vpop.xlane.xlu0 %215
  %v217 = vsub.f32 %v209, %v213
  %v218 = vsub.f32 %v210, %v216
  %v219 = vmul.f32 %v217, 1.442695
  %v220 = vpow.pop %v219
  %v221 = vmul.f32 %v218, 1.442695
  %v222 = vpow.pop %v221
  %v223 = vsel %vm175, %v220, 0.0
  %224 = vadd.xlane.f32.xlu0 %v223
  %v225 = vpop.xlane.xlu0 %224
  %v226 = vsel %vm175, %v222, 0.0
  %227 = vadd.xlane.f32.xlu0 %v226
  %v228 = vpop.xlane.xlu0 %227
  %v229 = vrcp.pop %v225
  %v230 = vrcp.pop %v228
  %v231 = vmul.f32 %v220, %v229
  %v232 = vmul.f32 %v222, %v230
  %233 = vrot.lane.b32.xlu0 %v167, 64
  %v234 = vpop.permute.xlu0 %233
  %235 = vrot.lane.b32.xlu0 %v168, 64
  %v236 = vpop.permute.xlu0 %235
  %v240 = vsel %vm175, %v231, 0
  %v243 = vsel %vm175, %v232, 0
  %245 = vmatpush.msra.mxu0 0.0
  %246 = vmatpush.msra.mxu0 0.0
  %247 = vmatpush.msra.mxu0 0.0
  %248 = vmatpush.msra.mxu0 0.0
  %249 = vmatpush.msra.mxu0 0.0
  %250 = vmatpush.msra.mxu0 0.0
  %251 = vmatpush.msra.mxu0 0.0
  %252 = vmatpush.msra.mxu0 0.0
  %253 = vmatpush.msra.mxu0 0.0
  %254 = vmatpush.msra.mxu0 0.0
  %255 = vmatpush.msra.mxu0 0.0
  %256 = vmatpush.msra.mxu0 0.0
  %257 = vmatpush.msra.mxu0 0.0
  %258 = vmatpush.msra.mxu0 0.0
  %259 = vmatpush.msra.mxu0 %v236
  %260 = vmatpush.msra.mxu0 %v234
  %261 = vmatmul.f32.gmra.mxu0 %v240
  %v262 = vpop.f32.mrf.mxu0
  %v263 = vadd.f32 0.0, %v262
  %264 = vmatmul.f32.gmra.mxu0 %v243
  %v265 = vpop.f32.mrf.mxu0
  %v266 = vadd.f32 0.0, %v265
  %267 = vdwg.mxu0
  %268 = vst.msk [vmem:[#allocation3] sm:$0xff] %vm175, %v263
  %269 = vst.msk [vmem:[#allocation3 + $0x8] sm:$0xff] %vm175, %v266
  %v270 = vld [vmem:[#allocation2] sm:$0xff]
  %v271 = vld [vmem:[#allocation2 + $0x8] sm:$0xff]
  %274 = vrot.lane.b32.xlu0 %v270, 112
  %v275 = vpop.permute.xlu0 %274
  %276 = vrot.lane.b32.xlu0 %v271, 112
  %v277 = vpop.permute.xlu0 %276
  %278 = vrot.lane.b32.xlu0 %v270, 80
  %v279 = vpop.permute.xlu0 %278
  %280 = vrot.lane.b32.xlu0 %v271, 80
  %v281 = vpop.permute.xlu0 %280
  %v282 = vsel %vm175, %v275, 0
  %v284 = vsel %vm175, %v277, 0
  %v286 = vsel %vm175, %v279, 0
  %v288 = vsel %vm175, %v281, 0
  %290 = vmatpush.xpose.msra.mxu0 0.0
  %291 = vmatpush.xpose.msra.mxu0 0.0
  %292 = vmatpush.xpose.msra.mxu0 0.0
  %293 = vmatpush.xpose.msra.mxu0 0.0
  %294 = vmatpush.xpose.msra.mxu0 0.0
  %295 = vmatpush.xpose.msra.mxu0 0.0
  %296 = vmatpush.xpose.msra.mxu0 0.0
  %297 = vmatpush.xpose.msra.mxu0 0.0
  %298 = vmatpush.xpose.msra.mxu0 0.0
  %299 = vmatpush.xpose.msra.mxu0 0.0
  %300 = vmatpush.xpose.msra.mxu0 0.0
  %301 = vmatpush.xpose.msra.mxu0 0.0
  %302 = vmatpush.xpose.msra.mxu0 0.0
  %303 = vmatpush.xpose.msra.mxu0 0.0
  %304 = vmatpush.xpose.msra.mxu0 %v288
  %305 = vmatpush.xpose.msra.mxu0 %v286
  %306 = vmatmul.f32.gmra.mxu0 %v282
  %v307 = vpop.f32.mrf.mxu0
  %v308 = vadd.f32 0.0, %v307
  %309 = vmatmul.f32.gmra.mxu0 %v284
  %v310 = vpop.f32.mrf.mxu0
  %v311 = vadd.f32 0.0, %v310
  %312 = vdwg.mxu0
  %v313 = vmul.f32 %v308, 0.25
  %v314 = vmul.f32 %v311, 0.25
  %v315 = vadd.f32 %v313, %v59
  %v316 = vadd.f32 %v314, %v60
  %v317 = vsel %vm175, %v315, -inf
  %318 = vmax.xlane.f32.xlu0 %v317
  %v319 = vpop.xlane.xlu0 %318
  %v320 = vsel %vm175, %v316, -inf
  %321 = vmax.xlane.f32.xlu0 %v320
  %v322 = vpop.xlane.xlu0 %321
  %v323 = vsub.f32 %v315, %v319
  %v324 = vsub.f32 %v316, %v322
  %v325 = vmul.f32 %v323, 1.442695
  %v326 = vpow.pop %v325
  %v327 = vmul.f32 %v324, 1.442695
  %v328 = vpow.pop %v327
  %v329 = vsel %vm175, %v326, 0.0
  %330 = vadd.xlane.f32.xlu0 %v329
  %v331 = vpop.xlane.xlu0 %330
  %v332 = vsel %vm175, %v328, 0.0
  %333 = vadd.xlane.f32.xlu0 %v332
  %v334 = vpop.xlane.xlu0 %333
  %v335 = vrcp.pop %v331
  %v336 = vrcp.pop %v334
  %v337 = vmul.f32 %v326, %v335
  %v338 = vmul.f32 %v328, %v336
  %339 = vrot.lane.b32.xlu0 %v270, 48
  %v340 = vpop.permute.xlu0 %339
  %341 = vrot.lane.b32.xlu0 %v271, 48
  %v342 = vpop.permute.xlu0 %341
  %v346 = vsel %vm175, %v337, 0
  %v349 = vsel %vm175, %v338, 0
  %351 = vmatpush.msra.mxu0 0.0
  %352 = vmatpush.msra.mxu0 0.0
  %353 = vmatpush.msra.mxu0 0.0
  %354 = vmatpush.msra.mxu0 0.0
  %355 = vmatpush.msra.mxu0 0.0
  %356 = vmatpush.msra.mxu0 0.0
  %357 = vmatpush.msra.mxu0 0.0
  %358 = vmatpush.msra.mxu0 0.0
  %359 = vmatpush.msra.mxu0 0.0
  %360 = vmatpush.msra.mxu0 0.0
  %361 = vmatpush.msra.mxu0 0.0
  %362 = vmatpush.msra.mxu0 0.0
  %363 = vmatpush.msra.mxu0 0.0
  %364 = vmatpush.msra.mxu0 0.0
  %365 = vmatpush.msra.mxu0 %v342
  %366 = vmatpush.msra.mxu0 %v340
  %367 = vmatmul.f32.gmra.mxu0 %v346
  %v368 = vpop.f32.mrf.mxu0
  %v369 = vadd.f32 0.0, %v368
  %370 = vmatmul.f32.gmra.mxu0 %v349
  %v371 = vpop.f32.mrf.mxu0
  %v372 = vadd.f32 0.0, %v371
  %373 = vdwg.mxu0
  %376 = vrot.lane.b32.xlu0 %v369, 16
  %v377 = vpop.permute.xlu0 %376
  %378 = vrot.lane.b32.xlu0 %v372, 16
  %v379 = vpop.permute.xlu0 %378
  %vm382 = vcmask 261248
  %383 = vst.msk [vmem:[#allocation3] sm:$0xff] %vm382, %v377
  %384 = vst.msk [vmem:[#allocation3 + $0x8] sm:$0xff] %vm382, %v379
  %v385 = vld [vmem:[#allocation3] sm:$0xff]
  %v386 = vld [vmem:[#allocation3 + $0x8] sm:$0xff]
  %v387 = vld [vmem:[%s6] sm:$0xff]
  %v388 = vld [vmem:[%s6 + $0x8] sm:$0xff]
  %v389 = vld [vmem:[%s6 + $0x10] sm:$0xff]
  %v390 = vld [vmem:[%s6 + $0x18] sm:$0xff]
  %v391 = vld [vmem:[%s7] sm:$0x1]
  %v393 = vperm.slane %v391, 0
  %v396 = vsel %vm65, %v385, 0
  %v399 = vsel %vm65, %v386, 0
  %401 = vmatpush.msra.mxu0 0.0
  %402 = vmatpush.msra.mxu0 0.0
  %403 = vmatpush.msra.mxu0 0.0
  %404 = vmatpush.msra.mxu0 0.0
  %405 = vmatpush.msra.mxu0 0.0
  %406 = vmatpush.msra.mxu0 0.0
  %407 = vmatpush.msra.mxu0 0.0
  %408 = vmatpush.msra.mxu0 0.0
  %409 = vmatpush.msra.mxu0 0.0
  %410 = vmatpush.msra.mxu0 0.0
  %411 = vmatpush.msra.mxu0 0.0
  %412 = vmatpush.msra.mxu0 0.0
  %413 = vmatpush.msra.mxu0 %v390
  %414 = vmatpush.msra.mxu0 %v389
  %415 = vmatpush.msra.mxu0 %v388
  %416 = vmatpush.msra.mxu0 %v387
  %417 = vmatmul.f32.gmra.mxu0 %v396
  %v418 = vpop.f32.mrf.mxu0
  %v419 = vadd.f32 %v393, %v418
  %420 = vmatmul.f32.gmra.mxu0 %v399
  %v421 = vpop.f32.mrf.mxu0
  %v422 = vadd.f32 %v393, %v421
  %423 = vdwg.mxu0
  %v424 = vadd.f32 %v125, %v419
  %v425 = vadd.f32 %v126, %v422
  %v426 = vld [vmem:[%s8] sm:$0x1]
  %v427 = vld [vmem:[%s9] sm:$0x1]
  %v428 = vsel %vm65, %v424, 0.0
  %429 = vadd.xlane.f32.xlu0 %v428
  %v430 = vpop.xlane.xlu0 %429
  %v431 = vsel %vm65, %v425, 0.0
  %432 = vadd.xlane.f32.xlu0 %v431
  %v433 = vpop.xlane.xlu0 %432
  %v434 = vmul.f32 %v430, %v78
  %v435 = vmul.f32 %v433, %v78
  %v436 = vsub.f32 %v424, %v434
  %v437 = vsub.f32 %v425, %v435
  %v438 = vmul.f32 %v436, %v436
  %v439 = vmul.f32 %v437, %v437
  %v440 = vsel %vm65, %v438, 0.0
  %441 = vadd.xlane.f32.xlu0 %v440
  %v442 = vpop.xlane.xlu0 %441
  %v443 = vsel %vm65, %v439, 0.0
  %444 = vadd.xlane.f32.xlu0 %v443
  %v445 = vpop.xlane.xlu0 %444
  %v446 = vmul.f32 %v442, %v78
  %v447 = vmul.f32 %v445, %v78
  %v448 = vadd.f32 %v446, 1e-05
  %v449 = vadd.f32 %v447, 1e-05
  %v450 = vrsqrt.pop %v448
  %v451 = vmul.f32 %v450, %v448
  %v452 = vmul.f32 %v451, %v450
  %v453 = vmul.f32 0.5, %v452
  %v454 = vsub.f32 1.5, %v453
  %v455 = vmul.f32 %v450, %v454
  %vm456 = vweird.f32 %v448
  %vm457 = vweird.f32 %v450
  %vm458 = vmor %vm456, %vm457
  %v459 = vsel %vm458, %v450, %v455
  %v460 = vrsqrt.pop %v449
  %v461 = vmul.f32 %v460, %v449
  %v462 = vmul.f32 %v461, %v460
  %v463 = vmul.f32 0.5, %v462
  %v464 = vsub.f32 1.5, %v463
  %v465 = vmul.f32 %v460, %v464
  %vm466 = vweird.f32 %v449
  %vm467 = vweird.f32 %v460
  %vm468 = vmor %vm466, %vm467
  %v469 = vsel %vm468, %v460, %v465
  %v470 = vmul.f32 %v436, %v459
  %v471 = vmul.f32 %v437, %v469
  %v473 = vperm.slane %v426, 0
  %v475 = vmul.f32 %v470, %v473
  %v476 = vmul.f32 %v471, %v473
  %v478 = vperm.slane %v427, 0
  %v480 = vadd.f32 %v475, %v478
  %v481 = vadd.f32 %v476, %v478
  %v482 = vld [vmem:[%s10] sm:$0xff]
  %v483 = vld [vmem:[%s10 + $0x8] sm:$0xff]
  %v484 = vld [vmem:[%s10 + $0x10] sm:$0xff]
  %v485 = vld [vmem:[%s10 + $0x18] sm:$0xff]
  %v486 = vld [vmem:[%s11] sm:$0x1]
  %v488 = vperm.slane %v486, 0
  %v491 = vsel %vm65, %v480, 0
  %v494 = vsel %vm65, %v481, 0
  %496 = vmatpush.msra.mxu0 0.0
  %497 = vmatpush.msra.mxu0 0.0
  %498 = vmatpush.msra.mxu0 0.0
  %499 = vmatpush.msra.mxu0 0.0
  %500 = vmatpush.msra.mxu0 0.0
  %501 = vmatpush.msra.mxu0 0.0
  %502 = vmatpush.msra.mxu0 0.0
  %503 = vmatpush.msra.mxu0 0.0
  %504 = vmatpush.msra.mxu0 0.0
  %505 = vmatpush.msra.mxu0 0.0
  %506 = vmatpush.msra.mxu0 0.0
  %507 = vmatpush.msra.mxu0 0.0
  %508 = vmatpush.msra.mxu0 %v485
  %509 = vmatpush.msra.mxu0 %v484
  %510 = vmatpush.msra.mxu0 %v483
  %511 = vmatpush.msra.mxu0 %v482
  %512 = vmatmul.f32.gmra.mxu0 %v491
  %v513 = vpop.f32.mrf.mxu0
  %v514 = vadd.f32 %v488, %v513
  %515 = vmatmul.f32.gmra.mxu0 %v494
  %v516 = vpop.f32.mrf.mxu0
  %v517 = vadd.f32 %v488, %v516
  %518 = vdwg.mxu0
  %v519 = vmul.f32 %v514, 0.5
  %v520 = vmul.f32 %v517, 0.5
  %v521 = vmul.f32 %v514, 0.044715
  %v522 = vmul.f32 %v517, 0.044715
  %v523 = vmul.f32 %v521, %v514
  %v524 = vmul.f32 %v522, %v517
  %v525 = vmul.f32 %v523, %v514
  %v526 = vmul.f32 %v524, %v517
  %v527 = vadd.f32 %v514, %v525
  %v528 = vadd.f32 %v517, %v526
  %v529 = vmul.f32 %v527, 0.7978846
  %v530 = vmul.f32 %v528, 0.7978846
  %v531 = vtanh.pop %v529
  %v532 = vtanh.pop %v530
  %v533 = vadd.f32 %v531, 1.0
  %v534 = vadd.f32 %v532, 1.0
  %v535 = vmul.f32 %v519, %v533
  %v536 = vmul.f32 %v520, %v534
  %v537 = vld [vmem:[%s12] sm:$0xff]
  %v538 = vld [vmem:[%s12 + $0x8] sm:$0xff]
  %v539 = vld [vmem:[%s12 + $0x10] sm:$0xff]
  %v540 = vld [vmem:[%s12 + $0x18] sm:$0xff]
  %v541 = vld [vmem:[%s12 + $0x20] sm:$0xff]
  %v542 = vld [vmem:[%s12 + $0x28] sm:$0xff]
  %v543 = vld [vmem:[%s12 + $0x30] sm:$0xff]
  %v544 = vld [vmem:[%s12 + $0x38] sm:$0xff]
  %v545 = vld [vmem:[%s13] sm:$0x1]
  %v547 = vperm.slane %v545, 0
  %vm549 = vcmask 523264
  %v551 = vsel %vm549, %v535, 0
  %v554 = vsel %vm549, %v536, 0
  %556 = vmatpush.msra.mxu0 0.0
  %557 = vmatpush.msra.mxu0 0.0
  %558 = vmatpush.msra.mxu0 0.0
  %559 = vmatpush.msra.mxu0 0.0
  %560 = vmatpush.msra.mxu0 0.0
  %561 = vmatpush.msra.mxu0 0.0
  %562 = vmatpush.msra.mxu0 0.0
  %563 = vmatpush.msra.mxu0 0.0
  %564 = vmatpush.msra.mxu0 %v544
  %565 = vmatpush.msra.mxu0 %v543
  %566 = vmatpush.msra.mxu0 %v542
  %567 = vmatpush.msra.mxu0 %v541
  %568 = vmatpush.msra.mxu0 %v540
  %569 = vmatpush.msra.mxu0 %v539
  %570 = vmatpush.msra.mxu0 %v538
  %571 = vmatpush.msra.mxu0 %v537
  %572 = vmatmul.f32.gmra.mxu0 %v551
  %v573 = vpop.f32.mrf.mxu0
  %v574 = vadd.f32 %v547, %v573
  %575 = vmatmul.f32.gmra.mxu0 %v554
  %v576 = vpop.f32.mrf.mxu0
  %v577 = vadd.f32 %v547, %v576
  %578 = vdwg.mxu0
  %v579 = vadd.f32 %v480, %v574
  %v580 = vadd.f32 %v481, %v577
  %v581 = vld [vmem:[%s14] sm:$0x1]
  %v582 = vld [vmem:[%s15] sm:$0x1]
  %v583 = vsel %vm65, %v579, 0.0
  %584 = vadd.xlane.f32.xlu0 %v583
  %v585 = vpop.xlane.xlu0 %584
  %v586 = vsel %vm65, %v580, 0.0
  %587 = vadd.xlane.f32.xlu0 %v586
  %v588 = vpop.xlane.xlu0 %587
  %v589 = vmul.f32 %v585, %v78
  %v590 = vmul.f32 %v588, %v78
  %v591 = vsub.f32 %v579, %v589
  %v592 = vsub.f32 %v580, %v590
  %v593 = vmul.f32 %v591, %v591
  %v594 = vmul.f32 %v592, %v592
  %v595 = vsel %vm65, %v593, 0.0
  %596 = vadd.xlane.f32.xlu0 %v595
  %v597 = vpop.xlane.xlu0 %596
  %v598 = vsel %vm65, %v594, 0.0
  %599 = vadd.xlane.f32.xlu0 %v598
  %v600 = vpop.xlane.xlu0 %599
  %v601 = vmul.f32 %v597, %v78
  %v602 = vmul.f32 %v600, %v78
  %v603 = vadd.f32 %v601, 1e-05
  %v604 = vadd.f32 %v602, 1e-05
  %v605 = vrsqrt.pop %v603
  %v606 = vmul.f32 %v605, %v603
  %v607 = vmul.f32 %v606, %v605
  %v608 = vmul.f32 0.5, %v607
  %v609 = vsub.f32 1.5, %v608
  %v610 = vmul.f32 %v605, %v609
  %vm611 = vweird.f32 %v603
  %vm612 = vweird.f32 %v605
  %vm613 = vmor %vm611, %vm612
  %v614 = vsel %vm613, %v605, %v610
  %v615 = vrsqrt.pop %v604
  %v616 = vmul.f32 %v615, %v604
  %v617 = vmul.f32 %v616, %v615
  %v618 = vmul.f32 0.5, %v617
  %v619 = vsub.f32 1.5, %v618
  %v620 = vmul.f32 %v615, %v619
  %vm621 = vweird.f32 %v604
  %vm622 = vweird.f32 %v615
  %vm623 = vmor %vm621, %vm622
  %v624 = vsel %vm623, %v615, %v620
  %v625 = vmul.f32 %v591, %v614
  %v626 = vmul.f32 %v592, %v624
  %v628 = vperm.slane %v581, 0
  %v630 = vmul.f32 %v625, %v628
  %v631 = vmul.f32 %v626, %v628
  %v633 = vperm.slane %v582, 0
  %v635 = vadd.f32 %v630, %v633
  %v636 = vadd.f32 %v631, %v633
  %s637 = scalar_lea.vmem %s4, 32
  %v638 = vld [vmem:[%s637] sm:$0xff]
  %v639 = vld [vmem:[%s637 + $0x8] sm:$0xff]
  %v640 = vld [vmem:[%s637 + $0x10] sm:$0xff]
  %v641 = vld [vmem:[%s637 + $0x18] sm:$0xff]
  %s642 = scalar_lea.vmem %s5, 1
  %v643 = vld [vmem:[%s642] sm:$0x1]
  %v645 = vperm.slane %v643, 0
  %v648 = vsel %vm65, %v635, 0
  %v651 = vsel %vm65, %v636, 0
  %653 = vmatpush.msra.mxu0 0.0
  %654 = vmatpush.msra.mxu0 0.0
  %655 = vmatpush.msra.mxu0 0.0
  %656 = vmatpush.msra.mxu0 0.0
  %657 = vmatpush.msra.mxu0 0.0
  %658 = vmatpush.msra.mxu0 0.0
  %659 = vmatpush.msra.mxu0 0.0
  %660 = vmatpush.msra.mxu0 0.0
  %661 = vmatpush.msra.mxu0 0.0
  %662 = vmatpush.msra.mxu0 0.0
  %663 = vmatpush.msra.mxu0 0.0
  %664 = vmatpush.msra.mxu0 0.0
  %665 = vmatpush.msra.mxu0 %v641
  %666 = vmatpush.msra.mxu0 %v640
  %667 = vmatpush.msra.mxu0 %v639
  %668 = vmatpush.msra.mxu0 %v638
  %669 = vmatmul.f32.gmra.mxu0 %v648
  %v670 = vpop.f32.mrf.mxu0
  %v671 = vadd.f32 %v645, %v670
  %672 = vmatmul.f32.gmra.mxu0 %v651
  %v673 = vpop.f32.mrf.mxu0
  %v674 = vadd.f32 %v645, %v673
  %675 = vdwg.mxu0
  %676 = vst.msk [vmem:[#allocation2] sm:$0xff] %vm164, %v671
  %677 = vst.msk [vmem:[#allocation2 + $0x8] sm:$0xff] %vm164, %v674
  %v678 = vld [vmem:[#allocation2] sm:$0xff]
  %v679 = vld [vmem:[#allocation2 + $0x8] sm:$0xff]
  %682 = vrot.lane.b32.xlu0 %v678, 96
  %v683 = vpop.permute.xlu0 %682
  %684 = vrot.lane.b32.xlu0 %v679, 96
  %v685 = vpop.permute.xlu0 %684
  %v686 = vsel %vm175, %v678, 0
  %v688 = vsel %vm175, %v679, 0
  %v690 = vsel %vm175, %v683, 0
  %v692 = vsel %vm175, %v685, 0
  %694 = vmatpush.xpose.msra.mxu0 0.0
  %695 = vmatpush.xpose.msra.mxu0 0.0
  %696 = vmatpush.xpose.msra.mxu0 0.0
  %697 = vmatpush.xpose.msra.mxu0 0.0
  %698 = vmatpush.xpose.msra.mxu0 0.0
  %699 = vmatpush.xpose.msra.mxu0 0.0
  %700 = vmatpush.xpose.msra.mxu0 0.0
  %701 = vmatpush.xpose.msra.mxu0 0.0
  %702 = vmatpush.xpose.msra.mxu0 0.0
  %703 = vmatpush.xpose.msra.mxu0 0.0
  %704 = vmatpush.xpose.msra.mxu0 0.0
  %705 = vmatpush.xpose.msra.mxu0 0.0
  %706 = vmatpush.xpose.msra.mxu0 0.0
  %707 = vmatpush.xpose.msra.mxu0 0.0
  %708 = vmatpush.xpose.msra.mxu0 %v692
  %709 = vmatpush.xpose.msra.mxu0 %v690
  %710 = vmatmul.f32.gmra.mxu0 %v686
  %v711 = vpop.f32.mrf.mxu0
  %v712 = vadd.f32 0.0, %v711
  %713 = vmatmul.f32.gmra.mxu0 %v688
  %v714 = vpop.f32.mrf.mxu0
  %v715 = vadd.f32 0.0, %v714
  %716 = vdwg.mxu0
  %v717 = vmul.f32 %v712, 0.25
  %v718 = vmul.f32 %v715, 0.25
  %v719 = vadd.f32 %v717, %v59
  %v720 = vadd.f32 %v718, %v60
  %v721 = vsel %vm175, %v719, -inf
  %722 = vmax.xlane.f32.xlu0 %v721
  %v723 = vpop.xlane.xlu0 %722
  %v724 = vsel %vm175, %v720, -inf
  %725 = vmax.xlane.f32.xlu0 %v724
  %v726 = vpop.xlane.xlu0 %725
  %v727 = vsub.f32 %v719, %v723
  %v728 = vsub.f32 %v720, %v726
  %v729 = vmul.f32 %v727, 1.442695
  %v730 = vpow.pop %v729
  %v731 = vmul.f32 %v728, 1.442695
  %v732 = vpow.pop %v731
  %v733 = vsel %vm175, %v730, 0.0
  %734 = vadd.xlane.f32.xlu0 %v733
  %v735 = vpop.xlane.xlu0 %734
  %v736 = vsel %vm175, %v732, 0.0
  %737 = vadd.xlane.f32.xlu0 %v736
  %v738 = vpop.xlane.xlu0 %737
  %v739 = vrcp.pop %v735
  %v740 = vrcp.pop %v738
  %v741 = vmul.f32 %v730, %v739
  %v742 = vmul.f32 %v732, %v740
  %743 = vrot.lane.b32.xlu0 %v678, 64
  %v744 = vpop.permute.xlu0 %743
  %745 = vrot.lane.b32.xlu0 %v679, 64
  %v746 = vpop.permute.xlu0 %745
  %v750 = vsel %vm175, %v741, 0
  %v753 = vsel %vm175, %v742, 0
  %755 = vmatpush.msra.mxu0 0.0
  %756 = vmatpush.msra.mxu0 0.0
  %757 = vmatpush.msra.mxu0 0.0
  %758 = vmatpush.msra.mxu0 0.0
  %759 = vmatpush.msra.mxu0 0.0
  %760 = vmatpush.msra.mxu0 0.0
  %761 = vmatpush.msra.mxu0 0.0
  %762 = vmatpush.msra.mxu0 0.0
  %763 = vmatpush.msra.mxu0 0.0
  %764 = vmatpush.msra.mxu0 0.0
  %765 = vmatpush.msra.mxu0 0.0
  %766 = vmatpush.msra.mxu0 0.0
  %767 = vmatpush.msra.mxu0 0.0
  %768 = vmatpush.msra.mxu0 0.0
  %769 = vmatpush.msra.mxu0 %v746
  %770 = vmatpush.msra.mxu0 %v744
  %771 = vmatmul.f32.gmra.mxu0 %v750
  %v772 = vpop.f32.mrf.mxu0
  %v773 = vadd.f32 0.0, %v772
  %774 = vmatmul.f32.gmra.mxu0 %v753
  %v775 = vpop.f32.mrf.mxu0
  %v776 = vadd.f32 0.0, %v775
  %777 = vdwg.mxu0
  %778 = vst.msk [vmem:[#allocation3] sm:$0xff] %vm175, %v773
  %779 = vst.msk [vmem:[#allocation3 + $0x8] sm:$0xff] %vm175, %v776
  %v780 = vld [vmem:[#allocation2] sm:$0xff]
  %v781 = vld [vmem:[#allocation2 + $0x8] sm:$0xff]
  %784 = vrot.lane.b32.xlu0 %v780, 112
  %v785 = vpop.permute.xlu0 %784
  %786 = vrot.lane.b32.xlu0 %v781, 112
  %v787 = vpop.permute.xlu0 %786
  %788 = vrot.lane.b32.xlu0 %v780, 80
  %v789 = vpop.permute.xlu0 %788
  %790 = vrot.lane.b32.xlu0 %v781, 80
  %v791 = vpop.permute.xlu0 %790
  %v792 = vsel %vm175, %v785, 0
  %v794 = vsel %vm175, %v787, 0
  %v796 = vsel %vm175, %v789, 0
  %v798 = vsel %vm175, %v791, 0
  %800 = vmatpush.xpose.msra.mxu0 0.0
  %801 = vmatpush.xpose.msra.mxu0 0.0
  %802 = vmatpush.xpose.msra.mxu0 0.0
  %803 = vmatpush.xpose.msra.mxu0 0.0
  %804 = vmatpush.xpose.msra.mxu0 0.0
  %805 = vmatpush.xpose.msra.mxu0 0.0
  %806 = vmatpush.xpose.msra.mxu0 0.0
  %807 = vmatpush.xpose.msra.mxu0 0.0
  %808 = vmatpush.xpose.msra.mxu0 0.0
  %809 = vmatpush.xpose.msra.mxu0 0.0
  %810 = vmatpush.xpose.msra.mxu0 0.0
  %811 = vmatpush.xpose.msra.mxu0 0.0
  %812 = vmatpush.xpose.msra.mxu0 0.0
  %813 = vmatpush.xpose.msra.mxu0 0.0
  %814 = vmatpush.xpose.msra.mxu0 %v798
  %815 = vmatpush.xpose.msra.mxu0 %v796
  %816 = vmatmul.f32.gmra.mxu0 %v792
  %v817 = vpop.f32.mrf.mxu0
  %v818 = vadd.f32 0.0, %v817
  %819 = vmatmul.f32.gmra.mxu0 %v794
  %v820 = vpop.f32.mrf.mxu0
  %v821 = vadd.f32 0.0, %v820
  %822 = vdwg.mxu0
  %v823 = vmul.f32 %v818, 0.25
  %v824 = vmul.f32 %v821, 0.25
  %v825 = vadd.f32 %v823, %v59
  %v826 = vadd.f32 %v824, %v60
  %v827 = vsel %vm175, %v825, -inf
  %828 = vmax.xlane.f32.xlu0 %v827
  %v829 = vpop.xlane.xlu0 %828
  %v830 = vsel %vm175, %v826, -inf
  %831 = vmax.xlane.f32.xlu0 %v830
  %v832 = vpop.xlane.xlu0 %831
  %v833 = vsub.f32 %v825, %v829
  %v834 = vsub.f32 %v826, %v832
  %v835 = vmul.f32 %v833, 1.442695
  %v836 = vpow.pop %v835
  %v837 = vmul.f32 %v834, 1.442695
  %v838 = vpow.pop %v837
  %v839 = vsel %vm175, %v836, 0.0
  %840 = vadd.xlane.f32.xlu0 %v839
  %v841 = vpop.xlane.xlu0 %840
  %v842 = vsel %vm175, %v838, 0.0
  %843 = vadd.xlane.f32.xlu0 %v842
  %v844 = vpop.xlane.xlu0 %843
  %v845 = vrcp.pop %v841
  %v846 = vrcp.pop %v844
  %v847 = vmul.f32 %v836, %v845
  %v848 = vmul.f32 %v838, %v846
  %849 = vrot.lane.b32.xlu0 %v780, 48
  %v850 = vpop.permute.xlu0 %849
  %851 = vrot.lane.b32.xlu0 %v781, 48
  %v852 = vpop.permute.xlu0 %851
  %v856 = vsel %vm175, %v847, 0
  %v859 = vsel %vm175, %v848, 0
  %861 = vmatpush.msra.mxu0 0.0
  %862 = vmatpush.msra.mxu0 0.0
  %863 = vmatpush.msra.mxu0 0.0
  %864 = vmatpush.msra.mxu0 0.0
  %865 = vmatpush.msra.mxu0 0.0
  %866 = vmatpush.msra.mxu0 0.0
  %867 = vmatpush.msra.mxu0 0.0
  %868 = vmatpush.msra.mxu0 0.0
  %869 = vmatpush.msra.mxu0 0.0
  %870 = vmatpush.msra.mxu0 0.0
  %871 = vmatpush.msra.mxu0 0.0
  %872 = vmatpush.msra.mxu0 0.0
  %873 = vmatpush.msra.mxu0 0.0
  %874 = vmatpush.msra.mxu0 0.0
  %875 = vmatpush.msra.mxu0 %v852
  %876 = vmatpush.msra.mxu0 %v850
  %877 = vmatmul.f32.gmra.mxu0 %v856
  %v878 = vpop.f32.mrf.mxu0
  %v879 = vadd.f32 0.0, %v878
  %880 = vmatmul.f32.gmra.mxu0 %v859
  %v881 = vpop.f32.mrf.mxu0
  %v882 = vadd.f32 0.0, %v881
  %883 = vdwg.mxu0
  %886 = vrot.lane.b32.xlu0 %v879, 16
  %v887 = vpop.permute.xlu0 %886
  %888 = vrot.lane.b32.xlu0 %v882, 16
  %v889 = vpop.permute.xlu0 %888
  %892 = vst.msk [vmem:[#allocation3] sm:$0xff] %vm382, %v887
  %893 = vst.msk [vmem:[#allocation3 + $0x8] sm:$0xff] %vm382, %v889
  %v894 = vld [vmem:[#allocation3] sm:$0xff]
  %v895 = vld [vmem:[#allocation3 + $0x8] sm:$0xff]
  %s896 = scalar_lea.vmem %s6, 32
  %v897 = vld [vmem:[%s896] sm:$0xff]
  %v898 = vld [vmem:[%s896 + $0x8] sm:$0xff]
  %v899 = vld [vmem:[%s896 + $0x10] sm:$0xff]
  %v900 = vld [vmem:[%s896 + $0x18] sm:$0xff]
  %s901 = scalar_lea.vmem %s7, 1
  %v902 = vld [vmem:[%s901] sm:$0x1]
  %v904 = vperm.slane %v902, 0
  %v907 = vsel %vm65, %v894, 0
  %v910 = vsel %vm65, %v895, 0
  %912 = vmatpush.msra.mxu0 0.0
  %913 = vmatpush.msra.mxu0 0.0
  %914 = vmatpush.msra.mxu0 0.0
  %915 = vmatpush.msra.mxu0 0.0
  %916 = vmatpush.msra.mxu0 0.0
  %917 = vmatpush.msra.mxu0 0.0
  %918 = vmatpush.msra.mxu0 0.0
  %919 = vmatpush.msra.mxu0 0.0
  %920 = vmatpush.msra.mxu0 0.0
  %921 = vmatpush.msra.mxu0 0.0
  %922 = vmatpush.msra.mxu0 0.0
  %923 = vmatpush.msra.mxu0 0.0
  %924 = vmatpush.msra.mxu0 %v900
  %925 = vmatpush.msra.mxu0 %v899
  %926 = vmatpush.msra.mxu0 %v898
  %927 = vmatpush.msra.mxu0 %v897
  %928 = vmatmul.f32.gmra.mxu0 %v907
  %v929 = vpop.f32.mrf.mxu0
  %v930 = vadd.f32 %v904, %v929
  %931 = vmatmul.f32.gmra.mxu0 %v910
  %v932 = vpop.f32.mrf.mxu0
  %v933 = vadd.f32 %v904, %v932
  %934 = vdwg.mxu0
  %v935 = vadd.f32 %v635, %v930
  %v936 = vadd.f32 %v636, %v933
  %s937 = scalar_lea.vmem %s8, 1
  %v938 = vld [vmem:[%s937] sm:$0x1]
  %s939 = scalar_lea.vmem %s9, 1
  %v940 = vld [vmem:[%s939] sm:$0x1]
  %v941 = vsel %vm65, %v935, 0.0
  %942 = vadd.xlane.f32.xlu0 %v941
  %v943 = vpop.xlane.xlu0 %942
  %v944 = vsel %vm65, %v936, 0.0
  %945 = vadd.xlane.f32.xlu0 %v944
  %v946 = vpop.xlane.xlu0 %945
  %v947 = vmul.f32 %v943, %v78
  %v948 = vmul.f32 %v946, %v78
  %v949 = vsub.f32 %v935, %v947
  %v950 = vsub.f32 %v936, %v948
  %v951 = vmul.f32 %v949, %v949
  %v952 = vmul.f32 %v950, %v950
  %v953 = vsel %vm65, %v951, 0.0
  %954 = vadd.xlane.f32.xlu0 %v953
  %v955 = vpop.xlane.xlu0 %954
  %v956 = vsel %vm65, %v952, 0.0
  %957 = vadd.xlane.f32.xlu0 %v956
  %v958 = vpop.xlane.xlu0 %957
  %v959 = vmul.f32 %v955, %v78
  %v960 = vmul.f32 %v958, %v78
  %v961 = vadd.f32 %v959, 1e-05
  %v962 = vadd.f32 %v960, 1e-05
  %v963 = vrsqrt.pop %v961
  %v964 = vmul.f32 %v963, %v961
  %v965 = vmul.f32 %v964, %v963
  %v966 = vmul.f32 0.5, %v965
  %v967 = vsub.f32 1.5, %v966
  %v968 = vmul.f32 %v963, %v967
  %vm969 = vweird.f32 %v961
  %vm970 = vweird.f32 %v963
  %vm971 = vmor %vm969, %vm970
  %v972 = vsel %vm971, %v963, %v968
  %v973 = vrsqrt.pop %v962
  %v974 = vmul.f32 %v973, %v962
  %v975 = vmul.f32 %v974, %v973
  %v976 = vmul.f32 0.5, %v975
  %v977 = vsub.f32 1.5, %v976
  %v978 = vmul.f32 %v973, %v977
  %vm979 = vweird.f32 %v962
  %vm980 = vweird.f32 %v973
  %vm981 = vmor %vm979, %vm980
  %v982 = vsel %vm981, %v973, %v978
  %v983 = vmul.f32 %v949, %v972
  %v984 = vmul.f32 %v950, %v982
  %v986 = vperm.slane %v938, 0
  %v988 = vmul.f32 %v983, %v986
  %v989 = vmul.f32 %v984, %v986
  %v991 = vperm.slane %v940, 0
  %v993 = vadd.f32 %v988, %v991
  %v994 = vadd.f32 %v989, %v991
  %s995 = scalar_lea.vmem %s10, 32
  %v996 = vld [vmem:[%s995] sm:$0xff]
  %v997 = vld [vmem:[%s995 + $0x8] sm:$0xff]
  %v998 = vld [vmem:[%s995 + $0x10] sm:$0xff]
  %v999 = vld [vmem:[%s995 + $0x18] sm:$0xff]
  %s1000 = scalar_lea.vmem %s11, 1
  %v1001 = vld [vmem:[%s1000] sm:$0x1]
  %v1003 = vperm.slane %v1001, 0
  %v1006 = vsel %vm65, %v993, 0
  %v1009 = vsel %vm65, %v994, 0
  %1011 = vmatpush.msra.mxu0 0.0
  %1012 = vmatpush.msra.mxu0 0.0
  %1013 = vmatpush.msra.mxu0 0.0
  %1014 = vmatpush.msra.mxu0 0.0
  %1015 = vmatpush.msra.mxu0 0.0
  %1016 = vmatpush.msra.mxu0 0.0
  %1017 = vmatpush.msra.mxu0 0.0
  %1018 = vmatpush.msra.mxu0 0.0
  %1019 = vmatpush.msra.mxu0 0.0
  %1020 = vmatpush.msra.mxu0 0.0
  %1021 = vmatpush.msra.mxu0 0.0
  %1022 = vmatpush.msra.mxu0 0.0
  %1023 = vmatpush.msra.mxu0 %v999
  %1024 = vmatpush.msra.mxu0 %v998
  %1025 = vmatpush.msra.mxu0 %v997
  %1026 = vmatpush.msra.mxu0 %v996
  %1027 = vmatmul.f32.gmra.mxu0 %v1006
  %v1028 = vpop.f32.mrf.mxu0
  %v1029 = vadd.f32 %v1003, %v1028
  %1030 = vmatmul.f32.gmra.mxu0 %v1009
  %v1031 = vpop.f32.mrf.mxu0
  %v1032 = vadd.f32 %v1003, %v1031
  %1033 = vdwg.mxu0
  %v1034 = vmul.f32 %v1029, 0.5
  %v1035 = vmul.f32 %v1032, 0.5
  %v1036 = vmul.f32 %v1029, 0.044715
  %v1037 = vmul.f32 %v1032, 0.044715
  %v1038 = vmul.f32 %v1036, %v1029
  %v1039 = vmul.f32 %v1037, %v1032
  %v1040 = vmul.f32 %v1038, %v1029
  %v1041 = vmul.f32 %v1039, %v1032
  %v1042 = vadd.f32 %v1029, %v1040
  %v1043 = vadd.f32 %v1032, %v1041
  %v1044 = vmul.f32 %v1042, 0.7978846
  %v1045 = vmul.f32 %v1043, 0.7978846
  %v1046 = vtanh.pop %v1044
  %v1047 = vtanh.pop %v1045
  %v1048 = vadd.f32 %v1046, 1.0
  %v1049 = vadd.f32 %v1047, 1.0
  %v1050 = vmul.f32 %v1034, %v1048
  %v1051 = vmul.f32 %v1035, %v1049
  %s1052 = scalar_lea.vmem %s12, 64
  %v1053 = vld [vmem:[%s1052] sm:$0xff]
  %v1054 = vld [vmem:[%s1052 + $0x8] sm:$0xff]
  %v1055 = vld [vmem:[%s1052 + $0x10] sm:$0xff]
  %v1056 = vld [vmem:[%s1052 + $0x18] sm:$0xff]
  %v1057 = vld [vmem:[%s1052 + $0x20] sm:$0xff]
  %v1058 = vld [vmem:[%s1052 + $0x28] sm:$0xff]
  %v1059 = vld [vmem:[%s1052 + $0x30] sm:$0xff]
  %v1060 = vld [vmem:[%s1052 + $0x38] sm:$0xff]
  %s1061 = scalar_lea.vmem %s13, 1
  %v1062 = vld [vmem:[%s1061] sm:$0x1]
  %v1064 = vperm.slane %v1062, 0
  %v1067 = vsel %vm549, %v1050, 0
  %v1070 = vsel %vm549, %v1051, 0
  %1072 = vmatpush.msra.mxu0 0.0
  %1073 = vmatpush.msra.mxu0 0.0
  %1074 = vmatpush.msra.mxu0 0.0
  %1075 = vmatpush.msra.mxu0 0.0
  %1076 = vmatpush.msra.mxu0 0.0
  %1077 = vmatpush.msra.mxu0 0.0
  %1078 = vmatpush.msra.mxu0 0.0
  %1079 = vmatpush.msra.mxu0 0.0
  %1080 = vmatpush.msra.mxu0 %v1060
  %1081 = vmatpush.msra.mxu0 %v1059
  %1082 = vmatpush.msra.mxu0 %v1058
  %1083 = vmatpush.msra.mxu0 %v1057
  %1084 = vmatpush.msra.mxu0 %v1056
  %1085 = vmatpush.msra.mxu0 %v1055
  %1086 = vmatpush.msra.mxu0 %v1054
  %1087 = vmatpush.msra.mxu0 %v1053
  %1088 = vmatmul.f32.gmra.mxu0 %v1067
  %v1089 = vpop.f32.mrf.mxu0
  %v1090 = vadd.f32 %v1064, %v1089
  %1091 = vmatmul.f32.gmra.mxu0 %v1070
  %v1092 = vpop.f32.mrf.mxu0
  %v1093 = vadd.f32 %v1064, %v1092
  %1094 = vdwg.mxu0
  %v1095 = vadd.f32 %v993, %v1090
  %v1096 = vadd.f32 %v994, %v1093
  %s1097 = scalar_lea.vmem %s14, 1
  %v1098 = vld [vmem:[%s1097] sm:$0x1]
  %s1099 = scalar_lea.vmem %s15, 1
  %v1100 = vld [vmem:[%s1099] sm:$0x1]
  %v1101 = vsel %vm65, %v1095, 0.0
  %1102 = vadd.xlane.f32.xlu0 %v1101
  %v1103 = vpop.xlane.xlu0 %1102
  %v1104 = vsel %vm65, %v1096, 0.0
  %1105 = vadd.xlane.f32.xlu0 %v1104
  %v1106 = vpop.xlane.xlu0 %1105
  %v1107 = vmul.f32 %v1103, %v78
  %v1108 = vmul.f32 %v1106, %v78
  %v1109 = vsub.f32 %v1095, %v1107
  %v1110 = vsub.f32 %v1096, %v1108
  %v1111 = vmul.f32 %v1109, %v1109
  %v1112 = vmul.f32 %v1110, %v1110
  %v1113 = vsel %vm65, %v1111, 0.0
  %1114 = vadd.xlane.f32.xlu0 %v1113
  %v1115 = vpop.xlane.xlu0 %1114
  %v1116 = vsel %vm65, %v1112, 0.0
  %1117 = vadd.xlane.f32.xlu0 %v1116
  %v1118 = vpop.xlane.xlu0 %1117
  %v1119 = vmul.f32 %v1115, %v78
  %v1120 = vmul.f32 %v1118, %v78
  %v1121 = vadd.f32 %v1119, 1e-05
  %v1122 = vadd.f32 %v1120, 1e-05
  %v1123 = vrsqrt.pop %v1121
  %v1124 = vmul.f32 %v1123, %v1121
  %v1125 = vmul.f32 %v1124, %v1123
  %v1126 = vmul.f32 0.5, %v1125
  %v1127 = vsub.f32 1.5, %v1126
  %v1128 = vmul.f32 %v1123, %v1127
  %vm1129 = vweird.f32 %v1121
  %vm1130 = vweird.f32 %v1123
  %vm1131 = vmor %vm1129, %vm1130
  %v1132 = vsel %vm1131, %v1123, %v1128
  %v1133 = vrsqrt.pop %v1122
  %v1134 = vmul.f32 %v1133, %v1122
  %v1135 = vmul.f32 %v1134, %v1133
  %v1136 = vmul.f32 0.5, %v1135
  %v1137 = vsub.f32 1.5, %v1136
  %v1138 = vmul.f32 %v1133, %v1137
  %vm1139 = vweird.f32 %v1122
  %vm1140 = vweird.f32 %v1133
  %vm1141 = vmor %vm1139, %vm1140
  %v1142 = vsel %vm1141, %v1133, %v1138
  %v1143 = vmul.f32 %v1109, %v1132
  %v1144 = vmul.f32 %v1110, %v1142
  %v1146 = vperm.slane %v1098, 0
  %v1148 = vmul.f32 %v1143, %v1146
  %v1149 = vmul.f32 %v1144, %v1146
  %v1151 = vperm.slane %v1100, 0
  %v1153 = vadd.f32 %v1148, %v1151
  %v1154 = vadd.f32 %v1149, %v1151
  %v1155 = vld [vmem:[%s16] sm:$0xff]
  %v1156 = vld [vmem:[%s16 + $0x8] sm:$0xff]
  %v1157 = vld [vmem:[%s16 + $0x10] sm:$0xff]
  %v1158 = vld [vmem:[%s16 + $0x18] sm:$0xff]
  %v1159 = vld [vmem:[%s17] sm:$0x1]
  %v1161 = vperm.slane %v1159, 0
  %v1164 = vsel %vm65, %v1153, 0
  %v1167 = vsel %vm65, %v1154, 0
  %1169 = vmatpush.msra.mxu0 0.0
  %1170 = vmatpush.msra.mxu0 0.0
  %1171 = vmatpush.msra.mxu0 0.0
  %1172 = vmatpush.msra.mxu0 0.0
  %1173 = vmatpush.msra.mxu0 0.0
  %1174 = vmatpush.msra.mxu0 0.0
  %1175 = vmatpush.msra.mxu0 0.0
  %1176 = vmatpush.msra.mxu0 0.0
  %1177 = vmatpush.msra.mxu0 0.0
  %1178 = vmatpush.msra.mxu0 0.0
  %1179 = vmatpush.msra.mxu0 0.0
  %1180 = vmatpush.msra.mxu0 0.0
  %1181 = vmatpush.msra.mxu0 %v1158
  %1182 = vmatpush.msra.mxu0 %v1157
  %1183 = vmatpush.msra.mxu0 %v1156
  %1184 = vmatpush.msra.mxu0 %v1155
  %1185 = vmatmul.f32.gmra.mxu0 %v1164
  %v1186 = vpop.f32.mrf.mxu0
  %v1187 = vadd.f32 %v1161, %v1186
  %1188 = vmatmul.f32.gmra.mxu0 %v1167
  %v1189 = vpop.f32.mrf.mxu0
  %v1190 = vadd.f32 %v1161, %v1189
  %1191 = vdwg.mxu0
  %vm1192 = vcmask 15360
  %1193 = vst.msk [vmem:[%s18] sm:$0xff] %vm1192, %v1187
  %1194 = vst.msk [vmem:[%s18 + $0x8] sm:$0xff] %vm1192, %v1190
  // Predicated region
  $region74: #{agent_forward.3} parent=0 // pred_check
    _
  $region75: #{agent_forward.3} parent=0 // pred_check_branch
    %1196 = sbr.rel (0) target = $region77
  $region76: #{agent_forward.3} parent=0 // pred_region
    _
  $region77: #{agent_forward.3} parent=0 // pred_fallthru
    _
  // Predicated region
  $region78: #{agent_forward.3} parent=0 // pred_check
    _
  $region79: #{agent_forward.3} parent=0 // pred_check_branch
    %1198 = sbr.rel (0) target = $region81
  $region80: #{agent_forward.3} parent=0 // pred_region
    _
  $region81: #{agent_forward.3} parent=0 // pred_fallthru
    _

// kernel: agent_forward.2
$region0: #{agent_forward.2}
  #allocation0 [shape = 'u32[]', space=smem, size = 0x4, offset = 0x4, fixed_abs, tag = 'smem constant byte address 0x4 - core index']
  #allocation1 [shape = 'u32[72,128]{1,0:T(1,128)}', space=vmem, size = 0x9000, scoped, tag = 'internal scratch']
  #allocation2 [shape = 'f32[48,96]{1,0:T(8,128)}', space=vmem, size = 0x6000, scoped, tag = 'scratch operand']
  #allocation3 [shape = 'f32[48,32]{1,0:T(8,128)}', space=vmem, size = 0x6000, scoped, tag = 'scratch operand']
  %s0 = inlined_call_operand.vmem [shape: f32[48,32], index: 0, kind: input, shape index: {}]
  %s1 = inlined_call_operand.vmem [shape: f32[48,48], index: 1, kind: input, shape index: {}]
  %s2 = inlined_call_operand.vmem [shape: f32[1,32], index: 2, kind: input, shape index: {}]
  %s3 = inlined_call_operand.vmem [shape: f32[1,32], index: 3, kind: input, shape index: {}]
  %s4 = inlined_call_operand.vmem [shape: f32[2,32,96], index: 4, kind: input, shape index: {}]
  %s5 = inlined_call_operand.vmem [shape: f32[2,1,96], index: 5, kind: input, shape index: {}]
  %s6 = inlined_call_operand.vmem [shape: f32[2,32,32], index: 6, kind: input, shape index: {}]
  %s7 = inlined_call_operand.vmem [shape: f32[2,1,32], index: 7, kind: input, shape index: {}]
  %s8 = inlined_call_operand.vmem [shape: f32[2,1,32], index: 8, kind: input, shape index: {}]
  %s9 = inlined_call_operand.vmem [shape: f32[2,1,32], index: 9, kind: input, shape index: {}]
  %s10 = inlined_call_operand.vmem [shape: f32[2,32,64], index: 10, kind: input, shape index: {}]
  %s11 = inlined_call_operand.vmem [shape: f32[2,1,64], index: 11, kind: input, shape index: {}]
  %s12 = inlined_call_operand.vmem [shape: f32[2,64,32], index: 12, kind: input, shape index: {}]
  %s13 = inlined_call_operand.vmem [shape: f32[2,1,32], index: 13, kind: input, shape index: {}]
  %s14 = inlined_call_operand.vmem [shape: f32[2,1,32], index: 14, kind: input, shape index: {}]
  %s15 = inlined_call_operand.vmem [shape: f32[2,1,32], index: 15, kind: input, shape index: {}]
  %s16 = inlined_call_operand.vmem [shape: f32[32,32], index: 16, kind: input, shape index: {}]
  %s17 = inlined_call_operand.vmem [shape: f32[1,32], index: 17, kind: input, shape index: {}]
  %s18 = inlined_call_operand.vmem [shape: f32[32,2], index: 18, kind: input, shape index: {}]
  %s19 = inlined_call_operand.vmem [shape: f32[1,2], index: 19, kind: input, shape index: {}]
  %s20 = inlined_call_operand.vmem [shape: f32[48,2], index: 20, kind: output, shape index: {}]
  %s21 = sld [smem:[#allocation0]]
  $region90: #{agent_forward.2} parent=0
    _
  %s23 = ssub.s32 1, %s21
  %s24 = scalar_select 0, %s23, %s21
  // Predicated region
  $region2: #{agent_forward.2} parent=0 // pred_check
    _
  $region3: #{agent_forward.2} parent=0 // pred_check_branch
    %26 = sbr.rel (0) target = $region5
  $region4: #{agent_forward.2} parent=0 // pred_region
    _
  $region5: #{agent_forward.2} parent=0 // pred_fallthru
    _
  // Predicated region
  $region6: #{agent_forward.2} parent=0 // pred_check
    _
  $region7: #{agent_forward.2} parent=0 // pred_check_branch
    %28 = sbr.rel (0) target = $region9
  $region8: #{agent_forward.2} parent=0 // pred_region
    _
  $region9: #{agent_forward.2} parent=0 // pred_fallthru
    _
  // Predicated region
  $region10: #{agent_forward.2} parent=0 // pred_check
    _
  $region11: #{agent_forward.2} parent=0 // pred_check_branch
    %30 = sbr.rel (0) target = $region13
  $region12: #{agent_forward.2} parent=0 // pred_region
    _
  $region13: #{agent_forward.2} parent=0 // pred_fallthru
    _
  // Predicated region
  $region14: #{agent_forward.2} parent=0 // pred_check
    _
  $region15: #{agent_forward.2} parent=0 // pred_check_branch
    %32 = sbr.rel (0) target = $region17
  $region16: #{agent_forward.2} parent=0 // pred_region
    _
  $region17: #{agent_forward.2} parent=0 // pred_fallthru
    _
  // Predicated region
  $region18: #{agent_forward.2} parent=0 // pred_check
    _
  $region19: #{agent_forward.2} parent=0 // pred_check_branch
    %34 = sbr.rel (0) target = $region21
  $region20: #{agent_forward.2} parent=0 // pred_region
    _
  $region21: #{agent_forward.2} parent=0 // pred_fallthru
    _
  // Predicated region
  $region22: #{agent_forward.2} parent=0 // pred_check
    _
  $region23: #{agent_forward.2} parent=0 // pred_check_branch
    %36 = sbr.rel (0) target = $region25
  $region24: #{agent_forward.2} parent=0 // pred_region
    _
  $region25: #{agent_forward.2} parent=0 // pred_fallthru
    _
  // Predicated region
  $region26: #{agent_forward.2} parent=0 // pred_check
    _
  $region27: #{agent_forward.2} parent=0 // pred_check_branch
    %38 = sbr.rel (0) target = $region29
  $region28: #{agent_forward.2} parent=0 // pred_region
    _
  $region29: #{agent_forward.2} parent=0 // pred_fallthru
    _
  // Predicated region
  $region30: #{agent_forward.2} parent=0 // pred_check
    _
  $region31: #{agent_forward.2} parent=0 // pred_check_branch
    %40 = sbr.rel (0) target = $region33
  $region32: #{agent_forward.2} parent=0 // pred_region
    _
  $region33: #{agent_forward.2} parent=0 // pred_fallthru
    _
  // Predicated region
  $region34: #{agent_forward.2} parent=0 // pred_check
    _
  $region35: #{agent_forward.2} parent=0 // pred_check_branch
    %42 = sbr.rel (0) target = $region37
  $region36: #{agent_forward.2} parent=0 // pred_region
    _
  $region37: #{agent_forward.2} parent=0 // pred_fallthru
    _
  // Predicated region
  $region38: #{agent_forward.2} parent=0 // pred_check
    _
  $region39: #{agent_forward.2} parent=0 // pred_check_branch
    %44 = sbr.rel (0) target = $region41
  $region40: #{agent_forward.2} parent=0 // pred_region
    _
  $region41: #{agent_forward.2} parent=0 // pred_fallthru
    _
  // Predicated region
  $region42: #{agent_forward.2} parent=0 // pred_check
    _
  $region43: #{agent_forward.2} parent=0 // pred_check_branch
    %46 = sbr.rel (0) target = $region45
  $region44: #{agent_forward.2} parent=0 // pred_region
    _
  $region45: #{agent_forward.2} parent=0 // pred_fallthru
    _
  // Predicated region
  $region46: #{agent_forward.2} parent=0 // pred_check
    _
  $region47: #{agent_forward.2} parent=0 // pred_check_branch
    %48 = sbr.rel (0) target = $region49
  $region48: #{agent_forward.2} parent=0 // pred_region
    _
  $region49: #{agent_forward.2} parent=0 // pred_fallthru
    _
  // Predicated region
  $region50: #{agent_forward.2} parent=0 // pred_check
    _
  $region51: #{agent_forward.2} parent=0 // pred_check_branch
    %50 = sbr.rel (0) target = $region53
  $region52: #{agent_forward.2} parent=0 // pred_region
    _
  $region53: #{agent_forward.2} parent=0 // pred_fallthru
    _
  // Predicated region
  $region54: #{agent_forward.2} parent=0 // pred_check
    _
  $region55: #{agent_forward.2} parent=0 // pred_check_branch
    %52 = sbr.rel (0) target = $region57
  $region56: #{agent_forward.2} parent=0 // pred_region
    _
  $region57: #{agent_forward.2} parent=0 // pred_fallthru
    _
  // Predicated region
  $region58: #{agent_forward.2} parent=0 // pred_check
    _
  $region59: #{agent_forward.2} parent=0 // pred_check_branch
    %54 = sbr.rel (0) target = $region61
  $region60: #{agent_forward.2} parent=0 // pred_region
    _
  $region61: #{agent_forward.2} parent=0 // pred_fallthru
    _
  // Predicated region
  $region62: #{agent_forward.2} parent=0 // pred_check
    _
  $region63: #{agent_forward.2} parent=0 // pred_check_branch
    %56 = sbr.rel (0) target = $region65
  $region64: #{agent_forward.2} parent=0 // pred_region
    _
  $region65: #{agent_forward.2} parent=0 // pred_fallthru
    _
  // Predicated region
  $region66: #{agent_forward.2} parent=0 // pred_check
    _
  $region67: #{agent_forward.2} parent=0 // pred_check_branch
    %58 = sbr.rel (0) target = $region69
  $region68: #{agent_forward.2} parent=0 // pred_region
    _
  $region69: #{agent_forward.2} parent=0 // pred_fallthru
    _
  // Predicated region
  $region70: #{agent_forward.2} parent=0 // pred_check
    _
  $region71: #{agent_forward.2} parent=0 // pred_check_branch
    %60 = sbr.rel (0) target = $region73
  $region72: #{agent_forward.2} parent=0 // pred_region
    _
  $region73: #{agent_forward.2} parent=0 // pred_fallthru
    _
  // Predicated region
  $region74: #{agent_forward.2} parent=0 // pred_check
    _
  $region75: #{agent_forward.2} parent=0 // pred_check_branch
    %62 = sbr.rel (0) target = $region77
  $region76: #{agent_forward.2} parent=0 // pred_region
    _
  $region77: #{agent_forward.2} parent=0 // pred_fallthru
    _
  // Predicated region
  $region78: #{agent_forward.2} parent=0 // pred_check
    _
  $region79: #{agent_forward.2} parent=0 // pred_check_branch
    %64 = sbr.rel (0) target = $region81
  $region80: #{agent_forward.2} parent=0 // pred_region
    _
  $region81: #{agent_forward.2} parent=0 // pred_fallthru
    _
  %v65 = vld [vmem:[%s1] sm:$0xff]
  %v66 = vld [vmem:[%s1 + $0x8] sm:$0xff]
  %v67 = vld [vmem:[%s1 + $0x10] sm:$0xff]
  %v68 = vld [vmem:[%s1 + $0x18] sm:$0xff]
  %v69 = vld [vmem:[%s1 + $0x20] sm:$0xff]
  %v70 = vld [vmem:[%s1 + $0x28] sm:$0xff]
  %v71 = vld [vmem:[%s0] sm:$0xff]
  %v72 = vld [vmem:[%s0 + $0x8] sm:$0xff]
  %v73 = vld [vmem:[%s0 + $0x10] sm:$0xff]
  %v74 = vld [vmem:[%s0 + $0x18] sm:$0xff]
  %v75 = vld [vmem:[%s0 + $0x20] sm:$0xff]
  %v76 = vld [vmem:[%s0 + $0x28] sm:$0xff]
  %v77 = vld [vmem:[%s2] sm:$0x1]
  %v78 = vld [vmem:[%s3] sm:$0x1]
  %vm79 = vcmask 261120
  %v80 = vsel %vm79, %v71, 0.0
  %81 = vadd.xlane.f32.xlu0 %v80
  %v82 = vpop.xlane.xlu0 %81
  %v83 = vsel %vm79, %v72, 0.0
  %84 = vadd.xlane.f32.xlu0 %v83
  %v85 = vpop.xlane.xlu0 %84
  %v86 = vsel %vm79, %v73, 0.0
  %87 = vadd.xlane.f32.xlu0 %v86
  %v88 = vpop.xlane.xlu0 %87
  %v89 = vsel %vm79, %v74, 0.0
  %90 = vadd.xlane.f32.xlu0 %v89
  %v91 = vpop.xlane.xlu0 %90
  %v92 = vsel %vm79, %v75, 0.0
  %93 = vadd.xlane.f32.xlu0 %v92
  %v94 = vpop.xlane.xlu0 %93
  %v95 = vsel %vm79, %v76, 0.0
  %96 = vadd.xlane.f32.xlu0 %v95
  %v97 = vpop.xlane.xlu0 %96
  %v98 = vrcp.pop 32.0
  %v99 = vmul.f32 32.0, %v98
  %v100 = vsub.f32 1.0, %v99
  %v101 = vmul.f32 %v98, %v100
  %v102 = vadd.f32 %v98, %v101
  %vm103 = vweird.f32 %v98
  %v104 = vsel %vm103, %v98, %v102
  %v105 = vmul.f32 %v82, %v104
  %v106 = vmul.f32 %v85, %v104
  %v107 = vmul.f32 %v88, %v104
  %v108 = vmul.f32 %v91, %v104
  %v109 = vmul.f32 %v94, %v104
  %v110 = vmul.f32 %v97, %v104
  %v111 = vsub.f32 %v71, %v105
  %v112 = vsub.f32 %v72, %v106
  %v113 = vsub.f32 %v73, %v107
  %v114 = vsub.f32 %v74, %v108
  %v115 = vsub.f32 %v75, %v109
  %v116 = vsub.f32 %v76, %v110
  %v117 = vmul.f32 %v111, %v111
  %v118 = vmul.f32 %v112, %v112
  %v119 = vmul.f32 %v113, %v113
  %v120 = vmul.f32 %v114, %v114
  %v121 = vmul.f32 %v115, %v115
  %v122 = vmul.f32 %v116, %v116
  %v123 = vsel %vm79, %v117, 0.0
  %124 = vadd.xlane.f32.xlu0 %v123
  %v125 = vpop.xlane.xlu0 %124
  %v126 = vsel %vm79, %v118, 0.0
  %127 = vadd.xlane.f32.xlu0 %v126
  %v128 = vpop.xlane.xlu0 %127
  %v129 = vsel %vm79, %v119, 0.0
  %130 = vadd.xlane.f32.xlu0 %v129
  %v131 = vpop.xlane.xlu0 %130
  %v132 = vsel %vm79, %v120, 0.0
  %133 = vadd.xlane.f32.xlu0 %v132
  %v134 = vpop.xlane.xlu0 %133
  %v135 = vsel %vm79, %v121, 0.0
  %136 = vadd.xlane.f32.xlu0 %v135
  %v137 = vpop.xlane.xlu0 %136
  %v138 = vsel %vm79, %v122, 0.0
  %139 = vadd.xlane.f32.xlu0 %v138
  %v140 = vpop.xlane.xlu0 %139
  %v141 = vmul.f32 %v125, %v104
  %v142 = vmul.f32 %v128, %v104
  %v143 = vmul.f32 %v131, %v104
  %v144 = vmul.f32 %v134, %v104
  %v145 = vmul.f32 %v137, %v104
  %v146 = vmul.f32 %v140, %v104
  %v147 = vadd.f32 %v141, 1e-12
  %v148 = vadd.f32 %v142, 1e-12
  %v149 = vadd.f32 %v143, 1e-12
  %v150 = vadd.f32 %v144, 1e-12
  %v151 = vadd.f32 %v145, 1e-12
  %v152 = vadd.f32 %v146, 1e-12
  %v153 = vrsqrt.pop %v147
  %v154 = vmul.f32 %v153, %v147
  %v155 = vmul.f32 %v154, %v153
  %v156 = vmul.f32 0.5, %v155
  %v157 = vsub.f32 1.5, %v156
  %v158 = vmul.f32 %v153, %v157
  %vm159 = vweird.f32 %v147
  %vm160 = vweird.f32 %v153
  %vm161 = vmor %vm159, %vm160
  %v162 = vsel %vm161, %v153, %v158
  %v163 = vrsqrt.pop %v148
  %v164 = vmul.f32 %v163, %v148
  %v165 = vmul.f32 %v164, %v163
  %v166 = vmul.f32 0.5, %v165
  %v167 = vsub.f32 1.5, %v166
  %v168 = vmul.f32 %v163, %v167
  %vm169 = vweird.f32 %v148
  %vm170 = vweird.f32 %v163
  %vm171 = vmor %vm169, %vm170
  %v172 = vsel %vm171, %v163, %v168
  %v173 = vrsqrt.pop %v149
  %v174 = vmul.f32 %v173, %v149
  %v175 = vmul.f32 %v174, %v173
  %v176 = vmul.f32 0.5, %v175
  %v177 = vsub.f32 1.5, %v176
  %v178 = vmul.f32 %v173, %v177
  %vm179 = vweird.f32 %v149
  %vm180 = vweird.f32 %v173
  %vm181 = vmor %vm179, %vm180
  %v182 = vsel %vm181, %v173, %v178
  %v183 = vrsqrt.pop %v150
  %v184 = vmul.f32 %v183, %v150
  %v185 = vmul.f32 %v184, %v183
  %v186 = vmul.f32 0.5, %v185
  %v187 = vsub.f32 1.5, %v186
  %v188 = vmul.f32 %v183, %v187
  %vm189 = vweird.f32 %v150
  %vm190 = vweird.f32 %v183
  %vm191 = vmor %vm189, %vm190
  %v192 = vsel %vm191, %v183, %v188
  %v193 = vrsqrt.pop %v151
  %v194 = vmul.f32 %v193, %v151
  %v195 = vmul.f32 %v194, %v193
  %v196 = vmul.f32 0.5, %v195
  %v197 = vsub.f32 1.5, %v196
  %v198 = vmul.f32 %v193, %v197
  %vm199 = vweird.f32 %v151
  %vm200 = vweird.f32 %v193
  %vm201 = vmor %vm199, %vm200
  %v202 = vsel %vm201, %v193, %v198
  %v203 = vrsqrt.pop %v152
  %v204 = vmul.f32 %v203, %v152
  %v205 = vmul.f32 %v204, %v203
  %v206 = vmul.f32 0.5, %v205
  %v207 = vsub.f32 1.5, %v206
  %v208 = vmul.f32 %v203, %v207
  %vm209 = vweird.f32 %v152
  %vm210 = vweird.f32 %v203
  %vm211 = vmor %vm209, %vm210
  %v212 = vsel %vm211, %v203, %v208
  %v213 = vmul.f32 %v111, %v162
  %v214 = vmul.f32 %v112, %v172
  %v215 = vmul.f32 %v113, %v182
  %v216 = vmul.f32 %v114, %v192
  %v217 = vmul.f32 %v115, %v202
  %v218 = vmul.f32 %v116, %v212
  %v220 = vperm.slane %v77, 0
  %v222 = vmul.f32 %v213, %v220
  %v223 = vmul.f32 %v214, %v220
  %v224 = vmul.f32 %v215, %v220
  %v225 = vmul.f32 %v216, %v220
  %v226 = vmul.f32 %v217, %v220
  %v227 = vmul.f32 %v218, %v220
  %v229 = vperm.slane %v78, 0
  %v231 = vadd.f32 %v222, %v229
  %v232 = vadd.f32 %v223, %v229
  %v233 = vadd.f32 %v224, %v229
  %v234 = vadd.f32 %v225, %v229
  %v235 = vadd.f32 %v226, %v229
  %v236 = vadd.f32 %v227, %v229
  %v237 = vld [vmem:[%s4] sm:$0xff]
  %v238 = vld [vmem:[%s4 + $0x8] sm:$0xff]
  %v239 = vld [vmem:[%s4 + $0x10] sm:$0xff]
  %v240 = vld [vmem:[%s4 + $0x18] sm:$0xff]
  %v241 = vld [vmem:[%s5] sm:$0x1]
  %v243 = vperm.slane %v241, 0
  %v246 = vsel %vm79, %v231, 0
  %v249 = vsel %vm79, %v232, 0
  %v252 = vsel %vm79, %v233, 0
  %v255 = vsel %vm79, %v234, 0
  %v258 = vsel %vm79, %v235, 0
  %v261 = vsel %vm79, %v236, 0
  %263 = vmatpush.msra.mxu0 0.0
  %264 = vmatpush.msra.mxu0 0.0
  %265 = vmatpush.msra.mxu0 0.0
  %266 = vmatpush.msra.mxu0 0.0
  %267 = vmatpush.msra.mxu0 0.0
  %268 = vmatpush.msra.mxu0 0.0
  %269 = vmatpush.msra.mxu0 0.0
  %270 = vmatpush.msra.mxu0 0.0
  %271 = vmatpush.msra.mxu0 0.0
  %272 = vmatpush.msra.mxu0 0.0
  %273 = vmatpush.msra.mxu0 0.0
  %274 = vmatpush.msra.mxu0 0.0
  %275 = vmatpush.msra.mxu0 %v240
  %276 = vmatpush.msra.mxu0 %v239
  %277 = vmatpush.msra.mxu0 %v238
  %278 = vmatpush.msra.mxu0 %v237
  %279 = vmatmul.f32.gmra.mxu0 %v246
  %v280 = vpop.f32.mrf.mxu0
  %v281 = vadd.f32 %v243, %v280
  %282 = vmatmul.f32.gmra.mxu0 %v249
  %v283 = vpop.f32.mrf.mxu0
  %v284 = vadd.f32 %v243, %v283
  %285 = vmatmul.f32.gmra.mxu0 %v252
  %v286 = vpop.f32.mrf.mxu0
  %v287 = vadd.f32 %v243, %v286
  %288 = vmatmul.f32.gmra.mxu0 %v255
  %v289 = vpop.f32.mrf.mxu0
  %v290 = vadd.f32 %v243, %v289
  %291 = vmatmul.f32.gmra.mxu0 %v258
  %v292 = vpop.f32.mrf.mxu0
  %v293 = vadd.f32 %v243, %v292
  %294 = vmatmul.f32.gmra.mxu0 %v261
  %v295 = vpop.f32.mrf.mxu0
  %v296 = vadd.f32 %v243, %v295
  %297 = vdwg.mxu0
  %vm298 = vcmask 785408
  %299 = vst.msk [vmem:[#allocation2] sm:$0xff] %vm298, %v281
  %300 = vst.msk [vmem:[#allocation2 + $0x8] sm:$0xff] %vm298, %v284
  %301 = vst.msk [vmem:[#allocation2 + $0x10] sm:$0xff] %vm298, %v287
  %302 = vst.msk [vmem:[#allocation2 + $0x18] sm:$0xff] %vm298, %v290
  %303 = vst.msk [vmem:[#allocation2 + $0x20] sm:$0xff] %vm298, %v293
  %304 = vst.msk [vmem:[#allocation2 + $0x28] sm:$0xff] %vm298, %v296
  %v305 = vld [vmem:[#allocation2] sm:$0xff]
  %v306 = vld [vmem:[#allocation2 + $0x8] sm:$0xff]
  %v307 = vld [vmem:[#allocation2 + $0x10] sm:$0xff]
  %v308 = vld [vmem:[#allocation2 + $0x18] sm:$0xff]
  %v309 = vld [vmem:[#allocation2 + $0x20] sm:$0xff]
  %v310 = vld [vmem:[#allocation2 + $0x28] sm:$0xff]
  %317 = vrot.lane.b32.xlu0 %v305, 96
  %v318 = vpop.permute.xlu0 %317
  %319 = vrot.lane.b32.xlu0 %v306, 96
  %v320 = vpop.permute.xlu0 %319
  %321 = vrot.lane.b32.xlu0 %v307, 96
  %v322 = vpop.permute.xlu0 %321
  %323 = vrot.lane.b32.xlu0 %v308, 96
  %v324 = vpop.permute.xlu0 %323
  %325 = vrot.lane.b32.xlu0 %v309, 96
  %v326 = vpop.permute.xlu0 %325
  %327 = vrot.lane.b32.xlu0 %v310, 96
  %v328 = vpop.permute.xlu0 %327
  %vm329 = vcmask 130048
  %v330 = vsel %vm329, %v305, 0
  %v332 = vsel %vm329, %v306, 0
  %v334 = vsel %vm329, %v307, 0
  %v336 = vsel %vm329, %v308, 0
  %v338 = vsel %vm329, %v309, 0
  %v340 = vsel %vm329, %v310, 0
  %v342 = vsel %vm329, %v318, 0
  %v344 = vsel %vm329, %v320, 0
  %v346 = vsel %vm329, %v322, 0
  %v348 = vsel %vm329, %v324, 0
  %v350 = vsel %vm329, %v326, 0
  %v352 = vsel %vm329, %v328, 0
  %354 = vmatpush.xpose.msra.mxu0 0.0
  %355 = vmatpush.xpose.msra.mxu0 0.0
  %356 = vmatpush.xpose.msra.mxu0 0.0
  %357 = vmatpush.xpose.msra.mxu0 0.0
  %358 = vmatpush.xpose.msra.mxu0 0.0
  %359 = vmatpush.xpose.msra.mxu0 0.0
  %360 = vmatpush.xpose.msra.mxu0 0.0
  %361 = vmatpush.xpose.msra.mxu0 0.0
  %362 = vmatpush.xpose.msra.mxu0 0.0
  %363 = vmatpush.xpose.msra.mxu0 0.0
  %364 = vmatpush.xpose.msra.mxu0 %v352
  %365 = vmatpush.xpose.msra.mxu0 %v350
  %366 = vmatpush.xpose.msra.mxu0 %v348
  %367 = vmatpush.xpose.msra.mxu0 %v346
  %368 = vmatpush.xpose.msra.mxu0 %v344
  %369 = vmatpush.xpose.msra.mxu0 %v342
  %370 = vmatmul.f32.gmra.mxu0 %v330
  %v371 = vpop.f32.mrf.mxu0
  %v372 = vadd.f32 0.0, %v371
  %373 = vmatmul.f32.gmra.mxu0 %v332
  %v374 = vpop.f32.mrf.mxu0
  %v375 = vadd.f32 0.0, %v374
  %376 = vmatmul.f32.gmra.mxu0 %v334
  %v377 = vpop.f32.mrf.mxu0
  %v378 = vadd.f32 0.0, %v377
  %379 = vmatmul.f32.gmra.mxu0 %v336
  %v380 = vpop.f32.mrf.mxu0
  %v381 = vadd.f32 0.0, %v380
  %382 = vmatmul.f32.gmra.mxu0 %v338
  %v383 = vpop.f32.mrf.mxu0
  %v384 = vadd.f32 0.0, %v383
  %385 = vmatmul.f32.gmra.mxu0 %v340
  %v386 = vpop.f32.mrf.mxu0
  %v387 = vadd.f32 0.0, %v386
  %388 = vdwg.mxu0
  %v389 = vmul.f32 %v372, 0.25
  %v390 = vmul.f32 %v375, 0.25
  %v391 = vmul.f32 %v378, 0.25
  %v392 = vmul.f32 %v381, 0.25
  %v393 = vmul.f32 %v384, 0.25
  %v394 = vmul.f32 %v387, 0.25
  %v395 = vadd.f32 %v389, %v65
  %v396 = vadd.f32 %v390, %v66
  %v397 = vadd.f32 %v391, %v67
  %v398 = vadd.f32 %v392, %v68
  %v399 = vadd.f32 %v393, %v69
  %v400 = vadd.f32 %v394, %v70
  %vm401 = vcmask 392192
  %v402 = vsel %vm401, %v395, -inf
  %403 = vmax.xlane.f32.xlu0 %v402
  %v404 = vpop.xlane.xlu0 %403
  %v405 = vsel %vm401, %v396, -inf
  %406 = vmax.xlane.f32.xlu0 %v405
  %v407 = vpop.xlane.xlu0 %406
  %v408 = vsel %vm401, %v397, -inf
  %409 = vmax.xlane.f32.xlu0 %v408
  %v410 = vpop.xlane.xlu0 %409
  %v411 = vsel %vm401, %v398, -inf
  %412 = vmax.xlane.f32.xlu0 %v411
  %v413 = vpop.xlane.xlu0 %412
  %v414 = vsel %vm401, %v399, -inf
  %415 = vmax.xlane.f32.xlu0 %v414
  %v416 = vpop.xlane.xlu0 %415
  %v417 = vsel %vm401, %v400, -inf
  %418 = vmax.xlane.f32.xlu0 %v417
  %v419 = vpop.xlane.xlu0 %418
  %v420 = vsub.f32 %v395, %v404
  %v421 = vsub.f32 %v396, %v407
  %v422 = vsub.f32 %v397, %v410
  %v423 = vsub.f32 %v398, %v413
  %v424 = vsub.f32 %v399, %v416
  %v425 = vsub.f32 %v400, %v419
  %v426 = vmul.f32 %v420, 1.442695
  %v427 = vpow.pop %v426
  %v428 = vmul.f32 %v421, 1.442695
  %v429 = vpow.pop %v428
  %v430 = vmul.f32 %v422, 1.442695
  %v431 = vpow.pop %v430
  %v432 = vmul.f32 %v423, 1.442695
  %v433 = vpow.pop %v432
  %v434 = vmul.f32 %v424, 1.442695
  %v435 = vpow.pop %v434
  %v436 = vmul.f32 %v425, 1.442695
  %v437 = vpow.pop %v436
  %v438 = vsel %vm401, %v427, 0.0
  %439 = vadd.xlane.f32.xlu0 %v438
  %v440 = vpop.xlane.xlu0 %439
  %v441 = vsel %vm401, %v429, 0.0
  %442 = vadd.xlane.f32.xlu0 %v441
  %v443 = vpop.xlane.xlu0 %442
  %v444 = vsel %vm401, %v431, 0.0
  %445 = vadd.xlane.f32.xlu0 %v444
  %v446 = vpop.xlane.xlu0 %445
  %v447 = vsel %vm401, %v433, 0.0
  %448 = vadd.xlane.f32.xlu0 %v447
  %v449 = vpop.xlane.xlu0 %448
  %v450 = vsel %vm401, %v435, 0.0
  %451 = vadd.xlane.f32.xlu0 %v450
  %v452 = vpop.xlane.xlu0 %451
  %v453 = vsel %vm401, %v437, 0.0
  %454 = vadd.xlane.f32.xlu0 %v453
  %v455 = vpop.xlane.xlu0 %454
  %v456 = vrcp.pop %v440
  %v457 = vrcp.pop %v443
  %v458 = vrcp.pop %v446
  %v459 = vrcp.pop %v449
  %v460 = vrcp.pop %v452
  %v461 = vrcp.pop %v455
  %v462 = vmul.f32 %v427, %v456
  %v463 = vmul.f32 %v429, %v457
  %v464 = vmul.f32 %v431, %v458
  %v465 = vmul.f32 %v433, %v459
  %v466 = vmul.f32 %v435, %v460
  %v467 = vmul.f32 %v437, %v461
  %468 = vrot.lane.b32.xlu0 %v305, 64
  %v469 = vpop.permute.xlu0 %468
  %470 = vrot.lane.b32.xlu0 %v306, 64
  %v471 = vpop.permute.xlu0 %470
  %472 = vrot.lane.b32.xlu0 %v307, 64
  %v473 = vpop.permute.xlu0 %472
  %474 = vrot.lane.b32.xlu0 %v308, 64
  %v475 = vpop.permute.xlu0 %474
  %476 = vrot.lane.b32.xlu0 %v309, 64
  %v477 = vpop.permute.xlu0 %476
  %478 = vrot.lane.b32.xlu0 %v310, 64
  %v479 = vpop.permute.xlu0 %478
  %v487 = vsel %vm401, %v462, 0
  %v490 = vsel %vm401, %v463, 0
  %v493 = vsel %vm401, %v464, 0
  %v496 = vsel %vm401, %v465, 0
  %v499 = vsel %vm401, %v466, 0
  %v502 = vsel %vm401, %v467, 0
  %504 = vmatpush.msra.mxu0 0.0
  %505 = vmatpush.msra.mxu0 0.0
  %506 = vmatpush.msra.mxu0 0.0
  %507 = vmatpush.msra.mxu0 0.0
  %508 = vmatpush.msra.mxu0 0.0
  %509 = vmatpush.msra.mxu0 0.0
  %510 = vmatpush.msra.mxu0 0.0
  %511 = vmatpush.msra.mxu0 0.0
  %512 = vmatpush.msra.mxu0 0.0
  %513 = vmatpush.msra.mxu0 0.0
  %514 = vmatpush.msra.mxu0 %v479
  %515 = vmatpush.msra.mxu0 %v477
  %516 = vmatpush.msra.mxu0 %v475
  %517 = vmatpush.msra.mxu0 %v473
  %518 = vmatpush.msra.mxu0 %v471
  %519 = vmatpush.msra.mxu0 %v469
  %520 = vmatmul.f32.gmra.mxu0 %v487
  %v521 = vpop.f32.mrf.mxu0
  %v522 = vadd.f32 0.0, %v521
  %523 = vmatmul.f32.gmra.mxu0 %v490
  %v524 = vpop.f32.mrf.mxu0
  %v525 = vadd.f32 0.0, %v524
  %526 = vmatmul.f32.gmra.mxu0 %v493
  %v527 = vpop.f32.mrf.mxu0
  %v528 = vadd.f32 0.0, %v527
  %529 = vmatmul.f32.gmra.mxu0 %v496
  %v530 = vpop.f32.mrf.mxu0
  %v531 = vadd.f32 0.0, %v530
  %532 = vmatmul.f32.gmra.mxu0 %v499
  %v533 = vpop.f32.mrf.mxu0
  %v534 = vadd.f32 0.0, %v533
  %535 = vmatmul.f32.gmra.mxu0 %v502
  %v536 = vpop.f32.mrf.mxu0
  %v537 = vadd.f32 0.0, %v536
  %538 = vdwg.mxu0
  %539 = vst.msk [vmem:[#allocation3] sm:$0xff] %vm329, %v522
  %540 = vst.msk [vmem:[#allocation3 + $0x8] sm:$0xff] %vm329, %v525
  %541 = vst.msk [vmem:[#allocation3 + $0x10] sm:$0xff] %vm329, %v528
  %542 = vst.msk [vmem:[#allocation3 + $0x18] sm:$0xff] %vm329, %v531
  %543 = vst.msk [vmem:[#allocation3 + $0x20] sm:$0xff] %vm329, %v534
  %544 = vst.msk [vmem:[#allocation3 + $0x28] sm:$0xff] %vm329, %v537
  %v545 = vld [vmem:[#allocation2] sm:$0xff]
  %v546 = vld [vmem:[#allocation2 + $0x8] sm:$0xff]
  %v547 = vld [vmem:[#allocation2 + $0x10] sm:$0xff]
  %v548 = vld [vmem:[#allocation2 + $0x18] sm:$0xff]
  %v549 = vld [vmem:[#allocation2 + $0x20] sm:$0xff]
  %v550 = vld [vmem:[#allocation2 + $0x28] sm:$0xff]
  %557 = vrot.lane.b32.xlu0 %v545, 112
  %v558 = vpop.permute.xlu0 %557
  %559 = vrot.lane.b32.xlu0 %v546, 112
  %v560 = vpop.permute.xlu0 %559
  %561 = vrot.lane.b32.xlu0 %v547, 112
  %v562 = vpop.permute.xlu0 %561
  %563 = vrot.lane.b32.xlu0 %v548, 112
  %v564 = vpop.permute.xlu0 %563
  %565 = vrot.lane.b32.xlu0 %v549, 112
  %v566 = vpop.permute.xlu0 %565
  %567 = vrot.lane.b32.xlu0 %v550, 112
  %v568 = vpop.permute.xlu0 %567
  %569 = vrot.lane.b32.xlu0 %v545, 80
  %v570 = vpop.permute.xlu0 %569
  %571 = vrot.lane.b32.xlu0 %v546, 80
  %v572 = vpop.permute.xlu0 %571
  %573 = vrot.lane.b32.xlu0 %v547, 80
  %v574 = vpop.permute.xlu0 %573
  %575 = vrot.lane.b32.xlu0 %v548, 80
  %v576 = vpop.permute.xlu0 %575
  %577 = vrot.lane.b32.xlu0 %v549, 80
  %v578 = vpop.permute.xlu0 %577
  %579 = vrot.lane.b32.xlu0 %v550, 80
  %v580 = vpop.permute.xlu0 %579
  %v581 = vsel %vm329, %v558, 0
  %v583 = vsel %vm329, %v560, 0
  %v585 = vsel %vm329, %v562, 0
  %v587 = vsel %vm329, %v564, 0
  %v589 = vsel %vm329, %v566, 0
  %v591 = vsel %vm329, %v568, 0
  %v593 = vsel %vm329, %v570, 0
  %v595 = vsel %vm329, %v572, 0
  %v597 = vsel %vm329, %v574, 0
  %v599 = vsel %vm329, %v576, 0
  %v601 = vsel %vm329, %v578, 0
  %v603 = vsel %vm329, %v580, 0
  %605 = vmatpush.xpose.msra.mxu0 0.0
  %606 = vmatpush.xpose.msra.mxu0 0.0
  %607 = vmatpush.xpose.msra.mxu0 0.0
  %608 = vmatpush.xpose.msra.mxu0 0.0
  %609 = vmatpush.xpose.msra.mxu0 0.0
  %610 = vmatpush.xpose.msra.mxu0 0.0
  %611 = vmatpush.xpose.msra.mxu0 0.0
  %612 = vmatpush.xpose.msra.mxu0 0.0
  %613 = vmatpush.xpose.msra.mxu0 0.0
  %614 = vmatpush.xpose.msra.mxu0 0.0
  %615 = vmatpush.xpose.msra.mxu0 %v603
  %616 = vmatpush.xpose.msra.mxu0 %v601
  %617 = vmatpush.xpose.msra.mxu0 %v599
  %618 = vmatpush.xpose.msra.mxu0 %v597
  %619 = vmatpush.xpose.msra.mxu0 %v595
  %620 = vmatpush.xpose.msra.mxu0 %v593
  %621 = vmatmul.f32.gmra.mxu0 %v581
  %v622 = vpop.f32.mrf.mxu0
  %v623 = vadd.f32 0.0, %v622
  %624 = vmatmul.f32.gmra.mxu0 %v583
  %v625 = vpop.f32.mrf.mxu0
  %v626 = vadd.f32 0.0, %v625
  %627 = vmatmul.f32.gmra.mxu0 %v585
  %v628 = vpop.f32.mrf.mxu0
  %v629 = vadd.f32 0.0, %v628
  %630 = vmatmul.f32.gmra.mxu0 %v587
  %v631 = vpop.f32.mrf.mxu0
  %v632 = vadd.f32 0.0, %v631
  %633 = vmatmul.f32.gmra.mxu0 %v589
  %v634 = vpop.f32.mrf.mxu0
  %v635 = vadd.f32 0.0, %v634
  %636 = vmatmul.f32.gmra.mxu0 %v591
  %v637 = vpop.f32.mrf.mxu0
  %v638 = vadd.f32 0.0, %v637
  %639 = vdwg.mxu0
  %v640 = vmul.f32 %v623, 0.25
  %v641 = vmul.f32 %v626, 0.25
  %v642 = vmul.f32 %v629, 0.25
  %v643 = vmul.f32 %v632, 0.25
  %v644 = vmul.f32 %v635, 0.25
  %v645 = vmul.f32 %v638, 0.25
  %v646 = vadd.f32 %v640, %v65
  %v647 = vadd.f32 %v641, %v66
  %v648 = vadd.f32 %v642, %v67
  %v649 = vadd.f32 %v643, %v68
  %v650 = vadd.f32 %v644, %v69
  %v651 = vadd.f32 %v645, %v70
  %v652 = vsel %vm401, %v646, -inf
  %653 = vmax.xlane.f32.xlu0 %v652
  %v654 = vpop.xlane.xlu0 %653
  %v655 = vsel %vm401, %v647, -inf
  %656 = vmax.xlane.f32.xlu0 %v655
  %v657 = vpop.xlane.xlu0 %656
  %v658 = vsel %vm401, %v648, -inf
  %659 = vmax.xlane.f32.xlu0 %v658
  %v660 = vpop.xlane.xlu0 %659
  %v661 = vsel %vm401, %v649, -inf
  %662 = vmax.xlane.f32.xlu0 %v661
  %v663 = vpop.xlane.xlu0 %662
  %v664 = vsel %vm401, %v650, -inf
  %665 = vmax.xlane.f32.xlu0 %v664
  %v666 = vpop.xlane.xlu0 %665
  %v667 = vsel %vm401, %v651, -inf
  %668 = vmax.xlane.f32.xlu0 %v667
  %v669 = vpop.xlane.xlu0 %668
  %v670 = vsub.f32 %v646, %v654
  %v671 = vsub.f32 %v647, %v657
  %v672 = vsub.f32 %v648, %v660
  %v673 = vsub.f32 %v649, %v663
  %v674 = vsub.f32 %v650, %v666
  %v675 = vsub.f32 %v651, %v669
  %v676 = vmul.f32 %v670, 1.442695
  %v677 = vpow.pop %v676
  %v678 = vmul.f32 %v671, 1.442695
  %v679 = vpow.pop %v678
  %v680 = vmul.f32 %v672, 1.442695
  %v681 = vpow.pop %v680
  %v682 = vmul.f32 %v673, 1.442695
  %v683 = vpow.pop %v682
  %v684 = vmul.f32 %v674, 1.442695
  %v685 = vpow.pop %v684
  %v686 = vmul.f32 %v675, 1.442695
  %v687 = vpow.pop %v686
  %v688 = vsel %vm401, %v677, 0.0
  %689 = vadd.xlane.f32.xlu0 %v688
  %v690 = vpop.xlane.xlu0 %689
  %v691 = vsel %vm401, %v679, 0.0
  %692 = vadd.xlane.f32.xlu0 %v691
  %v693 = vpop.xlane.xlu0 %692
  %v694 = vsel %vm401, %v681, 0.0
  %695 = vadd.xlane.f32.xlu0 %v694
  %v696 = vpop.xlane.xlu0 %695
  %v697 = vsel %vm401, %v683, 0.0
  %698 = vadd.xlane.f32.xlu0 %v697
  %v699 = vpop.xlane.xlu0 %698
  %v700 = vsel %vm401, %v685, 0.0
  %701 = vadd.xlane.f32.xlu0 %v700
  %v702 = vpop.xlane.xlu0 %701
  %v703 = vsel %vm401, %v687, 0.0
  %704 = vadd.xlane.f32.xlu0 %v703
  %v705 = vpop.xlane.xlu0 %704
  %v706 = vrcp.pop %v690
  %v707 = vrcp.pop %v693
  %v708 = vrcp.pop %v696
  %v709 = vrcp.pop %v699
  %v710 = vrcp.pop %v702
  %v711 = vrcp.pop %v705
  %v712 = vmul.f32 %v677, %v706
  %v713 = vmul.f32 %v679, %v707
  %v714 = vmul.f32 %v681, %v708
  %v715 = vmul.f32 %v683, %v709
  %v716 = vmul.f32 %v685, %v710
  %v717 = vmul.f32 %v687, %v711
  %718 = vrot.lane.b32.xlu0 %v545, 48
  %v719 = vpop.permute.xlu0 %718
  %720 = vrot.lane.b32.xlu0 %v546, 48
  %v721 = vpop.permute.xlu0 %720
  %722 = vrot.lane.b32.xlu0 %v547, 48
  %v723 = vpop.permute.xlu0 %722
  %724 = vrot.lane.b32.xlu0 %v548, 48
  %v725 = vpop.permute.xlu0 %724
  %726 = vrot.lane.b32.xlu0 %v549, 48
  %v727 = vpop.permute.xlu0 %726
  %728 = vrot.lane.b32.xlu0 %v550, 48
  %v729 = vpop.permute.xlu0 %728
  %v737 = vsel %vm401, %v712, 0
  %v740 = vsel %vm401, %v713, 0
  %v743 = vsel %vm401, %v714, 0
  %v746 = vsel %vm401, %v715, 0
  %v749 = vsel %vm401, %v716, 0
  %v752 = vsel %vm401, %v717, 0
  %754 = vmatpush.msra.mxu0 0.0
  %755 = vmatpush.msra.mxu0 0.0
  %756 = vmatpush.msra.mxu0 0.0
  %757 = vmatpush.msra.mxu0 0.0
  %758 = vmatpush.msra.mxu0 0.0
  %759 = vmatpush.msra.mxu0 0.0
  %760 = vmatpush.msra.mxu0 0.0
  %761 = vmatpush.msra.mxu0 0.0
  %762 = vmatpush.msra.mxu0 0.0
  %763 = vmatpush.msra.mxu0 0.0
  %764 = vmatpush.msra.mxu0 %v729
  %765 = vmatpush.msra.mxu0 %v727
  %766 = vmatpush.msra.mxu0 %v725
  %767 = vmatpush.msra.mxu0 %v723
  %768 = vmatpush.msra.mxu0 %v721
  %769 = vmatpush.msra.mxu0 %v719
  %770 = vmatmul.f32.gmra.mxu0 %v737
  %v771 = vpop.f32.mrf.mxu0
  %v772 = vadd.f32 0.0, %v771
  %773 = vmatmul.f32.gmra.mxu0 %v740
  %v774 = vpop.f32.mrf.mxu0
  %v775 = vadd.f32 0.0, %v774
  %776 = vmatmul.f32.gmra.mxu0 %v743
  %v777 = vpop.f32.mrf.mxu0
  %v778 = vadd.f32 0.0, %v777
  %779 = vmatmul.f32.gmra.mxu0 %v746
  %v780 = vpop.f32.mrf.mxu0
  %v781 = vadd.f32 0.0, %v780
  %782 = vmatmul.f32.gmra.mxu0 %v749
  %v783 = vpop.f32.mrf.mxu0
  %v784 = vadd.f32 0.0, %v783
  %785 = vmatmul.f32.gmra.mxu0 %v752
  %v786 = vpop.f32.mrf.mxu0
  %v787 = vadd.f32 0.0, %v786
  %788 = vdwg.mxu0
  %795 = vrot.lane.b32.xlu0 %v772, 16
  %v796 = vpop.permute.xlu0 %795
  %797 = vrot.lane.b32.xlu0 %v775, 16
  %v798 = vpop.permute.xlu0 %797
  %799 = vrot.lane.b32.xlu0 %v778, 16
  %v800 = vpop.permute.xlu0 %799
  %801 = vrot.lane.b32.xlu0 %v781, 16
  %v802 = vpop.permute.xlu0 %801
  %803 = vrot.lane.b32.xlu0 %v784, 16
  %v804 = vpop.permute.xlu0 %803
  %805 = vrot.lane.b32.xlu0 %v787, 16
  %v806 = vpop.permute.xlu0 %805
  %vm813 = vcmask 261248
  %814 = vst.msk [vmem:[#allocation3] sm:$0xff] %vm813, %v796
  %815 = vst.msk [vmem:[#allocation3 + $0x8] sm:$0xff] %vm813, %v798
  %816 = vst.msk [vmem:[#allocation3 + $0x10] sm:$0xff] %vm813, %v800
  %817 = vst.msk [vmem:[#allocation3 + $0x18] sm:$0xff] %vm813, %v802
  %818 = vst.msk [vmem:[#allocation3 + $0x20] sm:$0xff] %vm813, %v804
  %819 = vst.msk [vmem:[#allocation3 + $0x28] sm:$0xff] %vm813, %v806
  %v820 = vld [vmem:[#allocation3] sm:$0xff]
  %v821 = vld [vmem:[#allocation3 + $0x8] sm:$0xff]
  %v822 = vld [vmem:[#allocation3 + $0x10] sm:$0xff]
  %v823 = vld [vmem:[#allocation3 + $0x18] sm:$0xff]
  %v824 = vld [vmem:[#allocation3 + $0x20] sm:$0xff]
  %v825 = vld [vmem:[#allocation3 + $0x28] sm:$0xff]
  %v826 = vld [vmem:[%s6] sm:$0xff]
  %v827 = vld [vmem:[%s6 + $0x8] sm:$0xff]
  %v828 = vld [vmem:[%s6 + $0x10] sm:$0xff]
  %v829 = vld [vmem:[%s6 + $0x18] sm:$0xff]
  %v830 = vld [vmem:[%s7] sm:$0x1]
  %v832 = vperm.slane %v830, 0
  %v835 = vsel %vm79, %v820, 0
  %v838 = vsel %vm79, %v821, 0
  %v841 = vsel %vm79, %v822, 0
  %v844 = vsel %vm79, %v823, 0
  %v847 = vsel %vm79, %v824, 0
  %v850 = vsel %vm79, %v825, 0
  %852 = vmatpush.msra.mxu0 0.0
  %853 = vmatpush.msra.mxu0 0.0
  %854 = vmatpush.msra.mxu0 0.0
  %855 = vmatpush.msra.mxu0 0.0
  %856 = vmatpush.msra.mxu0 0.0
  %857 = vmatpush.msra.mxu0 0.0
  %858 = vmatpush.msra.mxu0 0.0
  %859 = vmatpush.msra.mxu0 0.0
  %860 = vmatpush.msra.mxu0 0.0
  %861 = vmatpush.msra.mxu0 0.0
  %862 = vmatpush.msra.mxu0 0.0
  %863 = vmatpush.msra.mxu0 0.0
  %864 = vmatpush.msra.mxu0 %v829
  %865 = vmatpush.msra.mxu0 %v828
  %866 = vmatpush.msra.mxu0 %v827
  %867 = vmatpush.msra.mxu0 %v826
  %868 = vmatmul.f32.gmra.mxu0 %v835
  %v869 = vpop.f32.mrf.mxu0
  %v870 = vadd.f32 %v832, %v869
  %871 = vmatmul.f32.gmra.mxu0 %v838
  %v872 = vpop.f32.mrf.mxu0
  %v873 = vadd.f32 %v832, %v872
  %874 = vmatmul.f32.gmra.mxu0 %v841
  %v875 = vpop.f32.mrf.mxu0
  %v876 = vadd.f32 %v832, %v875
  %877 = vmatmul.f32.gmra.mxu0 %v844
  %v878 = vpop.f32.mrf.mxu0
  %v879 = vadd.f32 %v832, %v878
  %880 = vmatmul.f32.gmra.mxu0 %v847
  %v881 = vpop.f32.mrf.mxu0
  %v882 = vadd.f32 %v832, %v881
  %883 = vmatmul.f32.gmra.mxu0 %v850
  %v884 = vpop.f32.mrf.mxu0
  %v885 = vadd.f32 %v832, %v884
  %886 = vdwg.mxu0
  %v887 = vadd.f32 %v231, %v870
  %v888 = vadd.f32 %v232, %v873
  %v889 = vadd.f32 %v233, %v876
  %v890 = vadd.f32 %v234, %v879
  %v891 = vadd.f32 %v235, %v882
  %v892 = vadd.f32 %v236, %v885
  %v893 = vld [vmem:[%s8] sm:$0x1]
  %v894 = vld [vmem:[%s9] sm:$0x1]
  %v895 = vsel %vm79, %v887, 0.0
  %896 = vadd.xlane.f32.xlu0 %v895
  %v897 = vpop.xlane.xlu0 %896
  %v898 = vsel %vm79, %v888, 0.0
  %899 = vadd.xlane.f32.xlu0 %v898
  %v900 = vpop.xlane.xlu0 %899
  %v901 = vsel %vm79, %v889, 0.0
  %902 = vadd.xlane.f32.xlu0 %v901
  %v903 = vpop.xlane.xlu0 %902
  %v904 = vsel %vm79, %v890, 0.0
  %905 = vadd.xlane.f32.xlu0 %v904
  %v906 = vpop.xlane.xlu0 %905
  %v907 = vsel %vm79, %v891, 0.0
  %908 = vadd.xlane.f32.xlu0 %v907
  %v909 = vpop.xlane.xlu0 %908
  %v910 = vsel %vm79, %v892, 0.0
  %911 = vadd.xlane.f32.xlu0 %v910
  %v912 = vpop.xlane.xlu0 %911
  %v913 = vmul.f32 %v897, %v104
  %v914 = vmul.f32 %v900, %v104
  %v915 = vmul.f32 %v903, %v104
  %v916 = vmul.f32 %v906, %v104
  %v917 = vmul.f32 %v909, %v104
  %v918 = vmul.f32 %v912, %v104
  %v919 = vsub.f32 %v887, %v913
  %v920 = vsub.f32 %v888, %v914
  %v921 = vsub.f32 %v889, %v915
  %v922 = vsub.f32 %v890, %v916
  %v923 = vsub.f32 %v891, %v917
  %v924 = vsub.f32 %v892, %v918
  %v925 = vmul.f32 %v919, %v919
  %v926 = vmul.f32 %v920, %v920
  %v927 = vmul.f32 %v921, %v921
  %v928 = vmul.f32 %v922, %v922
  %v929 = vmul.f32 %v923, %v923
  %v930 = vmul.f32 %v924, %v924
  %v931 = vsel %vm79, %v925, 0.0
  %932 = vadd.xlane.f32.xlu0 %v931
  %v933 = vpop.xlane.xlu0 %932
  %v934 = vsel %vm79, %v926, 0.0
  %935 = vadd.xlane.f32.xlu0 %v934
  %v936 = vpop.xlane.xlu0 %935
  %v937 = vsel %vm79, %v927, 0.0
  %938 = vadd.xlane.f32.xlu0 %v937
  %v939 = vpop.xlane.xlu0 %938
  %v940 = vsel %vm79, %v928, 0.0
  %941 = vadd.xlane.f32.xlu0 %v940
  %v942 = vpop.xlane.xlu0 %941
  %v943 = vsel %vm79, %v929, 0.0
  %944 = vadd.xlane.f32.xlu0 %v943
  %v945 = vpop.xlane.xlu0 %944
  %v946 = vsel %vm79, %v930, 0.0
  %947 = vadd.xlane.f32.xlu0 %v946
  %v948 = vpop.xlane.xlu0 %947
  %v949 = vmul.f32 %v933, %v104
  %v950 = vmul.f32 %v936, %v104
  %v951 = vmul.f32 %v939, %v104
  %v952 = vmul.f32 %v942, %v104
  %v953 = vmul.f32 %v945, %v104
  %v954 = vmul.f32 %v948, %v104
  %v955 = vadd.f32 %v949, 1e-12
  %v956 = vadd.f32 %v950, 1e-12
  %v957 = vadd.f32 %v951, 1e-12
  %v958 = vadd.f32 %v952, 1e-12
  %v959 = vadd.f32 %v953, 1e-12
  %v960 = vadd.f32 %v954, 1e-12
  %v961 = vrsqrt.pop %v955
  %v962 = vmul.f32 %v961, %v955
  %v963 = vmul.f32 %v962, %v961
  %v964 = vmul.f32 0.5, %v963
  %v965 = vsub.f32 1.5, %v964
  %v966 = vmul.f32 %v961, %v965
  %vm967 = vweird.f32 %v955
  %vm968 = vweird.f32 %v961
  %vm969 = vmor %vm967, %vm968
  %v970 = vsel %vm969, %v961, %v966
  %v971 = vrsqrt.pop %v956
  %v972 = vmul.f32 %v971, %v956
  %v973 = vmul.f32 %v972, %v971
  %v974 = vmul.f32 0.5, %v973
  %v975 = vsub.f32 1.5, %v974
  %v976 = vmul.f32 %v971, %v975
  %vm977 = vweird.f32 %v956
  %vm978 = vweird.f32 %v971
  %vm979 = vmor %vm977, %vm978
  %v980 = vsel %vm979, %v971, %v976
  %v981 = vrsqrt.pop %v957
  %v982 = vmul.f32 %v981, %v957
  %v983 = vmul.f32 %v982, %v981
  %v984 = vmul.f32 0.5, %v983
  %v985 = vsub.f32 1.5, %v984
  %v986 = vmul.f32 %v981, %v985
  %vm987 = vweird.f32 %v957
  %vm988 = vweird.f32 %v981
  %vm989 = vmor %vm987, %vm988
  %v990 = vsel %vm989, %v981, %v986
  %v991 = vrsqrt.pop %v958
  %v992 = vmul.f32 %v991, %v958
  %v993 = vmul.f32 %v992, %v991
  %v994 = vmul.f32 0.5, %v993
  %v995 = vsub.f32 1.5, %v994
  %v996 = vmul.f32 %v991, %v995
  %vm997 = vweird.f32 %v958
  %vm998 = vweird.f32 %v991
  %vm999 = vmor %vm997, %vm998
  %v1000 = vsel %vm999, %v991, %v996
  %v1001 = vrsqrt.pop %v959
  %v1002 = vmul.f32 %v1001, %v959
  %v1003 = vmul.f32 %v1002, %v1001
  %v1004 = vmul.f32 0.5, %v1003
  %v1005 = vsub.f32 1.5, %v1004
  %v1006 = vmul.f32 %v1001, %v1005
  %vm1007 = vweird.f32 %v959
  %vm1008 = vweird.f32 %v1001
  %vm1009 = vmor %vm1007, %vm1008
  %v1010 = vsel %vm1009, %v1001, %v1006
  %v1011 = vrsqrt.pop %v960
  %v1012 = vmul.f32 %v1011, %v960
  %v1013 = vmul.f32 %v1012, %v1011
  %v1014 = vmul.f32 0.5, %v1013
  %v1015 = vsub.f32 1.5, %v1014
  %v1016 = vmul.f32 %v1011, %v1015
  %vm1017 = vweird.f32 %v960
  %vm1018 = vweird.f32 %v1011
  %vm1019 = vmor %vm1017, %vm1018
  %v1020 = vsel %vm1019, %v1011, %v1016
  %v1021 = vmul.f32 %v919, %v970
  %v1022 = vmul.f32 %v920, %v980
  %v1023 = vmul.f32 %v921, %v990
  %v1024 = vmul.f32 %v922, %v1000
  %v1025 = vmul.f32 %v923, %v1010
  %v1026 = vmul.f32 %v924, %v1020
  %v1028 = vperm.slane %v893, 0
  %v1030 = vmul.f32 %v1021, %v1028
  %v1031 = vmul.f32 %v1022, %v1028
  %v1032 = vmul.f32 %v1023, %v1028
  %v1033 = vmul.f32 %v1024, %v1028
  %v1034 = vmul.f32 %v1025, %v1028
  %v1035 = vmul.f32 %v1026, %v1028
  %v1037 = vperm.slane %v894, 0
  %v1039 = vadd.f32 %v1030, %v1037
  %v1040 = vadd.f32 %v1031, %v1037
  %v1041 = vadd.f32 %v1032, %v1037
  %v1042 = vadd.f32 %v1033, %v1037
  %v1043 = vadd.f32 %v1034, %v1037
  %v1044 = vadd.f32 %v1035, %v1037
  %v1045 = vld [vmem:[%s10] sm:$0xff]
  %v1046 = vld [vmem:[%s10 + $0x8] sm:$0xff]
  %v1047 = vld [vmem:[%s10 + $0x10] sm:$0xff]
  %v1048 = vld [vmem:[%s10 + $0x18] sm:$0xff]
  %v1049 = vld [vmem:[%s11] sm:$0x1]
  %v1051 = vperm.slane %v1049, 0
  %v1054 = vsel %vm79, %v1039, 0
  %v1057 = vsel %vm79, %v1040, 0
  %v1060 = vsel %vm79, %v1041, 0
  %v1063 = vsel %vm79, %v1042, 0
  %v1066 = vsel %vm79, %v1043, 0
  %v1069 = vsel %vm79, %v1044, 0
  %1071 = vmatpush.msra.mxu0 0.0
  %1072 = vmatpush.msra.mxu0 0.0
  %1073 = vmatpush.msra.mxu0 0.0
  %1074 = vmatpush.msra.mxu0 0.0
  %1075 = vmatpush.msra.mxu0 0.0
  %1076 = vmatpush.msra.mxu0 0.0
  %1077 = vmatpush.msra.mxu0 0.0
  %1078 = vmatpush.msra.mxu0 0.0
  %1079 = vmatpush.msra.mxu0 0.0
  %1080 = vmatpush.msra.mxu0 0.0
  %1081 = vmatpush.msra.mxu0 0.0
  %1082 = vmatpush.msra.mxu0 0.0
  %1083 = vmatpush.msra.mxu0 %v1048
  %1084 = vmatpush.msra.mxu0 %v1047
  %1085 = vmatpush.msra.mxu0 %v1046
  %1086 = vmatpush.msra.mxu0 %v1045
  %1087 = vmatmul.f32.gmra.mxu0 %v1054
  %v1088 = vpop.f32.mrf.mxu0
  %v1089 = vadd.f32 %v1051, %v1088
  %1090 = vmatmul.f32.gmra.mxu0 %v1057
  %v1091 = vpop.f32.mrf.mxu0
  %v1092 = vadd.f32 %v1051, %v1091
  %1093 = vmatmul.f32.gmra.mxu0 %v1060
  %v1094 = vpop.f32.mrf.mxu0
  %v1095 = vadd.f32 %v1051, %v1094
  %1096 = vmatmul.f32.gmra.mxu0 %v1063
  %v1097 = vpop.f32.mrf.mxu0
  %v1098 = vadd.f32 %v1051, %v1097
  %1099 = vmatmul.f32.gmra.mxu0 %v1066
  %v1100 = vpop.f32.mrf.mxu0
  %v1101 = vadd.f32 %v1051, %v1100
  %1102 = vmatmul.f32.gmra.mxu0 %v1069
  %v1103 = vpop.f32.mrf.mxu0
  %v1104 = vadd.f32 %v1051, %v1103
  %1105 = vdwg.mxu0
  %v1106 = vmul.f32 %v1089, 0.5
  %v1107 = vmul.f32 %v1092, 0.5
  %v1108 = vmul.f32 %v1095, 0.5
  %v1109 = vmul.f32 %v1098, 0.5
  %v1110 = vmul.f32 %v1101, 0.5
  %v1111 = vmul.f32 %v1104, 0.5
  %v1112 = vmul.f32 %v1089, 0.044715
  %v1113 = vmul.f32 %v1092, 0.044715
  %v1114 = vmul.f32 %v1095, 0.044715
  %v1115 = vmul.f32 %v1098, 0.044715
  %v1116 = vmul.f32 %v1101, 0.044715
  %v1117 = vmul.f32 %v1104, 0.044715
  %v1118 = vmul.f32 %v1112, %v1089
  %v1119 = vmul.f32 %v1113, %v1092
  %v1120 = vmul.f32 %v1114, %v1095
  %v1121 = vmul.f32 %v1115, %v1098
  %v1122 = vmul.f32 %v1116, %v1101
  %v1123 = vmul.f32 %v1117, %v1104
  %v1124 = vmul.f32 %v1118, %v1089
  %v1125 = vmul.f32 %v1119, %v1092
  %v1126 = vmul.f32 %v1120, %v1095
  %v1127 = vmul.f32 %v1121, %v1098
  %v1128 = vmul.f32 %v1122, %v1101
  %v1129 = vmul.f32 %v1123, %v1104
  %v1130 = vadd.f32 %v1089, %v1124
  %v1131 = vadd.f32 %v1092, %v1125
  %v1132 = vadd.f32 %v1095, %v1126
  %v1133 = vadd.f32 %v1098, %v1127
  %v1134 = vadd.f32 %v1101, %v1128
  %v1135 = vadd.f32 %v1104, %v1129
  %v1136 = vmul.f32 %v1130, 0.7978846
  %v1137 = vmul.f32 %v1131, 0.7978846
  %v1138 = vmul.f32 %v1132, 0.7978846
  %v1139 = vmul.f32 %v1133, 0.7978846
  %v1140 = vmul.f32 %v1134, 0.7978846
  %v1141 = vmul.f32 %v1135, 0.7978846
  %v1142 = vtanh.pop %v1136
  %v1143 = vtanh.pop %v1137
  %v1144 = vtanh.pop %v1138
  %v1145 = vtanh.pop %v1139
  %v1146 = vtanh.pop %v1140
  %v1147 = vtanh.pop %v1141
  %v1148 = vadd.f32 %v1142, 1.0
  %v1149 = vadd.f32 %v1143, 1.0
  %v1150 = vadd.f32 %v1144, 1.0
  %v1151 = vadd.f32 %v1145, 1.0
  %v1152 = vadd.f32 %v1146, 1.0
  %v1153 = vadd.f32 %v1147, 1.0
  %v1154 = vmul.f32 %v1106, %v1148
  %v1155 = vmul.f32 %v1107, %v1149
  %v1156 = vmul.f32 %v1108, %v1150
  %v1157 = vmul.f32 %v1109, %v1151
  %v1158 = vmul.f32 %v1110, %v1152
  %v1159 = vmul.f32 %v1111, %v1153
  %v1160 = vld [vmem:[%s12] sm:$0xff]
  %v1161 = vld [vmem:[%s12 + $0x8] sm:$0xff]
  %v1162 = vld [vmem:[%s12 + $0x10] sm:$0xff]
  %v1163 = vld [vmem:[%s12 + $0x18] sm:$0xff]
  %v1164 = vld [vmem:[%s12 + $0x20] sm:$0xff]
  %v1165 = vld [vmem:[%s12 + $0x28] sm:$0xff]
  %v1166 = vld [vmem:[%s12 + $0x30] sm:$0xff]
  %v1167 = vld [vmem:[%s12 + $0x38] sm:$0xff]
  %v1168 = vld [vmem:[%s13] sm:$0x1]
  %v1170 = vperm.slane %v1168, 0
  %vm1172 = vcmask 523264
  %v1174 = vsel %vm1172, %v1154, 0
  %v1177 = vsel %vm1172, %v1155, 0
  %v1180 = vsel %vm1172, %v1156, 0
  %v1183 = vsel %vm1172, %v1157, 0
  %v1186 = vsel %vm1172, %v1158, 0
  %v1189 = vsel %vm1172, %v1159, 0
  %1191 = vmatpush.msra.mxu0 0.0
  %1192 = vmatpush.msra.mxu0 0.0
  %1193 = vmatpush.msra.mxu0 0.0
  %1194 = vmatpush.msra.mxu0 0.0
  %1195 = vmatpush.msra.mxu0 0.0
  %1196 = vmatpush.msra.mxu0 0.0
  %1197 = vmatpush.msra.mxu0 0.0
  %1198 = vmatpush.msra.mxu0 0.0
  %1199 = vmatpush.msra.mxu0 %v1167
  %1200 = vmatpush.msra.mxu0 %v1166
  %1201 = vmatpush.msra.mxu0 %v1165
  %1202 = vmatpush.msra.mxu0 %v1164
  %1203 = vmatpush.msra.mxu0 %v1163
  %1204 = vmatpush.msra.mxu0 %v1162
  %1205 = vmatpush.msra.mxu0 %v1161
  %1206 = vmatpush.msra.mxu0 %v1160
  %1207 = vmatmul.f32.gmra.mxu0 %v1174
  %v1208 = vpop.f32.mrf.mxu0
  %v1209 = vadd.f32 %v1170, %v1208
  %1210 = vmatmul.f32.gmra.mxu0 %v1177
  %v1211 = vpop.f32.mrf.mxu0
  %v1212 = vadd.f32 %v1170, %v1211
  %1213 = vmatmul.f32.gmra.mxu0 %v1180
  %v1214 = vpop.f32.mrf.mxu0
  %v1215 = vadd.f32 %v1170, %v1214
  %1216 = vmatmul.f32.gmra.mxu0 %v1183
  %v1217 = vpop.f32.mrf.mxu0
  %v1218 = vadd.f32 %v1170, %v1217
  %1219 = vmatmul.f32.gmra.mxu0 %v1186
  %v1220 = vpop.f32.mrf.mxu0
  %v1221 = vadd.f32 %v1170, %v1220
  %1222 = vmatmul.f32.gmra.mxu0 %v1189
  %v1223 = vpop.f32.mrf.mxu0
  %v1224 = vadd.f32 %v1170, %v1223
  %1225 = vdwg.mxu0
  %v1226 = vadd.f32 %v1039, %v1209
  %v1227 = vadd.f32 %v1040, %v1212
  %v1228 = vadd.f32 %v1041, %v1215
  %v1229 = vadd.f32 %v1042, %v1218
  %v1230 = vadd.f32 %v1043, %v1221
  %v1231 = vadd.f32 %v1044, %v1224
  %v1232 = vld [vmem:[%s14] sm:$0x1]
  %v1233 = vld [vmem:[%s15] sm:$0x1]
  %v1234 = vsel %vm79, %v1226, 0.0
  %1235 = vadd.xlane.f32.xlu0 %v1234
  %v1236 = vpop.xlane.xlu0 %1235
  %v1237 = vsel %vm79, %v1227, 0.0
  %1238 = vadd.xlane.f32.xlu0 %v1237
  %v1239 = vpop.xlane.xlu0 %1238
  %v1240 = vsel %vm79, %v1228, 0.0
  %1241 = vadd.xlane.f32.xlu0 %v1240
  %v1242 = vpop.xlane.xlu0 %1241
  %v1243 = vsel %vm79, %v1229, 0.0
  %1244 = vadd.xlane.f32.xlu0 %v1243
  %v1245 = vpop.xlane.xlu0 %1244
  %v1246 = vsel %vm79, %v1230, 0.0
  %1247 = vadd.xlane.f32.xlu0 %v1246
  %v1248 = vpop.xlane.xlu0 %1247
  %v1249 = vsel %vm79, %v1231, 0.0
  %1250 = vadd.xlane.f32.xlu0 %v1249
  %v1251 = vpop.xlane.xlu0 %1250
  %v1252 = vmul.f32 %v1236, %v104
  %v1253 = vmul.f32 %v1239, %v104
  %v1254 = vmul.f32 %v1242, %v104
  %v1255 = vmul.f32 %v1245, %v104
  %v1256 = vmul.f32 %v1248, %v104
  %v1257 = vmul.f32 %v1251, %v104
  %v1258 = vsub.f32 %v1226, %v1252
  %v1259 = vsub.f32 %v1227, %v1253
  %v1260 = vsub.f32 %v1228, %v1254
  %v1261 = vsub.f32 %v1229, %v1255
  %v1262 = vsub.f32 %v1230, %v1256
  %v1263 = vsub.f32 %v1231, %v1257
  %v1264 = vmul.f32 %v1258, %v1258
  %v1265 = vmul.f32 %v1259, %v1259
  %v1266 = vmul.f32 %v1260, %v1260
  %v1267 = vmul.f32 %v1261, %v1261
  %v1268 = vmul.f32 %v1262, %v1262
  %v1269 = vmul.f32 %v1263, %v1263
  %v1270 = vsel %vm79, %v1264, 0.0
  %1271 = vadd.xlane.f32.xlu0 %v1270
  %v1272 = vpop.xlane.xlu0 %1271
  %v1273 = vsel %vm79, %v1265, 0.0
  %1274 = vadd.xlane.f32.xlu0 %v1273
  %v1275 = vpop.xlane.xlu0 %1274
  %v1276 = vsel %vm79, %v1266, 0.0
  %1277 = vadd.xlane.f32.xlu0 %v1276
  %v1278 = vpop.xlane.xlu0 %1277
  %v1279 = vsel %vm79, %v1267, 0.0
  %1280 = vadd.xlane.f32.xlu0 %v1279
  %v1281 = vpop.xlane.xlu0 %1280
  %v1282 = vsel %vm79, %v1268, 0.0
  %1283 = vadd.xlane.f32.xlu0 %v1282
  %v1284 = vpop.xlane.xlu0 %1283
  %v1285 = vsel %vm79, %v1269, 0.0
  %1286 = vadd.xlane.f32.xlu0 %v1285
  %v1287 = vpop.xlane.xlu0 %1286
  %v1288 = vmul.f32 %v1272, %v104
  %v1289 = vmul.f32 %v1275, %v104
  %v1290 = vmul.f32 %v1278, %v104
  %v1291 = vmul.f32 %v1281, %v104
  %v1292 = vmul.f32 %v1284, %v104
  %v1293 = vmul.f32 %v1287, %v104
  %v1294 = vadd.f32 %v1288, 1e-12
  %v1295 = vadd.f32 %v1289, 1e-12
  %v1296 = vadd.f32 %v1290, 1e-12
  %v1297 = vadd.f32 %v1291, 1e-12
  %v1298 = vadd.f32 %v1292, 1e-12
  %v1299 = vadd.f32 %v1293, 1e-12
  %v1300 = vrsqrt.pop %v1294
  %v1301 = vmul.f32 %v1300, %v1294
  %v1302 = vmul.f32 %v1301, %v1300
  %v1303 = vmul.f32 0.5, %v1302
  %v1304 = vsub.f32 1.5, %v1303
  %v1305 = vmul.f32 %v1300, %v1304
  %vm1306 = vweird.f32 %v1294
  %vm1307 = vweird.f32 %v1300
  %vm1308 = vmor %vm1306, %vm1307
  %v1309 = vsel %vm1308, %v1300, %v1305
  %v1310 = vrsqrt.pop %v1295
  %v1311 = vmul.f32 %v1310, %v1295
  %v1312 = vmul.f32 %v1311, %v1310
  %v1313 = vmul.f32 0.5, %v1312
  %v1314 = vsub.f32 1.5, %v1313
  %v1315 = vmul.f32 %v1310, %v1314
  %vm1316 = vweird.f32 %v1295
  %vm1317 = vweird.f32 %v1310
  %vm1318 = vmor %vm1316, %vm1317
  %v1319 = vsel %vm1318, %v1310, %v1315
  %v1320 = vrsqrt.pop %v1296
  %v1321 = vmul.f32 %v1320, %v1296
  %v1322 = vmul.f32 %v1321, %v1320
  %v1323 = vmul.f32 0.5, %v1322
  %v1324 = vsub.f32 1.5, %v1323
  %v1325 = vmul.f32 %v1320, %v1324
  %vm1326 = vweird.f32 %v1296
  %vm1327 = vweird.f32 %v1320
  %vm1328 = vmor %vm1326, %vm1327
  %v1329 = vsel %vm1328, %v1320, %v1325
  %v1330 = vrsqrt.pop %v1297
  %v1331 = vmul.f32 %v1330, %v1297
  %v1332 = vmul.f32 %v1331, %v1330
  %v1333 = vmul.f32 0.5, %v1332
  %v1334 = vsub.f32 1.5, %v1333
  %v1335 = vmul.f32 %v1330, %v1334
  %vm1336 = vweird.f32 %v1297
  %vm1337 = vweird.f32 %v1330
  %vm1338 = vmor %vm1336, %vm1337
  %v1339 = vsel %vm1338, %v1330, %v1335
  %v1340 = vrsqrt.pop %v1298
  %v1341 = vmul.f32 %v1340, %v1298
  %v1342 = vmul.f32 %v1341, %v1340
  %v1343 = vmul.f32 0.5, %v1342
  %v1344 = vsub.f32 1.5, %v1343
  %v1345 = vmul.f32 %v1340, %v1344
  %vm1346 = vweird.f32 %v1298
  %vm1347 = vweird.f32 %v1340
  %vm1348 = vmor %vm1346, %vm1347
  %v1349 = vsel %vm1348, %v1340, %v1345
  %v1350 = vrsqrt.pop %v1299
  %v1351 = vmul.f32 %v1350, %v1299
  %v1352 = vmul.f32 %v1351, %v1350
  %v1353 = vmul.f32 0.5, %v1352
  %v1354 = vsub.f32 1.5, %v1353
  %v1355 = vmul.f32 %v1350, %v1354
  %vm1356 = vweird.f32 %v1299
  %vm1357 = vweird.f32 %v1350
  %vm1358 = vmor %vm1356, %vm1357
  %v1359 = vsel %vm1358, %v1350, %v1355
  %v1360 = vmul.f32 %v1258, %v1309
  %v1361 = vmul.f32 %v1259, %v1319
  %v1362 = vmul.f32 %v1260, %v1329
  %v1363 = vmul.f32 %v1261, %v1339
  %v1364 = vmul.f32 %v1262, %v1349
  %v1365 = vmul.f32 %v1263, %v1359
  %v1367 = vperm.slane %v1232, 0
  %v1369 = vmul.f32 %v1360, %v1367
  %v1370 = vmul.f32 %v1361, %v1367
  %v1371 = vmul.f32 %v1362, %v1367
  %v1372 = vmul.f32 %v1363, %v1367
  %v1373 = vmul.f32 %v1364, %v1367
  %v1374 = vmul.f32 %v1365, %v1367
  %v1376 = vperm.slane %v1233, 0
  %v1378 = vadd.f32 %v1369, %v1376
  %v1379 = vadd.f32 %v1370, %v1376
  %v1380 = vadd.f32 %v1371, %v1376
  %v1381 = vadd.f32 %v1372, %v1376
  %v1382 = vadd.f32 %v1373, %v1376
  %v1383 = vadd.f32 %v1374, %v1376
  %s1384 = scalar_lea.vmem %s4, 32
  %v1385 = vld [vmem:[%s1384] sm:$0xff]
  %v1386 = vld [vmem:[%s1384 + $0x8] sm:$0xff]
  %v1387 = vld [vmem:[%s1384 + $0x10] sm:$0xff]
  %v1388 = vld [vmem:[%s1384 + $0x18] sm:$0xff]
  %s1389 = scalar_lea.vmem %s5, 1
  %v1390 = vld [vmem:[%s1389] sm:$0x1]
  %v1392 = vperm.slane %v1390, 0
  %v1395 = vsel %vm79, %v1378, 0
  %v1398 = vsel %vm79, %v1379, 0
  %v1401 = vsel %vm79, %v1380, 0
  %v1404 = vsel %vm79, %v1381, 0
  %v1407 = vsel %vm79, %v1382, 0
  %v1410 = vsel %vm79, %v1383, 0
  %1412 = vmatpush.msra.mxu0 0.0
  %1413 = vmatpush.msra.mxu0 0.0
  %1414 = vmatpush.msra.mxu0 0.0
  %1415 = vmatpush.msra.mxu0 0.0
  %1416 = vmatpush.msra.mxu0 0.0
  %1417 = vmatpush.msra.mxu0 0.0
  %1418 = vmatpush.msra.mxu0 0.0
  %1419 = vmatpush.msra.mxu0 0.0
  %1420 = vmatpush.msra.mxu0 0.0
  %1421 = vmatpush.msra.mxu0 0.0
  %1422 = vmatpush.msra.mxu0 0.0
  %1423 = vmatpush.msra.mxu0 0.0
  %1424 = vmatpush.msra.mxu0 %v1388
  %1425 = vmatpush.msra.mxu0 %v1387
  %1426 = vmatpush.msra.mxu0 %v1386
  %1427 = vmatpush.msra.mxu0 %v1385
  %1428 = vmatmul.f32.gmra.mxu0 %v1395
  %v1429 = vpop.f32.mrf.mxu0
  %v1430 = vadd.f32 %v1392, %v1429
  %1431 = vmatmul.f32.gmra.mxu0 %v1398
  %v1432 = vpop.f32.mrf.mxu0
  %v1433 = vadd.f32 %v1392, %v1432
  %1434 = vmatmul.f32.gmra.mxu0 %v1401
  %v1435 = vpop.f32.mrf.mxu0
  %v1436 = vadd.f32 %v1392, %v1435
  %1437 = vmatmul.f32.gmra.mxu0 %v1404
  %v1438 = vpop.f32.mrf.mxu0
  %v1439 = vadd.f32 %v1392, %v1438
  %1440 = vmatmul.f32.gmra.mxu0 %v1407
  %v1441 = vpop.f32.mrf.mxu0
  %v1442 = vadd.f32 %v1392, %v1441
  %1443 = vmatmul.f32.gmra.mxu0 %v1410
  %v1444 = vpop.f32.mrf.mxu0
  %v1445 = vadd.f32 %v1392, %v1444
  %1446 = vdwg.mxu0
  %1447 = vst.msk [vmem:[#allocation2] sm:$0xff] %vm298, %v1430
  %1448 = vst.msk [vmem:[#allocation2 + $0x8] sm:$0xff] %vm298, %v1433
  %1449 = vst.msk [vmem:[#allocation2 + $0x10] sm:$0xff] %vm298, %v1436
  %1450 = vst.msk [vmem:[#allocation2 + $0x18] sm:$0xff] %vm298, %v1439
  %1451 = vst.msk [vmem:[#allocation2 + $0x20] sm:$0xff] %vm298, %v1442
  %1452 = vst.msk [vmem:[#allocation2 + $0x28] sm:$0xff] %vm298, %v1445
  %v1453 = vld [vmem:[#allocation2] sm:$0xff]
  %v1454 = vld [vmem:[#allocation2 + $0x8] sm:$0xff]
  %v1455 = vld [vmem:[#allocation2 + $0x10] sm:$0xff]
  %v1456 = vld [vmem:[#allocation2 + $0x18] sm:$0xff]
  %v1457 = vld [vmem:[#allocation2 + $0x20] sm:$0xff]
  %v1458 = vld [vmem:[#allocation2 + $0x28] sm:$0xff]
  %1465 = vrot.lane.b32.xlu0 %v1453, 96
  %v1466 = vpop.permute.xlu0 %1465
  %1467 = vrot.lane.b32.xlu0 %v1454, 96
  %v1468 = vpop.permute.xlu0 %1467
  %1469 = vrot.lane.b32.xlu0 %v1455, 96
  %v1470 = vpop.permute.xlu0 %1469
  %1471 = vrot.lane.b32.xlu0 %v1456, 96
  %v1472 = vpop.permute.xlu0 %1471
  %1473 = vrot.lane.b32.xlu0 %v1457, 96
  %v1474 = vpop.permute.xlu0 %1473
  %1475 = vrot.lane.b32.xlu0 %v1458, 96
  %v1476 = vpop.permute.xlu0 %1475
  %v1477 = vsel %vm329, %v1453, 0
  %v1479 = vsel %vm329, %v1454, 0
  %v1481 = vsel %vm329, %v1455, 0
  %v1483 = vsel %vm329, %v1456, 0
  %v1485 = vsel %vm329, %v1457, 0
  %v1487 = vsel %vm329, %v1458, 0
  %v1489 = vsel %vm329, %v1466, 0
  %v1491 = vsel %vm329, %v1468, 0
  %v1493 = vsel %vm329, %v1470, 0
  %v1495 = vsel %vm329, %v1472, 0
  %v1497 = vsel %vm329, %v1474, 0
  %v1499 = vsel %vm329, %v1476, 0
  %1501 = vmatpush.xpose.msra.mxu0 0.0
  %1502 = vmatpush.xpose.msra.mxu0 0.0
  %1503 = vmatpush.xpose.msra.mxu0 0.0
  %1504 = vmatpush.xpose.msra.mxu0 0.0
  %1505 = vmatpush.xpose.msra.mxu0 0.0
  %1506 = vmatpush.xpose.msra.mxu0 0.0
  %1507 = vmatpush.xpose.msra.mxu0 0.0
  %1508 = vmatpush.xpose.msra.mxu0 0.0
  %1509 = vmatpush.xpose.msra.mxu0 0.0
  %1510 = vmatpush.xpose.msra.mxu0 0.0
  %1511 = vmatpush.xpose.msra.mxu0 %v1499
  %1512 = vmatpush.xpose.msra.mxu0 %v1497
  %1513 = vmatpush.xpose.msra.mxu0 %v1495
  %1514 = vmatpush.xpose.msra.mxu0 %v1493
  %1515 = vmatpush.xpose.msra.mxu0 %v1491
  %1516 = vmatpush.xpose.msra.mxu0 %v1489
  %1517 = vmatmul.f32.gmra.mxu0 %v1477
  %v1518 = vpop.f32.mrf.mxu0
  %v1519 = vadd.f32 0.0, %v1518
  %1520 = vmatmul.f32.gmra.mxu0 %v1479
  %v1521 = vpop.f32.mrf.mxu0
  %v1522 = vadd.f32 0.0, %v1521
  %1523 = vmatmul.f32.gmra.mxu0 %v1481
  %v1524 = vpop.f32.mrf.mxu0
  %v1525 = vadd.f32 0.0, %v1524
  %1526 = vmatmul.f32.gmra.mxu0 %v1483
  %v1527 = vpop.f32.mrf.mxu0
  %v1528 = vadd.f32 0.0, %v1527
  %1529 = vmatmul.f32.gmra.mxu0 %v1485
  %v1530 = vpop.f32.mrf.mxu0
  %v1531 = vadd.f32 0.0, %v1530
  %1532 = vmatmul.f32.gmra.mxu0 %v1487
  %v1533 = vpop.f32.mrf.mxu0
  %v1534 = vadd.f32 0.0, %v1533
  %1535 = vdwg.mxu0
  %v1536 = vmul.f32 %v1519, 0.25
  %v1537 = vmul.f32 %v1522, 0.25
  %v1538 = vmul.f32 %v1525, 0.25
  %v1539 = vmul.f32 %v1528, 0.25
  %v1540 = vmul.f32 %v1531, 0.25
  %v1541 = vmul.f32 %v1534, 0.25
  %v1542 = vadd.f32 %v1536, %v65
  %v1543 = vadd.f32 %v1537, %v66
  %v1544 = vadd.f32 %v1538, %v67
  %v1545 = vadd.f32 %v1539, %v68
  %v1546 = vadd.f32 %v1540, %v69
  %v1547 = vadd.f32 %v1541, %v70
  %v1548 = vsel %vm401, %v1542, -inf
  %1549 = vmax.xlane.f32.xlu0 %v1548
  %v1550 = vpop.xlane.xlu0 %1549
  %v1551 = vsel %vm401, %v1543, -inf
  %1552 = vmax.xlane.f32.xlu0 %v1551
  %v1553 = vpop.xlane.xlu0 %1552
  %v1554 = vsel %vm401, %v1544, -inf
  %1555 = vmax.xlane.f32.xlu0 %v1554
  %v1556 = vpop.xlane.xlu0 %1555
  %v1557 = vsel %vm401, %v1545, -inf
  %1558 = vmax.xlane.f32.xlu0 %v1557
  %v1559 = vpop.xlane.xlu0 %1558
  %v1560 = vsel %vm401, %v1546, -inf
  %1561 = vmax.xlane.f32.xlu0 %v1560
  %v1562 = vpop.xlane.xlu0 %1561
  %v1563 = vsel %vm401, %v1547, -inf
  %1564 = vmax.xlane.f32.xlu0 %v1563
  %v1565 = vpop.xlane.xlu0 %1564
  %v1566 = vsub.f32 %v1542, %v1550
  %v1567 = vsub.f32 %v1543, %v1553
  %v1568 = vsub.f32 %v1544, %v1556
  %v1569 = vsub.f32 %v1545, %v1559
  %v1570 = vsub.f32 %v1546, %v1562
  %v1571 = vsub.f32 %v1547, %v1565
  %v1572 = vmul.f32 %v1566, 1.442695
  %v1573 = vpow.pop %v1572
  %v1574 = vmul.f32 %v1567, 1.442695
  %v1575 = vpow.pop %v1574
  %v1576 = vmul.f32 %v1568, 1.442695
  %v1577 = vpow.pop %v1576
  %v1578 = vmul.f32 %v1569, 1.442695
  %v1579 = vpow.pop %v1578
  %v1580 = vmul.f32 %v1570, 1.442695
  %v1581 = vpow.pop %v1580
  %v1582 = vmul.f32 %v1571, 1.442695
  %v1583 = vpow.pop %v1582
  %v1584 = vsel %vm401, %v1573, 0.0
  %1585 = vadd.xlane.f32.xlu0 %v1584
  %v1586 = vpop.xlane.xlu0 %1585
  %v1587 = vsel %vm401, %v1575, 0.0
  %1588 = vadd.xlane.f32.xlu0 %v1587
  %v1589 = vpop.xlane.xlu0 %1588
  %v1590 = vsel %vm401, %v1577, 0.0
  %1591 = vadd.xlane.f32.xlu0 %v1590
  %v1592 = vpop.xlane.xlu0 %1591
  %v1593 = vsel %vm401, %v1579, 0.0
  %1594 = vadd.xlane.f32.xlu0 %v1593
  %v1595 = vpop.xlane.xlu0 %1594
  %v1596 = vsel %vm401, %v1581, 0.0
  %1597 = vadd.xlane.f32.xlu0 %v1596
  %v1598 = vpop.xlane.xlu0 %1597
  %v1599 = vsel %vm401, %v1583, 0.0
  %1600 = vadd.xlane.f32.xlu0 %v1599
  %v1601 = vpop.xlane.xlu0 %1600
  %v1602 = vrcp.pop %v1586
  %v1603 = vrcp.pop %v1589
  %v1604 = vrcp.pop %v1592
  %v1605 = vrcp.pop %v1595
  %v1606 = vrcp.pop %v1598
  %v1607 = vrcp.pop %v1601
  %v1608 = vmul.f32 %v1573, %v1602
  %v1609 = vmul.f32 %v1575, %v1603
  %v1610 = vmul.f32 %v1577, %v1604
  %v1611 = vmul.f32 %v1579, %v1605
  %v1612 = vmul.f32 %v1581, %v1606
  %v1613 = vmul.f32 %v1583, %v1607
  %1614 = vrot.lane.b32.xlu0 %v1453, 64
  %v1615 = vpop.permute.xlu0 %1614
  %1616 = vrot.lane.b32.xlu0 %v1454, 64
  %v1617 = vpop.permute.xlu0 %1616
  %1618 = vrot.lane.b32.xlu0 %v1455, 64
  %v1619 = vpop.permute.xlu0 %1618
  %1620 = vrot.lane.b32.xlu0 %v1456, 64
  %v1621 = vpop.permute.xlu0 %1620
  %1622 = vrot.lane.b32.xlu0 %v1457, 64
  %v1623 = vpop.permute.xlu0 %1622
  %1624 = vrot.lane.b32.xlu0 %v1458, 64
  %v1625 = vpop.permute.xlu0 %1624
  %v1633 = vsel %vm401, %v1608, 0
  %v1636 = vsel %vm401, %v1609, 0
  %v1639 = vsel %vm401, %v1610, 0
  %v1642 = vsel %vm401, %v1611, 0
  %v1645 = vsel %vm401, %v1612, 0
  %v1648 = vsel %vm401, %v1613, 0
  %1650 = vmatpush.msra.mxu0 0.0
  %1651 = vmatpush.msra.mxu0 0.0
  %1652 = vmatpush.msra.mxu0 0.0
  %1653 = vmatpush.msra.mxu0 0.0
  %1654 = vmatpush.msra.mxu0 0.0
  %1655 = vmatpush.msra.mxu0 0.0
  %1656 = vmatpush.msra.mxu0 0.0
  %1657 = vmatpush.msra.mxu0 0.0
  %1658 = vmatpush.msra.mxu0 0.0
  %1659 = vmatpush.msra.mxu0 0.0
  %1660 = vmatpush.msra.mxu0 %v1625
  %1661 = vmatpush.msra.mxu0 %v1623
  %1662 = vmatpush.msra.mxu0 %v1621
  %1663 = vmatpush.msra.mxu0 %v1619
  %1664 = vmatpush.msra.mxu0 %v1617
  %1665 = vmatpush.msra.mxu0 %v1615
  %1666 = vmatmul.f32.gmra.mxu0 %v1633
  %v1667 = vpop.f32.mrf.mxu0
  %v1668 = vadd.f32 0.0, %v1667
  %1669 = vmatmul.f32.gmra.mxu0 %v1636
  %v1670 = vpop.f32.mrf.mxu0
  %v1671 = vadd.f32 0.0, %v1670
  %1672 = vmatmul.f32.gmra.mxu0 %v1639
  %v1673 = vpop.f32.mrf.mxu0
  %v1674 = vadd.f32 0.0, %v1673
  %1675 = vmatmul.f32.gmra.mxu0 %v1642
  %v1676 = vpop.f32.mrf.mxu0
  %v1677 = vadd.f32 0.0, %v1676
  %1678 = vmatmul.f32.gmra.mxu0 %v1645
  %v1679 = vpop.f32.mrf.mxu0
  %v1680 = vadd.f32 0.0, %v1679
  %1681 = vmatmul.f32.gmra.mxu0 %v1648
  %v1682 = vpop.f32.mrf.mxu0
  %v1683 = vadd.f32 0.0, %v1682
  %1684 = vdwg.mxu0
  %1685 = vst.msk [vmem:[#allocation3] sm:$0xff] %vm329, %v1668
  %1686 = vst.msk [vmem:[#allocation3 + $0x8] sm:$0xff] %vm329, %v1671
  %1687 = vst.msk [vmem:[#allocation3 + $0x10] sm:$0xff] %vm329, %v1674
  %1688 = vst.msk [vmem:[#allocation3 + $0x18] sm:$0xff] %vm329, %v1677
  %1689 = vst.msk [vmem:[#allocation3 + $0x20] sm:$0xff] %vm329, %v1680
  %1690 = vst.msk [vmem:[#allocation3 + $0x28] sm:$0xff] %vm329, %v1683
  %v1691 = vld [vmem:[#allocation2] sm:$0xff]
  %v1692 = vld [vmem:[#allocation2 + $0x8] sm:$0xff]
  %v1693 = vld [vmem:[#allocation2 + $0x10] sm:$0xff]
  %v1694 = vld [vmem:[#allocation2 + $0x18] sm:$0xff]
  %v1695 = vld [vmem:[#allocation2 + $0x20] sm:$0xff]
  %v1696 = vld [vmem:[#allocation2 + $0x28] sm:$0xff]
  %1703 = vrot.lane.b32.xlu0 %v1691, 112
  %v1704 = vpop.permute.xlu0 %1703
  %1705 = vrot.lane.b32.xlu0 %v1692, 112
  %v1706 = vpop.permute.xlu0 %1705
  %1707 = vrot.lane.b32.xlu0 %v1693, 112
  %v1708 = vpop.permute.xlu0 %1707
  %1709 = vrot.lane.b32.xlu0 %v1694, 112
  %v1710 = vpop.permute.xlu0 %1709
  %1711 = vrot.lane.b32.xlu0 %v1695, 112
  %v1712 = vpop.permute.xlu0 %1711
  %1713 = vrot.lane.b32.xlu0 %v1696, 112
  %v1714 = vpop.permute.xlu0 %1713
  %1715 = vrot.lane.b32.xlu0 %v1691, 80
  %v1716 = vpop.permute.xlu0 %1715
  %1717 = vrot.lane.b32.xlu0 %v1692, 80
  %v1718 = vpop.permute.xlu0 %1717
  %1719 = vrot.lane.b32.xlu0 %v1693, 80
  %v1720 = vpop.permute.xlu0 %1719
  %1721 = vrot.lane.b32.xlu0 %v1694, 80
  %v1722 = vpop.permute.xlu0 %1721
  %1723 = vrot.lane.b32.xlu0 %v1695, 80
  %v1724 = vpop.permute.xlu0 %1723
  %1725 = vrot.lane.b32.xlu0 %v1696, 80
  %v1726 = vpop.permute.xlu0 %1725
  %v1727 = vsel %vm329, %v1704, 0
  %v1729 = vsel %vm329, %v1706, 0
  %v1731 = vsel %vm329, %v1708, 0
  %v1733 = vsel %vm329, %v1710, 0
  %v1735 = vsel %vm329, %v1712, 0
  %v1737 = vsel %vm329, %v1714, 0
  %v1739 = vsel %vm329, %v1716, 0
  %v1741 = vsel %vm329, %v1718, 0
  %v1743 = vsel %vm329, %v1720, 0
  %v1745 = vsel %vm329, %v1722, 0
  %v1747 = vsel %vm329, %v1724, 0
  %v1749 = vsel %vm329, %v1726, 0
  %1751 = vmatpush.xpose.msra.mxu0 0.0
  %1752 = vmatpush.xpose.msra.mxu0 0.0
  %1753 = vmatpush.xpose.msra.mxu0 0.0
  %1754 = vmatpush.xpose.msra.mxu0 0.0
  %1755 = vmatpush.xpose.msra.mxu0 0.0
  %1756 = vmatpush.xpose.msra.mxu0 0.0
  %1757 = vmatpush.xpose.msra.mxu0 0.0
  %1758 = vmatpush.xpose.msra.mxu0 0.0
  %1759 = vmatpush.xpose.msra.mxu0 0.0
  %1760 = vmatpush.xpose.msra.mxu0 0.0
  %1761 = vmatpush.xpose.msra.mxu0 %v1749
  %1762 = vmatpush.xpose.msra.mxu0 %v1747
  %1763 = vmatpush.xpose.msra.mxu0 %v1745
  %1764 = vmatpush.xpose.msra.mxu0 %v1743
  %1765 = vmatpush.xpose.msra.mxu0 %v1741
  %1766 = vmatpush.xpose.msra.mxu0 %v1739
  %1767 = vmatmul.f32.gmra.mxu0 %v1727
  %v1768 = vpop.f32.mrf.mxu0
  %v1769 = vadd.f32 0.0, %v1768
  %1770 = vmatmul.f32.gmra.mxu0 %v1729
  %v1771 = vpop.f32.mrf.mxu0
  %v1772 = vadd.f32 0.0, %v1771
  %1773 = vmatmul.f32.gmra.mxu0 %v1731
  %v1774 = vpop.f32.mrf.mxu0
  %v1775 = vadd.f32 0.0, %v1774
  %1776 = vmatmul.f32.gmra.mxu0 %v1733
  %v1777 = vpop.f32.mrf.mxu0
  %v1778 = vadd.f32 0.0, %v1777
  %1779 = vmatmul.f32.gmra.mxu0 %v1735
  %v1780 = vpop.f32.mrf.mxu0
  %v1781 = vadd.f32 0.0, %v1780
  %1782 = vmatmul.f32.gmra.mxu0 %v1737
  %v1783 = vpop.f32.mrf.mxu0
  %v1784 = vadd.f32 0.0, %v1783
  %1785 = vdwg.mxu0
  %v1786 = vmul.f32 %v1769, 0.25
  %v1787 = vmul.f32 %v1772, 0.25
  %v1788 = vmul.f32 %v1775, 0.25
  %v1789 = vmul.f32 %v1778, 0.25
  %v1790 = vmul.f32 %v1781, 0.25
  %v1791 = vmul.f32 %v1784, 0.25
  %v1792 = vadd.f32 %v1786, %v65
  %v1793 = vadd.f32 %v1787, %v66
  %v1794 = vadd.f32 %v1788, %v67
  %v1795 = vadd.f32 %v1789, %v68
  %v1796 = vadd.f32 %v1790, %v69
  %v1797 = vadd.f32 %v1791, %v70
  %v1798 = vsel %vm401, %v1792, -inf
  %1799 = vmax.xlane.f32.xlu0 %v1798
  %v1800 = vpop.xlane.xlu0 %1799
  %v1801 = vsel %vm401, %v1793, -inf
  %1802 = vmax.xlane.f32.xlu0 %v1801
  %v1803 = vpop.xlane.xlu0 %1802
  %v1804 = vsel %vm401, %v1794, -inf
  %1805 = vmax.xlane.f32.xlu0 %v1804
  %v1806 = vpop.xlane.xlu0 %1805
  %v1807 = vsel %vm401, %v1795, -inf
  %1808 = vmax.xlane.f32.xlu0 %v1807
  %v1809 = vpop.xlane.xlu0 %1808
  %v1810 = vsel %vm401, %v1796, -inf
  %1811 = vmax.xlane.f32.xlu0 %v1810
  %v1812 = vpop.xlane.xlu0 %1811
  %v1813 = vsel %vm401, %v1797, -inf
  %1814 = vmax.xlane.f32.xlu0 %v1813
  %v1815 = vpop.xlane.xlu0 %1814
  %v1816 = vsub.f32 %v1792, %v1800
  %v1817 = vsub.f32 %v1793, %v1803
  %v1818 = vsub.f32 %v1794, %v1806
  %v1819 = vsub.f32 %v1795, %v1809
  %v1820 = vsub.f32 %v1796, %v1812
  %v1821 = vsub.f32 %v1797, %v1815
  %v1822 = vmul.f32 %v1816, 1.442695
  %v1823 = vpow.pop %v1822
  %v1824 = vmul.f32 %v1817, 1.442695
  %v1825 = vpow.pop %v1824
  %v1826 = vmul.f32 %v1818, 1.442695
  %v1827 = vpow.pop %v1826
  %v1828 = vmul.f32 %v1819, 1.442695
  %v1829 = vpow.pop %v1828
  %v1830 = vmul.f32 %v1820, 1.442695
  %v1831 = vpow.pop %v1830
  %v1832 = vmul.f32 %v1821, 1.442695
  %v1833 = vpow.pop %v1832
  %v1834 = vsel %vm401, %v1823, 0.0
  %1835 = vadd.xlane.f32.xlu0 %v1834
  %v1836 = vpop.xlane.xlu0 %1835
  %v1837 = vsel %vm401, %v1825, 0.0
  %1838 = vadd.xlane.f32.xlu0 %v1837
  %v1839 = vpop.xlane.xlu0 %1838
  %v1840 = vsel %vm401, %v1827, 0.0
  %1841 = vadd.xlane.f32.xlu0 %v1840
  %v1842 = vpop.xlane.xlu0 %1841
  %v1843 = vsel %vm401, %v1829, 0.0
  %1844 = vadd.xlane.f32.xlu0 %v1843
  %v1845 = vpop.xlane.xlu0 %1844
  %v1846 = vsel %vm401, %v1831, 0.0
  %1847 = vadd.xlane.f32.xlu0 %v1846
  %v1848 = vpop.xlane.xlu0 %1847
  %v1849 = vsel %vm401, %v1833, 0.0
  %1850 = vadd.xlane.f32.xlu0 %v1849
  %v1851 = vpop.xlane.xlu0 %1850
  %v1852 = vrcp.pop %v1836
  %v1853 = vrcp.pop %v1839
  %v1854 = vrcp.pop %v1842
  %v1855 = vrcp.pop %v1845
  %v1856 = vrcp.pop %v1848
  %v1857 = vrcp.pop %v1851
  %v1858 = vmul.f32 %v1823, %v1852
  %v1859 = vmul.f32 %v1825, %v1853
  %v1860 = vmul.f32 %v1827, %v1854
  %v1861 = vmul.f32 %v1829, %v1855
  %v1862 = vmul.f32 %v1831, %v1856
  %v1863 = vmul.f32 %v1833, %v1857
  %1864 = vrot.lane.b32.xlu0 %v1691, 48
  %v1865 = vpop.permute.xlu0 %1864
  %1866 = vrot.lane.b32.xlu0 %v1692, 48
  %v1867 = vpop.permute.xlu0 %1866
  %1868 = vrot.lane.b32.xlu0 %v1693, 48
  %v1869 = vpop.permute.xlu0 %1868
  %1870 = vrot.lane.b32.xlu0 %v1694, 48
  %v1871 = vpop.permute.xlu0 %1870
  %1872 = vrot.lane.b32.xlu0 %v1695, 48
  %v1873 = vpop.permute.xlu0 %1872
  %1874 = vrot.lane.b32.xlu0 %v1696, 48
  %v1875 = vpop.permute.xlu0 %1874
  %v1883 = vsel %vm401, %v1858, 0
  %v1886 = vsel %vm401, %v1859, 0
  %v1889 = vsel %vm401, %v1860, 0
  %v1892 = vsel %vm401, %v1861, 0
  %v1895 = vsel %vm401, %v1862, 0
  %v1898 = vsel %vm401, %v1863, 0
  %1900 = vmatpush.msra.mxu0 0.0
  %1901 = vmatpush.msra.mxu0 0.0
  %1902 = vmatpush.msra.mxu0 0.0
  %1903 = vmatpush.msra.mxu0 0.0
  %1904 = vmatpush.msra.mxu0 0.0
  %1905 = vmatpush.msra.mxu0 0.0
  %1906 = vmatpush.msra.mxu0 0.0
  %1907 = vmatpush.msra.mxu0 0.0
  %1908 = vmatpush.msra.mxu0 0.0
  %1909 = vmatpush.msra.mxu0 0.0
  %1910 = vmatpush.msra.mxu0 %v1875
  %1911 = vmatpush.msra.mxu0 %v1873
  %1912 = vmatpush.msra.mxu0 %v1871
  %1913 = vmatpush.msra.mxu0 %v1869
  %1914 = vmatpush.msra.mxu0 %v1867
  %1915 = vmatpush.msra.mxu0 %v1865
  %1916 = vmatmul.f32.gmra.mxu0 %v1883
  %v1917 = vpop.f32.mrf.mxu0
  %v1918 = vadd.f32 0.0, %v1917
  %1919 = vmatmul.f32.gmra.mxu0 %v1886
  %v1920 = vpop.f32.mrf.mxu0
  %v1921 = vadd.f32 0.0, %v1920
  %1922 = vmatmul.f32.gmra.mxu0 %v1889
  %v1923 = vpop.f32.mrf.mxu0
  %v1924 = vadd.f32 0.0, %v1923
  %1925 = vmatmul.f32.gmra.mxu0 %v1892
  %v1926 = vpop.f32.mrf.mxu0
  %v1927 = vadd.f32 0.0, %v1926
  %1928 = vmatmul.f32.gmra.mxu0 %v1895
  %v1929 = vpop.f32.mrf.mxu0
  %v1930 = vadd.f32 0.0, %v1929
  %1931 = vmatmul.f32.gmra.mxu0 %v1898
  %v1932 = vpop.f32.mrf.mxu0
  %v1933 = vadd.f32 0.0, %v1932
  %1934 = vdwg.mxu0
  %1941 = vrot.lane.b32.xlu0 %v1918, 16
  %v1942 = vpop.permute.xlu0 %1941
  %1943 = vrot.lane.b32.xlu0 %v1921, 16
  %v1944 = vpop.permute.xlu0 %1943
  %1945 = vrot.lane.b32.xlu0 %v1924, 16
  %v1946 = vpop.permute.xlu0 %1945
  %1947 = vrot.lane.b32.xlu0 %v1927, 16
  %v1948 = vpop.permute.xlu0 %1947
  %1949 = vrot.lane.b32.xlu0 %v1930, 16
  %v1950 = vpop.permute.xlu0 %1949
  %1951 = vrot.lane.b32.xlu0 %v1933, 16
  %v1952 = vpop.permute.xlu0 %1951
  %1959 = vst.msk [vmem:[#allocation3] sm:$0xff] %vm813, %v1942
  %1960 = vst.msk [vmem:[#allocation3 + $0x8] sm:$0xff] %vm813, %v1944
  %1961 = vst.msk [vmem:[#allocation3 + $0x10] sm:$0xff] %vm813, %v1946
  %1962 = vst.msk [vmem:[#allocation3 + $0x18] sm:$0xff] %vm813, %v1948
  %1963 = vst.msk [vmem:[#allocation3 + $0x20] sm:$0xff] %vm813, %v1950
  %1964 = vst.msk [vmem:[#allocation3 + $0x28] sm:$0xff] %vm813, %v1952
  %v1965 = vld [vmem:[#allocation3] sm:$0xff]
  %v1966 = vld [vmem:[#allocation3 + $0x8] sm:$0xff]
  %v1967 = vld [vmem:[#allocation3 + $0x10] sm:$0xff]
  %v1968 = vld [vmem:[#allocation3 + $0x18] sm:$0xff]
  %v1969 = vld [vmem:[#allocation3 + $0x20] sm:$0xff]
  %v1970 = vld [vmem:[#allocation3 + $0x28] sm:$0xff]
  %s1971 = scalar_lea.vmem %s6, 32
  %v1972 = vld [vmem:[%s1971] sm:$0xff]
  %v1973 = vld [vmem:[%s1971 + $0x8] sm:$0xff]
  %v1974 = vld [vmem:[%s1971 + $0x10] sm:$0xff]
  %v1975 = vld [vmem:[%s1971 + $0x18] sm:$0xff]
  %s1976 = scalar_lea.vmem %s7, 1
  %v1977 = vld [vmem:[%s1976] sm:$0x1]
  %v1979 = vperm.slane %v1977, 0
  %v1982 = vsel %vm79, %v1965, 0
  %v1985 = vsel %vm79, %v1966, 0
  %v1988 = vsel %vm79, %v1967, 0
  %v1991 = vsel %vm79, %v1968, 0
  %v1994 = vsel %vm79, %v1969, 0
  %v1997 = vsel %vm79, %v1970, 0
  %1999 = vmatpush.msra.mxu0 0.0
  %2000 = vmatpush.msra.mxu0 0.0
  %2001 = vmatpush.msra.mxu0 0.0
  %2002 = vmatpush.msra.mxu0 0.0
  %2003 = vmatpush.msra.mxu0 0.0
  %2004 = vmatpush.msra.mxu0 0.0
  %2005 = vmatpush.msra.mxu0 0.0
  %2006 = vmatpush.msra.mxu0 0.0
  %2007 = vmatpush.msra.mxu0 0.0
  %2008 = vmatpush.msra.mxu0 0.0
  %2009 = vmatpush.msra.mxu0 0.0
  %2010 = vmatpush.msra.mxu0 0.0
  %2011 = vmatpush.msra.mxu0 %v1975
  %2012 = vmatpush.msra.mxu0 %v1974
  %2013 = vmatpush.msra.mxu0 %v1973
  %2014 = vmatpush.msra.mxu0 %v1972
  %2015 = vmatmul.f32.gmra.mxu0 %v1982
  %v2016 = vpop.f32.mrf.mxu0
  %v2017 = vadd.f32 %v1979, %v2016
  %2018 = vmatmul.f32.gmra.mxu0 %v1985
  %v2019 = vpop.f32.mrf.mxu0
  %v2020 = vadd.f32 %v1979, %v2019
  %2021 = vmatmul.f32.gmra.mxu0 %v1988
  %v2022 = vpop.f32.mrf.mxu0
  %v2023 = vadd.f32 %v1979, %v2022
  %2024 = vmatmul.f32.gmra.mxu0 %v1991
  %v2025 = vpop.f32.mrf.mxu0
  %v2026 = vadd.f32 %v1979, %v2025
  %2027 = vmatmul.f32.gmra.mxu0 %v1994
  %v2028 = vpop.f32.mrf.mxu0
  %v2029 = vadd.f32 %v1979, %v2028
  %2030 = vmatmul.f32.gmra.mxu0 %v1997
  %v2031 = vpop.f32.mrf.mxu0
  %v2032 = vadd.f32 %v1979, %v2031
  %2033 = vdwg.mxu0
  %v2034 = vadd.f32 %v1378, %v2017
  %v2035 = vadd.f32 %v1379, %v2020
  %v2036 = vadd.f32 %v1380, %v2023
  %v2037 = vadd.f32 %v1381, %v2026
  %v2038 = vadd.f32 %v1382, %v2029
  %v2039 = vadd.f32 %v1383, %v2032
  %s2040 = scalar_lea.vmem %s8, 1
  %v2041 = vld [vmem:[%s2040] sm:$0x1]
  %s2042 = scalar_lea.vmem %s9, 1
  %v2043 = vld [vmem:[%s2042] sm:$0x1]
  %v2044 = vsel %vm79, %v2034, 0.0
  %2045 = vadd.xlane.f32.xlu0 %v2044
  %v2046 = vpop.xlane.xlu0 %2045
  %v2047 = vsel %vm79, %v2035, 0.0
  %2048 = vadd.xlane.f32.xlu0 %v2047
  %v2049 = vpop.xlane.xlu0 %2048
  %v2050 = vsel %vm79, %v2036, 0.0
  %2051 = vadd.xlane.f32.xlu0 %v2050
  %v2052 = vpop.xlane.xlu0 %2051
  %v2053 = vsel %vm79, %v2037, 0.0
  %2054 = vadd.xlane.f32.xlu0 %v2053
  %v2055 = vpop.xlane.xlu0 %2054
  %v2056 = vsel %vm79, %v2038, 0.0
  %2057 = vadd.xlane.f32.xlu0 %v2056
  %v2058 = vpop.xlane.xlu0 %2057
  %v2059 = vsel %vm79, %v2039, 0.0
  %2060 = vadd.xlane.f32.xlu0 %v2059
  %v2061 = vpop.xlane.xlu0 %2060
  %v2062 = vmul.f32 %v2046, %v104
  %v2063 = vmul.f32 %v2049, %v104
  %v2064 = vmul.f32 %v2052, %v104
  %v2065 = vmul.f32 %v2055, %v104
  %v2066 = vmul.f32 %v2058, %v104
  %v2067 = vmul.f32 %v2061, %v104
  %v2068 = vsub.f32 %v2034, %v2062
  %v2069 = vsub.f32 %v2035, %v2063
  %v2070 = vsub.f32 %v2036, %v2064
  %v2071 = vsub.f32 %v2037, %v2065
  %v2072 = vsub.f32 %v2038, %v2066
  %v2073 = vsub.f32 %v2039, %v2067
  %v2074 = vmul.f32 %v2068, %v2068
  %v2075 = vmul.f32 %v2069, %v2069
  %v2076 = vmul.f32 %v2070, %v2070
  %v2077 = vmul.f32 %v2071, %v2071
  %v2078 = vmul.f32 %v2072, %v2072
  %v2079 = vmul.f32 %v2073, %v2073
  %v2080 = vsel %vm79, %v2074, 0.0
  %2081 = vadd.xlane.f32.xlu0 %v2080
  %v2082 = vpop.xlane.xlu0 %2081
  %v2083 = vsel %vm79, %v2075, 0.0
  %2084 = vadd.xlane.f32.xlu0 %v2083
  %v2085 = vpop.xlane.xlu0 %2084
  %v2086 = vsel %vm79, %v2076, 0.0
  %2087 = vadd.xlane.f32.xlu0 %v2086
  %v2088 = vpop.xlane.xlu0 %2087
  %v2089 = vsel %vm79, %v2077, 0.0
  %2090 = vadd.xlane.f32.xlu0 %v2089
  %v2091 = vpop.xlane.xlu0 %2090
  %v2092 = vsel %vm79, %v2078, 0.0
  %2093 = vadd.xlane.f32.xlu0 %v2092
  %v2094 = vpop.xlane.xlu0 %2093
  %v2095 = vsel %vm79, %v2079, 0.0
  %2096 = vadd.xlane.f32.xlu0 %v2095
  %v2097 = vpop.xlane.xlu0 %2096
  %v2098 = vmul.f32 %v2082, %v104
  %v2099 = vmul.f32 %v2085, %v104
  %v2100 = vmul.f32 %v2088, %v104
  %v2101 = vmul.f32 %v2091, %v104
  %v2102 = vmul.f32 %v2094, %v104
  %v2103 = vmul.f32 %v2097, %v104
  %v2104 = vadd.f32 %v2098, 1e-12
  %v2105 = vadd.f32 %v2099, 1e-12
  %v2106 = vadd.f32 %v2100, 1e-12
  %v2107 = vadd.f32 %v2101, 1e-12
  %v2108 = vadd.f32 %v2102, 1e-12
  %v2109 = vadd.f32 %v2103, 1e-12
  %v2110 = vrsqrt.pop %v2104
  %v2111 = vmul.f32 %v2110, %v2104
  %v2112 = vmul.f32 %v2111, %v2110
  %v2113 = vmul.f32 0.5, %v2112
  %v2114 = vsub.f32 1.5, %v2113
  %v2115 = vmul.f32 %v2110, %v2114
  %vm2116 = vweird.f32 %v2104
  %vm2117 = vweird.f32 %v2110
  %vm2118 = vmor %vm2116, %vm2117
  %v2119 = vsel %vm2118, %v2110, %v2115
  %v2120 = vrsqrt.pop %v2105
  %v2121 = vmul.f32 %v2120, %v2105
  %v2122 = vmul.f32 %v2121, %v2120
  %v2123 = vmul.f32 0.5, %v2122
  %v2124 = vsub.f32 1.5, %v2123
  %v2125 = vmul.f32 %v2120, %v2124
  %vm2126 = vweird.f32 %v2105
  %vm2127 = vweird.f32 %v2120
  %vm2128 = vmor %vm2126, %vm2127
  %v2129 = vsel %vm2128, %v2120, %v2125
  %v2130 = vrsqrt.pop %v2106
  %v2131 = vmul.f32 %v2130, %v2106
  %v2132 = vmul.f32 %v2131, %v2130
  %v2133 = vmul.f32 0.5, %v2132
  %v2134 = vsub.f32 1.5, %v2133
  %v2135 = vmul.f32 %v2130, %v2134
  %vm2136 = vweird.f32 %v2106
  %vm2137 = vweird.f32 %v2130
  %vm2138 = vmor %vm2136, %vm2137
  %v2139 = vsel %vm2138, %v2130, %v2135
  %v2140 = vrsqrt.pop %v2107
  %v2141 = vmul.f32 %v2140, %v2107
  %v2142 = vmul.f32 %v2141, %v2140
  %v2143 = vmul.f32 0.5, %v2142
  %v2144 = vsub.f32 1.5, %v2143
  %v2145 = vmul.f32 %v2140, %v2144
  %vm2146 = vweird.f32 %v2107
  %vm2147 = vweird.f32 %v2140
  %vm2148 = vmor %vm2146, %vm2147
  %v2149 = vsel %vm2148, %v2140, %v2145
  %v2150 = vrsqrt.pop %v2108
  %v2151 = vmul.f32 %v2150, %v2108
  %v2152 = vmul.f32 %v2151, %v2150
  %v2153 = vmul.f32 0.5, %v2152
  %v2154 = vsub.f32 1.5, %v2153
  %v2155 = vmul.f32 %v2150, %v2154
  %vm2156 = vweird.f32 %v2108
  %vm2157 = vweird.f32 %v2150
  %vm2158 = vmor %vm2156, %vm2157
  %v2159 = vsel %vm2158, %v2150, %v2155
  %v2160 = vrsqrt.pop %v2109
  %v2161 = vmul.f32 %v2160, %v2109
  %v2162 = vmul.f32 %v2161, %v2160
  %v2163 = vmul.f32 0.5, %v2162
  %v2164 = vsub.f32 1.5, %v2163
  %v2165 = vmul.f32 %v2160, %v2164
  %vm2166 = vweird.f32 %v2109
  %vm2167 = vweird.f32 %v2160
  %vm2168 = vmor %vm2166, %vm2167
  %v2169 = vsel %vm2168, %v2160, %v2165
  %v2170 = vmul.f32 %v2068, %v2119
  %v2171 = vmul.f32 %v2069, %v2129
  %v2172 = vmul.f32 %v2070, %v2139
  %v2173 = vmul.f32 %v2071, %v2149
  %v2174 = vmul.f32 %v2072, %v2159
  %v2175 = vmul.f32 %v2073, %v2169
  %v2177 = vperm.slane %v2041, 0
  %v2179 = vmul.f32 %v2170, %v2177
  %v2180 = vmul.f32 %v2171, %v2177
  %v2181 = vmul.f32 %v2172, %v2177
  %v2182 = vmul.f32 %v2173, %v2177
  %v2183 = vmul.f32 %v2174, %v2177
  %v2184 = vmul.f32 %v2175, %v2177
  %v2186 = vperm.slane %v2043, 0
  %v2188 = vadd.f32 %v2179, %v2186
  %v2189 = vadd.f32 %v2180, %v2186
  %v2190 = vadd.f32 %v2181, %v2186
  %v2191 = vadd.f32 %v2182, %v2186
  %v2192 = vadd.f32 %v2183, %v2186
  %v2193 = vadd.f32 %v2184, %v2186
  %s2194 = scalar_lea.vmem %s10, 32
  %v2195 = vld [vmem:[%s2194] sm:$0xff]
  %v2196 = vld [vmem:[%s2194 + $0x8] sm:$0xff]
  %v2197 = vld [vmem:[%s2194 + $0x10] sm:$0xff]
  %v2198 = vld [vmem:[%s2194 + $0x18] sm:$0xff]
  %s2199 = scalar_lea.vmem %s11, 1
  %v2200 = vld [vmem:[%s2199] sm:$0x1]
  %v2202 = vperm.slane %v2200, 0
  %v2205 = vsel %vm79, %v2188, 0
  %v2208 = vsel %vm79, %v2189, 0
  %v2211 = vsel %vm79, %v2190, 0
  %v2214 = vsel %vm79, %v2191, 0
  %v2217 = vsel %vm79, %v2192, 0
  %v2220 = vsel %vm79, %v2193, 0
  %2222 = vmatpush.msra.mxu0 0.0
  %2223 = vmatpush.msra.mxu0 0.0
  %2224 = vmatpush.msra.mxu0 0.0
  %2225 = vmatpush.msra.mxu0 0.0
  %2226 = vmatpush.msra.mxu0 0.0
  %2227 = vmatpush.msra.mxu0 0.0
  %2228 = vmatpush.msra.mxu0 0.0
  %2229 = vmatpush.msra.mxu0 0.0
  %2230 = vmatpush.msra.mxu0 0.0
  %2231 = vmatpush.msra.mxu0 0.0
  %2232 = vmatpush.msra.mxu0 0.0
  %2233 = vmatpush.msra.mxu0 0.0
  %2234 = vmatpush.msra.mxu0 %v2198
  %2235 = vmatpush.msra.mxu0 %v2197
  %2236 = vmatpush.msra.mxu0 %v2196
  %2237 = vmatpush.msra.mxu0 %v2195
  %2238 = vmatmul.f32.gmra.mxu0 %v2205
  %v2239 = vpop.f32.mrf.mxu0
  %v2240 = vadd.f32 %v2202, %v2239
  %2241 = vmatmul.f32.gmra.mxu0 %v2208
  %v2242 = vpop.f32.mrf.mxu0
  %v2243 = vadd.f32 %v2202, %v2242
  %2244 = vmatmul.f32.gmra.mxu0 %v2211
  %v2245 = vpop.f32.mrf.mxu0
  %v2246 = vadd.f32 %v2202, %v2245
  %2247 = vmatmul.f32.gmra.mxu0 %v2214
  %v2248 = vpop.f32.mrf.mxu0
  %v2249 = vadd.f32 %v2202, %v2248
  %2250 = vmatmul.f32.gmra.mxu0 %v2217
  %v2251 = vpop.f32.mrf.mxu0
  %v2252 = vadd.f32 %v2202, %v2251
  %2253 = vmatmul.f32.gmra.mxu0 %v2220
  %v2254 = vpop.f32.mrf.mxu0
  %v2255 = vadd.f32 %v2202, %v2254
  %2256 = vdwg.mxu0
  %v2257 = vmul.f32 %v2240, 0.5
  %v2258 = vmul.f32 %v2243, 0.5
  %v2259 = vmul.f32 %v2246, 0.5
  %v2260 = vmul.f32 %v2249, 0.5
  %v2261 = vmul.f32 %v2252, 0.5
  %v2262 = vmul.f32 %v2255, 0.5
  %v2263 = vmul.f32 %v2240, 0.044715
  %v2264 = vmul.f32 %v2243, 0.044715
  %v2265 = vmul.f32 %v2246, 0.044715
  %v2266 = vmul.f32 %v2249, 0.044715
  %v2267 = vmul.f32 %v2252, 0.044715
  %v2268 = vmul.f32 %v2255, 0.044715
  %v2269 = vmul.f32 %v2263, %v2240
  %v2270 = vmul.f32 %v2264, %v2243
  %v2271 = vmul.f32 %v2265, %v2246
  %v2272 = vmul.f32 %v2266, %v2249
  %v2273 = vmul.f32 %v2267, %v2252
  %v2274 = vmul.f32 %v2268, %v2255
  %v2275 = vmul.f32 %v2269, %v2240
  %v2276 = vmul.f32 %v2270, %v2243
  %v2277 = vmul.f32 %v2271, %v2246
  %v2278 = vmul.f32 %v2272, %v2249
  %v2279 = vmul.f32 %v2273, %v2252
  %v2280 = vmul.f32 %v2274, %v2255
  %v2281 = vadd.f32 %v2240, %v2275
  %v2282 = vadd.f32 %v2243, %v2276
  %v2283 = vadd.f32 %v2246, %v2277
  %v2284 = vadd.f32 %v2249, %v2278
  %v2285 = vadd.f32 %v2252, %v2279
  %v2286 = vadd.f32 %v2255, %v2280
  %v2287 = vmul.f32 %v2281, 0.7978846
  %v2288 = vmul.f32 %v2282, 0.7978846
  %v2289 = vmul.f32 %v2283, 0.7978846
  %v2290 = vmul.f32 %v2284, 0.7978846
  %v2291 = vmul.f32 %v2285, 0.7978846
  %v2292 = vmul.f32 %v2286, 0.7978846
  %v2293 = vtanh.pop %v2287
  %v2294 = vtanh.pop %v2288
  %v2295 = vtanh.pop %v2289
  %v2296 = vtanh.pop %v2290
  %v2297 = vtanh.pop %v2291
  %v2298 = vtanh.pop %v2292
  %v2299 = vadd.f32 %v2293, 1.0
  %v2300 = vadd.f32 %v2294, 1.0
  %v2301 = vadd.f32 %v2295, 1.0
  %v2302 = vadd.f32 %v2296, 1.0
  %v2303 = vadd.f32 %v2297, 1.0
  %v2304 = vadd.f32 %v2298, 1.0
  %v2305 = vmul.f32 %v2257, %v2299
  %v2306 = vmul.f32 %v2258, %v2300
  %v2307 = vmul.f32 %v2259, %v2301
  %v2308 = vmul.f32 %v2260, %v2302
  %v2309 = vmul.f32 %v2261, %v2303
  %v2310 = vmul.f32 %v2262, %v2304
  %s2311 = scalar_lea.vmem %s12, 64
  %v2312 = vld [vmem:[%s2311] sm:$0xff]
  %v2313 = vld [vmem:[%s2311 + $0x8] sm:$0xff]
  %v2314 = vld [vmem:[%s2311 + $0x10] sm:$0xff]
  %v2315 = vld [vmem:[%s2311 + $0x18] sm:$0xff]
  %v2316 = vld [vmem:[%s2311 + $0x20] sm:$0xff]
  %v2317 = vld [vmem:[%s2311 + $0x28] sm:$0xff]
  %v2318 = vld [vmem:[%s2311 + $0x30] sm:$0xff]
  %v2319 = vld [vmem:[%s2311 + $0x38] sm:$0xff]
  %s2320 = scalar_lea.vmem %s13, 1
  %v2321 = vld [vmem:[%s2320] sm:$0x1]
  %v2323 = vperm.slane %v2321, 0
  %v2326 = vsel %vm1172, %v2305, 0
  %v2329 = vsel %vm1172, %v2306, 0
  %v2332 = vsel %vm1172, %v2307, 0
  %v2335 = vsel %vm1172, %v2308, 0
  %v2338 = vsel %vm1172, %v2309, 0
  %v2341 = vsel %vm1172, %v2310, 0
  %2343 = vmatpush.msra.mxu0 0.0
  %2344 = vmatpush.msra.mxu0 0.0
  %2345 = vmatpush.msra.mxu0 0.0
  %2346 = vmatpush.msra.mxu0 0.0
  %2347 = vmatpush.msra.mxu0 0.0
  %2348 = vmatpush.msra.mxu0 0.0
  %2349 = vmatpush.msra.mxu0 0.0
  %2350 = vmatpush.msra.mxu0 0.0
  %2351 = vmatpush.msra.mxu0 %v2319
  %2352 = vmatpush.msra.mxu0 %v2318
  %2353 = vmatpush.msra.mxu0 %v2317
  %2354 = vmatpush.msra.mxu0 %v2316
  %2355 = vmatpush.msra.mxu0 %v2315
  %2356 = vmatpush.msra.mxu0 %v2314
  %2357 = vmatpush.msra.mxu0 %v2313
  %2358 = vmatpush.msra.mxu0 %v2312
  %2359 = vmatmul.f32.gmra.mxu0 %v2326
  %v2360 = vpop.f32.mrf.mxu0
  %v2361 = vadd.f32 %v2323, %v2360
  %2362 = vmatmul.f32.gmra.mxu0 %v2329
  %v2363 = vpop.f32.mrf.mxu0
  %v2364 = vadd.f32 %v2323, %v2363
  %2365 = vmatmul.f32.gmra.mxu0 %v2332
  %v2366 = vpop.f32.mrf.mxu0
  %v2367 = vadd.f32 %v2323, %v2366
  %2368 = vmatmul.f32.gmra.mxu0 %v2335
  %v2369 = vpop.f32.mrf.mxu0
  %v2370 = vadd.f32 %v2323, %v2369
  %2371 = vmatmul.f32.gmra.mxu0 %v2338
  %v2372 = vpop.f32.mrf.mxu0
  %v2373 = vadd.f32 %v2323, %v2372
  %2374 = vmatmul.f32.gmra.mxu0 %v2341
  %v2375 = vpop.f32.mrf.mxu0
  %v2376 = vadd.f32 %v2323, %v2375
  %2377 = vdwg.mxu0
  %v2378 = vadd.f32 %v2188, %v2361
  %v2379 = vadd.f32 %v2189, %v2364
  %v2380 = vadd.f32 %v2190, %v2367
  %v2381 = vadd.f32 %v2191, %v2370
  %v2382 = vadd.f32 %v2192, %v2373
  %v2383 = vadd.f32 %v2193, %v2376
  %s2384 = scalar_lea.vmem %s14, 1
  %v2385 = vld [vmem:[%s2384] sm:$0x1]
  %s2386 = scalar_lea.vmem %s15, 1
  %v2387 = vld [vmem:[%s2386] sm:$0x1]
  %v2388 = vsel %vm79, %v2378, 0.0
  %2389 = vadd.xlane.f32.xlu0 %v2388
  %v2390 = vpop.xlane.xlu0 %2389
  %v2391 = vsel %vm79, %v2379, 0.0
  %2392 = vadd.xlane.f32.xlu0 %v2391
  %v2393 = vpop.xlane.xlu0 %2392
  %v2394 = vsel %vm79, %v2380, 0.0
  %2395 = vadd.xlane.f32.xlu0 %v2394
  %v2396 = vpop.xlane.xlu0 %2395
  %v2397 = vsel %vm79, %v2381, 0.0
  %2398 = vadd.xlane.f32.xlu0 %v2397
  %v2399 = vpop.xlane.xlu0 %2398
  %v2400 = vsel %vm79, %v2382, 0.0
  %2401 = vadd.xlane.f32.xlu0 %v2400
  %v2402 = vpop.xlane.xlu0 %2401
  %v2403 = vsel %vm79, %v2383, 0.0
  %2404 = vadd.xlane.f32.xlu0 %v2403
  %v2405 = vpop.xlane.xlu0 %2404
  %v2406 = vmul.f32 %v2390, %v104
  %v2407 = vmul.f32 %v2393, %v104
  %v2408 = vmul.f32 %v2396, %v104
  %v2409 = vmul.f32 %v2399, %v104
  %v2410 = vmul.f32 %v2402, %v104
  %v2411 = vmul.f32 %v2405, %v104
  %v2412 = vsub.f32 %v2378, %v2406
  %v2413 = vsub.f32 %v2379, %v2407
  %v2414 = vsub.f32 %v2380, %v2408
  %v2415 = vsub.f32 %v2381, %v2409
  %v2416 = vsub.f32 %v2382, %v2410
  %v2417 = vsub.f32 %v2383, %v2411
  %v2418 = vmul.f32 %v2412, %v2412
  %v2419 = vmul.f32 %v2413, %v2413
  %v2420 = vmul.f32 %v2414, %v2414
  %v2421 = vmul.f32 %v2415, %v2415
  %v2422 = vmul.f32 %v2416, %v2416
  %v2423 = vmul.f32 %v2417, %v2417
  %v2424 = vsel %vm79, %v2418, 0.0
  %2425 = vadd.xlane.f32.xlu0 %v2424
  %v2426 = vpop.xlane.xlu0 %2425
  %v2427 = vsel %vm79, %v2419, 0.0
  %2428 = vadd.xlane.f32.xlu0 %v2427
  %v2429 = vpop.xlane.xlu0 %2428
  %v2430 = vsel %vm79, %v2420, 0.0
  %2431 = vadd.xlane.f32.xlu0 %v2430
  %v2432 = vpop.xlane.xlu0 %2431
  %v2433 = vsel %vm79, %v2421, 0.0
  %2434 = vadd.xlane.f32.xlu0 %v2433
  %v2435 = vpop.xlane.xlu0 %2434
  %v2436 = vsel %vm79, %v2422, 0.0
  %2437 = vadd.xlane.f32.xlu0 %v2436
  %v2438 = vpop.xlane.xlu0 %2437
  %v2439 = vsel %vm79, %v2423, 0.0
  %2440 = vadd.xlane.f32.xlu0 %v2439
  %v2441 = vpop.xlane.xlu0 %2440
  %v2442 = vmul.f32 %v2426, %v104
  %v2443 = vmul.f32 %v2429, %v104
  %v2444 = vmul.f32 %v2432, %v104
  %v2445 = vmul.f32 %v2435, %v104
  %v2446 = vmul.f32 %v2438, %v104
  %v2447 = vmul.f32 %v2441, %v104
  %v2448 = vadd.f32 %v2442, 1e-12
  %v2449 = vadd.f32 %v2443, 1e-12
  %v2450 = vadd.f32 %v2444, 1e-12
  %v2451 = vadd.f32 %v2445, 1e-12
  %v2452 = vadd.f32 %v2446, 1e-12
  %v2453 = vadd.f32 %v2447, 1e-12
  %v2454 = vrsqrt.pop %v2448
  %v2455 = vmul.f32 %v2454, %v2448
  %v2456 = vmul.f32 %v2455, %v2454
  %v2457 = vmul.f32 0.5, %v2456
  %v2458 = vsub.f32 1.5, %v2457
  %v2459 = vmul.f32 %v2454, %v2458
  %vm2460 = vweird.f32 %v2448
  %vm2461 = vweird.f32 %v2454
  %vm2462 = vmor %vm2460, %vm2461
  %v2463 = vsel %vm2462, %v2454, %v2459
  %v2464 = vrsqrt.pop %v2449
  %v2465 = vmul.f32 %v2464, %v2449
  %v2466 = vmul.f32 %v2465, %v2464
  %v2467 = vmul.f32 0.5, %v2466
  %v2468 = vsub.f32 1.5, %v2467
  %v2469 = vmul.f32 %v2464, %v2468
  %vm2470 = vweird.f32 %v2449
  %vm2471 = vweird.f32 %v2464
  %vm2472 = vmor %vm2470, %vm2471
  %v2473 = vsel %vm2472, %v2464, %v2469
  %v2474 = vrsqrt.pop %v2450
  %v2475 = vmul.f32 %v2474, %v2450
  %v2476 = vmul.f32 %v2475, %v2474
  %v2477 = vmul.f32 0.5, %v2476
  %v2478 = vsub.f32 1.5, %v2477
  %v2479 = vmul.f32 %v2474, %v2478
  %vm2480 = vweird.f32 %v2450
  %vm2481 = vweird.f32 %v2474
  %vm2482 = vmor %vm2480, %vm2481
  %v2483 = vsel %vm2482, %v2474, %v2479
  %v2484 = vrsqrt.pop %v2451
  %v2485 = vmul.f32 %v2484, %v2451
  %v2486 = vmul.f32 %v2485, %v2484
  %v2487 = vmul.f32 0.5, %v2486
  %v2488 = vsub.f32 1.5, %v2487
  %v2489 = vmul.f32 %v2484, %v2488
  %vm2490 = vweird.f32 %v2451
  %vm2491 = vweird.f32 %v2484
  %vm2492 = vmor %vm2490, %vm2491
  %v2493 = vsel %vm2492, %v2484, %v2489
  %v2494 = vrsqrt.pop %v2452
  %v2495 = vmul.f32 %v2494, %v2452
  %v2496 = vmul.f32 %v2495, %v2494
  %v2497 = vmul.f32 0.5, %v2496
  %v2498 = vsub.f32 1.5, %v2497
  %v2499 = vmul.f32 %v2494, %v2498
  %vm2500 = vweird.f32 %v2452
  %vm2501 = vweird.f32 %v2494
  %vm2502 = vmor %vm2500, %vm2501
  %v2503 = vsel %vm2502, %v2494, %v2499
  %v2504 = vrsqrt.pop %v2453
  %v2505 = vmul.f32 %v2504, %v2453
  %v2506 = vmul.f32 %v2505, %v2504
  %v2507 = vmul.f32 0.5, %v2506
  %v2508 = vsub.f32 1.5, %v2507
  %v2509 = vmul.f32 %v2504, %v2508
  %vm2510 = vweird.f32 %v2453
  %vm2511 = vweird.f32 %v2504
  %vm2512 = vmor %vm2510, %vm2511
  %v2513 = vsel %vm2512, %v2504, %v2509
  %v2514 = vmul.f32 %v2412, %v2463
  %v2515 = vmul.f32 %v2413, %v2473
  %v2516 = vmul.f32 %v2414, %v2483
  %v2517 = vmul.f32 %v2415, %v2493
  %v2518 = vmul.f32 %v2416, %v2503
  %v2519 = vmul.f32 %v2417, %v2513
  %v2521 = vperm.slane %v2385, 0
  %v2523 = vmul.f32 %v2514, %v2521
  %v2524 = vmul.f32 %v2515, %v2521
  %v2525 = vmul.f32 %v2516, %v2521
  %v2526 = vmul.f32 %v2517, %v2521
  %v2527 = vmul.f32 %v2518, %v2521
  %v2528 = vmul.f32 %v2519, %v2521
  %v2530 = vperm.slane %v2387, 0
  %v2532 = vadd.f32 %v2523, %v2530
  %v2533 = vadd.f32 %v2524, %v2530
  %v2534 = vadd.f32 %v2525, %v2530
  %v2535 = vadd.f32 %v2526, %v2530
  %v2536 = vadd.f32 %v2527, %v2530
  %v2537 = vadd.f32 %v2528, %v2530
  %v2538 = vld [vmem:[%s16] sm:$0xff]
  %v2539 = vld [vmem:[%s16 + $0x8] sm:$0xff]
  %v2540 = vld [vmem:[%s16 + $0x10] sm:$0xff]
  %v2541 = vld [vmem:[%s16 + $0x18] sm:$0xff]
  %v2542 = vld [vmem:[%s17] sm:$0x1]
  %v2544 = vperm.slane %v2542, 0
  %v2547 = vsel %vm79, %v2532, 0
  %v2550 = vsel %vm79, %v2533, 0
  %v2553 = vsel %vm79, %v2534, 0
  %v2556 = vsel %vm79, %v2535, 0
  %v2559 = vsel %vm79, %v2536, 0
  %v2562 = vsel %vm79, %v2537, 0
  %2564 = vmatpush.msra.mxu0 0.0
  %2565 = vmatpush.msra.mxu0 0.0
  %2566 = vmatpush.msra.mxu0 0.0
  %2567 = vmatpush.msra.mxu0 0.0
  %2568 = vmatpush.msra.mxu0 0.0
  %2569 = vmatpush.msra.mxu0 0.0
  %2570 = vmatpush.msra.mxu0 0.0
  %2571 = vmatpush.msra.mxu0 0.0
  %2572 = vmatpush.msra.mxu0 0.0
  %2573 = vmatpush.msra.mxu0 0.0
  %2574 = vmatpush.msra.mxu0 0.0
  %2575 = vmatpush.msra.mxu0 0.0
  %2576 = vmatpush.msra.mxu0 %v2541
  %2577 = vmatpush.msra.mxu0 %v2540
  %2578 = vmatpush.msra.mxu0 %v2539
  %2579 = vmatpush.msra.mxu0 %v2538
  %2580 = vmatmul.f32.gmra.mxu0 %v2547
  %v2581 = vpop.f32.mrf.mxu0
  %v2582 = vadd.f32 %v2544, %v2581
  %2583 = vmatmul.f32.gmra.mxu0 %v2550
  %v2584 = vpop.f32.mrf.mxu0
  %v2585 = vadd.f32 %v2544, %v2584
  %2586 = vmatmul.f32.gmra.mxu0 %v2553
  %v2587 = vpop.f32.mrf.mxu0
  %v2588 = vadd.f32 %v2544, %v2587
  %2589 = vmatmul.f32.gmra.mxu0 %v2556
  %v2590 = vpop.f32.mrf.mxu0
  %v2591 = vadd.f32 %v2544, %v2590
  %2592 = vmatmul.f32.gmra.mxu0 %v2559
  %v2593 = vpop.f32.mrf.mxu0
  %v2594 = vadd.f32 %v2544, %v2593
  %2595 = vmatmul.f32.gmra.mxu0 %v2562
  %v2596 = vpop.f32.mrf.mxu0
  %v2597 = vadd.f32 %v2544, %v2596
  %2598 = vdwg.mxu0
  %v2599 = vtanh.pop %v2582
  %v2600 = vtanh.pop %v2585
  %v2601 = vtanh.pop %v2588
  %v2602 = vtanh.pop %v2591
  %v2603 = vtanh.pop %v2594
  %v2604 = vtanh.pop %v2597
  %v2605 = vld [vmem:[%s18] sm:$0xff]
  %v2606 = vld [vmem:[%s18 + $0x8] sm:$0xff]
  %v2607 = vld [vmem:[%s18 + $0x10] sm:$0xff]
  %v2608 = vld [vmem:[%s18 + $0x18] sm:$0xff]
  %v2609 = vld [vmem:[%s19] sm:$0x1]
  %v2611 = vperm.slane %v2609, 0
  %v2614 = vsel %vm79, %v2599, 0
  %v2617 = vsel %vm79, %v2600, 0
  %v2620 = vsel %vm79, %v2601, 0
  %v2623 = vsel %vm79, %v2602, 0
  %v2626 = vsel %vm79, %v2603, 0
  %v2629 = vsel %vm79, %v2604, 0
  %2631 = vmatpush.msra.mxu0 0.0
  %2632 = vmatpush.msra.mxu0 0.0
  %2633 = vmatpush.msra.mxu0 0.0
  %2634 = vmatpush.msra.mxu0 0.0
  %2635 = vmatpush.msra.mxu0 0.0
  %2636 = vmatpush.msra.mxu0 0.0
  %2637 = vmatpush.msra.mxu0 0.0
  %2638 = vmatpush.msra.mxu0 0.0
  %2639 = vmatpush.msra.mxu0 0.0
  %2640 = vmatpush.msra.mxu0 0.0
  %2641 = vmatpush.msra.mxu0 0.0
  %2642 = vmatpush.msra.mxu0 0.0
  %2643 = vmatpush.msra.mxu0 %v2608
  %2644 = vmatpush.msra.mxu0 %v2607
  %2645 = vmatpush.msra.mxu0 %v2606
  %2646 = vmatpush.msra.mxu0 %v2605
  %2647 = vmatmul.f32.gmra.mxu0 %v2614
  %v2648 = vpop.f32.mrf.mxu0
  %v2649 = vadd.f32 %v2611, %v2648
  %2650 = vmatmul.f32.gmra.mxu0 %v2617
  %v2651 = vpop.f32.mrf.mxu0
  %v2652 = vadd.f32 %v2611, %v2651
  %2653 = vmatmul.f32.gmra.mxu0 %v2620
  %v2654 = vpop.f32.mrf.mxu0
  %v2655 = vadd.f32 %v2611, %v2654
  %2656 = vmatmul.f32.gmra.mxu0 %v2623
  %v2657 = vpop.f32.mrf.mxu0
  %v2658 = vadd.f32 %v2611, %v2657
  %2659 = vmatmul.f32.gmra.mxu0 %v2626
  %v2660 = vpop.f32.mrf.mxu0
  %v2661 = vadd.f32 %v2611, %v2660
  %2662 = vmatmul.f32.gmra.mxu0 %v2629
  %v2663 = vpop.f32.mrf.mxu0
  %v2664 = vadd.f32 %v2611, %v2663
  %2665 = vdwg.mxu0
  %vm2666 = vcmask 15360
  %2667 = vst.msk [vmem:[%s20] sm:$0xff] %vm2666, %v2649
  %2668 = vst.msk [vmem:[%s20 + $0x8] sm:$0xff] %vm2666, %v2652
  %2669 = vst.msk [vmem:[%s20 + $0x10] sm:$0xff] %vm2666, %v2655
  %2670 = vst.msk [vmem:[%s20 + $0x18] sm:$0xff] %vm2666, %v2658
  %2671 = vst.msk [vmem:[%s20 + $0x20] sm:$0xff] %vm2666, %v2661
  %2672 = vst.msk [vmem:[%s20 + $0x28] sm:$0xff] %vm2666, %v2664
  // Predicated region
  $region82: #{agent_forward.2} parent=0 // pred_check
    _
  $region83: #{agent_forward.2} parent=0 // pred_check_branch
    %2674 = sbr.rel (0) target = $region85
  $region84: #{agent_forward.2} parent=0 // pred_region
    _
  $region85: #{agent_forward.2} parent=0 // pred_fallthru
    _
  // Predicated region
  $region86: #{agent_forward.2} parent=0 // pred_check
    _
  $region87: #{agent_forward.2} parent=0 // pred_check_branch
    %2676 = sbr.rel (0) target = $region89
  $region88: #{agent_forward.2} parent=0 // pred_region
    _
  $region89: #{agent_forward.2} parent=0 // pred_fallthru
    _

</llo_original>
